<compile_context>
chip_gen: v7x
topology: tpu7x:2x2x1
jax: 0.10.0
libtpu: 0.0.40
codegen_flags: <defaults>
</compile_context>

<pallas_src>
import functools

import jax
import jax.numpy as jnp
from jax.experimental import pallas as pl
from jax.experimental.pallas import tpu as pltpu


def conv1x1_bn_kernel(w_ref, x_ref, gamma_ref, beta_ref, o_ref, *, eps, inv_m):
    # Weight already bf16 in HBM (cast once at parameter-load time).
    w = w_ref[...]                                   # (TN, Cin) bf16
    # Activations cast to bf16 here (see header note); f32 MXU accumulate.
    x = x_ref[...].astype(jnp.bfloat16)              # (Cin, M)
    y = jnp.dot(w, x, preferred_element_type=jnp.float32)   # (TN, M) f32

    # BatchNorm2d training-mode stats: per output channel (sublane rows),
    # reduced over M = N*H*W (lane axis).  Two-pass (shifted) variance for
    # numerical robustness; written so `y` is the only full-size array live
    # across the reductions and the final fused multiply-add.
    mean = jnp.sum(y, axis=1, keepdims=True) * inv_m                  # (TN, 1)
    var = jnp.sum(jnp.square(y - mean), axis=1, keepdims=True) * inv_m  # biased
    scale = gamma_ref[...] * jax.lax.rsqrt(var + eps)                 # (TN, 1)
    shift = beta_ref[...] - mean * scale                              # (TN, 1)
    # (y - mean) * gamma * rsqrt(var+eps) + beta  ==  y * scale + shift
    o_ref[...] = (y * scale + shift).astype(o_ref.dtype)


def _pick_cout_tile(cout, cap=256):
    """Largest multiple of 8 that evenly divides cout and is <= cap.

    cap=256 -> tn=232 for cout=1392 (6 grid steps): keeps a 3/3 split across
    the two v7x TensorCores.  Raising the cap to 512 (tn=464, 3 steps) is a
    <5% option on single-TC v5e/v6e only.
    """
    best = None
    for t in range(8, min(cout, cap) + 1, 8):
        if cout % t == 0:
            best = t
    return best if best is not None else cout


def conv2d_batchnorm(x_nchw, w_oihw, gamma, beta, eps=1e-5):
    """Fused 1x1 conv (no bias) + BatchNorm2d (batch statistics).

    `w_oihw` should already be bf16 (cast once when the parameters are loaded)
    so the dominant weight DMA streams at half width; f32 also works.
    """
    n, cin, h, w = x_nchw.shape
    cout = w_oihw.shape[0]
    m = n * h * w

    # NCHW -> (Cin, M). For N=1 this transpose is a pure reshape (free);
    # the general-N path stays correct.
    x_cm = jnp.transpose(x_nchw, (1, 0, 2, 3)).reshape(cin, m)
    # Weight consumed in its native (Cout, Cin) layout -- no HBM transpose.
    w_oc = w_oihw.reshape(cout, cin)
    gamma2 = gamma.reshape(cout, 1)
    beta2 = beta.reshape(cout, 1)

    tn = _pick_cout_tile(cout)          # 232 for cout=1392 -> 6 grid steps
    grid = (cout // tn,)

    kernel = functools.partial(conv1x1_bn_kernel, eps=eps, inv_m=1.0 / m)

    w_bytes = cout * cin * jnp.dtype(w_oc.dtype).itemsize
    x_bytes = cin * m * jnp.dtype(x_cm.dtype).itemsize
    o_bytes = cout * m * 4
    cost = pl.CostEstimate(
        flops=2 * cout * cin * m,
        transcendentals=cout,                       # one rsqrt per channel
        bytes_accessed=w_bytes + x_bytes + o_bytes + 2 * cout * 4,
    )

    # Output kept f32 to preserve the module's forward semantics; switch
    # out_shape/out dtype to bf16 if the downstream consumer accepts it
    # (halves the ~1.1 MB writeback).
    y_cm = pl.pallas_call(
        kernel,
        out_shape=jax.ShapeDtypeStruct((cout, m), jnp.float32),
        grid_spec=pltpu.PrefetchScalarGridSpec(
            num_scalar_prefetch=0,
            grid=grid,
            in_specs=[
                pl.BlockSpec((tn, cin), lambda i: (i, 0)),   # weight tile (bf16)
                pl.BlockSpec((cin, m), lambda i: (0, 0)),    # full activations
                pl.BlockSpec((tn, 1), lambda i: (i, 0)),     # gamma tile
                pl.BlockSpec((tn, 1), lambda i: (i, 0)),     # beta tile
            ],
            out_specs=pl.BlockSpec((tn, m), lambda i: (i, 0)),
        ),
        compiler_params=pltpu.CompilerParams(
            dimension_semantics=("parallel",),               # shards over v7x TCs
            vmem_limit_bytes=16 * 1024 * 1024,               # ~6 MB actually used
        ),
        cost_estimate=cost,
    )(w_oc, x_cm, gamma2, beta2)

    # (Cout, M) -> NCHW. For N=1 this is again a pure reshape.
    return jnp.transpose(y_cm.reshape(cout, n, h, w), (1, 0, 2, 3))


def reference(x_nchw, w_oihw, gamma, beta, eps=1e-5):
    n, cin, h, w = x_nchw.shape
    cout = w_oihw.shape[0]
    x_mc = jnp.transpose(x_nchw, (0, 2, 3, 1)).reshape(-1, cin)
    y = x_mc @ w_oihw.reshape(cout, cin).astype(jnp.float32).T
    mean = jnp.mean(y, axis=0, keepdims=True)
    var = jnp.mean((y - mean) ** 2, axis=0, keepdims=True)  # biased, BN training
    y = (y - mean) * jax.lax.rsqrt(var + eps) * gamma[None, :] + beta[None, :]
    return jnp.transpose(y.reshape(n, h, w, cout), (0, 3, 1, 2))


if __name__ == "__main__":
    # Shapes from the module: x249 = randn([1, 1392, 14, 14])
    N, C, H, W = 1, 1392, 14, 14

    key = jax.random.PRNGKey(0)
    kx, kw = jax.random.split(key)
    x = jax.random.normal(kx, (N, C, H, W), dtype=jnp.float32)
    # Conv2d weight (Cout, Cin, 1, 1), no bias; deterministic init.
    w = jax.random.normal(kw, (C, C, 1, 1), dtype=jnp.float32) * (1.0 / jnp.sqrt(C))
    # BatchNorm2d affine params: PyTorch default init (gamma=1, beta=0).
    gamma = jnp.ones((C,), dtype=jnp.float32)
    beta = jnp.zeros((C,), dtype=jnp.float32)

    # Parameter-load-time cast: the weight lives in HBM as bf16, so the kernel
    # streams half the bytes and no per-call XLA convert is emitted.
    w_bf16 = w.astype(jnp.bfloat16)

    out = conv2d_batchnorm(x, w_bf16, gamma, beta)
    out = jax.block_until_ready(out)

    ref = reference(x, w, gamma, beta)
    assert out.shape == (N, C, H, W)
    # bf16 matmul inputs (f32 accumulate) shift numerics vs the f32 reference
    # by ~5e-3; tolerance accounts for that.
    assert jnp.allclose(out, ref, atol=5e-2, rtol=5e-2)

    print("KERNEL_OK")
</pallas_src>

<mosaic_0001>
module attributes {stable_mosaic.version = 11 : i64} {
  func.func @conv1x1_bn_kernel(%arg0: i32, %arg1: memref<232x1392xbf16, #tpu.memory_space<vmem>>, %arg2: memref<1392x196xf32, #tpu.memory_space<vmem>>, %arg3: memref<232x1xf32, #tpu.memory_space<vmem>>, %arg4: memref<232x1xf32, #tpu.memory_space<vmem>>, %arg5: memref<232x196xf32, #tpu.memory_space<vmem>>) attributes {dimension_semantics = [#tpu.dimension_semantics<parallel>], iteration_bounds = array<i64: 6>, scalar_prefetch = 0 : i64, scratch_operands = 0 : i64, tpu.core_type = #tpu.core_type<tc>, window_params = [{transform_indices = @transform_0, window_bounds = array<i64: 232, 1392>}, {pipeline_mode = #tpu.pipeline_mode<synchronous>, transform_indices = @transform_1, window_bounds = array<i64: 1392, 196>}, {transform_indices = @transform_2, window_bounds = array<i64: 232, 1>}, {transform_indices = @transform_3, window_bounds = array<i64: 232, 1>}, {transform_indices = @transform_4, window_bounds = array<i64: 232, 196>}]} {
    %c0 = arith.constant 0 : index
    %c0_0 = arith.constant 0 : index
    %0 = vector.load %arg1[%c0, %c0_0] : memref<232x1392xbf16, #tpu.memory_space<vmem>>, vector<232x1392xbf16>
    %c0_1 = arith.constant 0 : index
    %c0_2 = arith.constant 0 : index
    %1 = vector.load %arg2[%c0_1, %c0_2] : memref<1392x196xf32, #tpu.memory_space<vmem>>, vector<1392x196xf32>
    %2 = arith.truncf %1 : vector<1392x196xf32> to vector<1392x196xbf16>
    %cst = arith.constant dense<0.000000e+00> : vector<232x196xf32>
    %3 = tpu.matmul %0, %2, %cst {dimension_numbers = #tpu.dot_dimension_numbers<[1], [0], [0], [1], [0, 0, 1, 1], [], []>} : vector<232x1392xbf16>, vector<1392x196xbf16>, vector<232x196xf32> -> vector<232x196xf32>
    %cst_3 = arith.constant dense<0.000000e+00> : vector<232xf32>
    %4 = vector.multi_reduction <add>, %3, %cst_3 [1] : vector<232x196xf32> to vector<232xf32>
    %5 = vector.shape_cast %4 : vector<232xf32> to vector<232x1xf32>
    %cst_4 = arith.constant 0.00510204071 : f32
    %6 = vector.broadcast %cst_4 : f32 to vector<232x1xf32>
    %7 = arith.mulf %5, %6 : vector<232x1xf32>
    %8 = vector.broadcast %7 : vector<232x1xf32> to vector<232x196xf32>
    %9 = arith.subf %3, %8 : vector<232x196xf32>
    %10 = arith.mulf %9, %9 : vector<232x196xf32>
    %cst_5 = arith.constant dense<0.000000e+00> : vector<232xf32>
    %11 = vector.multi_reduction <add>, %10, %cst_5 [1] : vector<232x196xf32> to vector<232xf32>
    %12 = vector.shape_cast %11 : vector<232xf32> to vector<232x1xf32>
    %cst_6 = arith.constant 0.00510204071 : f32
    %13 = vector.broadcast %cst_6 : f32 to vector<232x1xf32>
    %14 = arith.mulf %12, %13 : vector<232x1xf32>
    %c0_7 = arith.constant 0 : index
    %c0_8 = arith.constant 0 : index
    %15 = vector.load %arg3[%c0_7, %c0_8] : memref<232x1xf32, #tpu.memory_space<vmem>>, vector<232x1xf32>
    %cst_9 = arith.constant 9.99999974E-6 : f32
    %16 = vector.broadcast %cst_9 : f32 to vector<232x1xf32>
    %17 = arith.addf %14, %16 : vector<232x1xf32>
    %18 = math.rsqrt %17 : vector<232x1xf32>
    %19 = arith.mulf %15, %18 : vector<232x1xf32>
    %c0_10 = arith.constant 0 : index
    %c0_11 = arith.constant 0 : index
    %20 = vector.load %arg4[%c0_10, %c0_11] : memref<232x1xf32, #tpu.memory_space<vmem>>, vector<232x1xf32>
    %21 = arith.mulf %7, %19 : vector<232x1xf32>
    %22 = arith.subf %20, %21 : vector<232x1xf32>
    %23 = vector.broadcast %19 : vector<232x1xf32> to vector<232x196xf32>
    %24 = arith.mulf %3, %23 : vector<232x196xf32>
    %25 = vector.broadcast %22 : vector<232x1xf32> to vector<232x196xf32>
    %26 = arith.addf %24, %25 : vector<232x196xf32>
    %c0_12 = arith.constant 0 : index
    %c0_13 = arith.constant 0 : index
    %27 = vector.load %arg5[%c0_12, %c0_13] : memref<232x196xf32, #tpu.memory_space<vmem>>, vector<232x196xf32>
    tpu.vector_store %arg5[%c0_12, %c0_13], %26 {strides = array<i32>} : memref<232x196xf32, #tpu.memory_space<vmem>>, vector<232x196xf32>,
    return
  }
  func.func @transform_0(%arg0: i32) -> (i32, i32) {
    %c0_i32 = arith.constant 0 : i32
    %c0_i32_0 = arith.constant 0 : i32
    return %arg0, %c0_i32 : i32, i32
  }
  func.func @transform_1(%arg0: i32) -> (i32, i32) {
    %c0_i32 = arith.constant 0 : i32
    %c0_i32_0 = arith.constant 0 : i32
    %c0_i32_1 = arith.constant 0 : i32
    return %c0_i32, %c0_i32_0 : i32, i32
  }
  func.func @transform_2(%arg0: i32) -> (i32, i32) {
    %c0_i32 = arith.constant 0 : i32
    %c0_i32_0 = arith.constant 0 : i32
    return %arg0, %c0_i32 : i32, i32
  }
  func.func @transform_3(%arg0: i32) -> (i32, i32) {
    %c0_i32 = arith.constant 0 : i32
    %c0_i32_0 = arith.constant 0 : i32
    return %arg0, %c0_i32 : i32, i32
  }
  func.func @transform_4(%arg0: i32) -> (i32, i32) {
    %c0_i32 = arith.constant 0 : i32
    %c0_i32_0 = arith.constant 0 : i32
    return %arg0, %c0_i32 : i32, i32
  }
}

</mosaic_0001>

<llo_original>
// kernel: tpu_custom_call.1
$region0: #{tpu_custom_call.1}
  #allocation0 [shape = 'u32[]', space=smem, size = 0x4, offset = 0x4, fixed_abs, tag = 'smem constant byte address 0x4 - core index']
  #allocation1 [shape = 'u32[144,128]{1,0:T(1,128)}', space=vmem, size = 0x12000, scoped, tag = 'internal scratch']
  %s0 = inlined_call_operand.vmem [shape: bf16[1392,1392], index: 0, kind: input, shape index: {}]
  %s1 = inlined_call_operand.vmem [shape: f32[1392,196], index: 1, kind: input, shape index: {}]
  %s2 = inlined_call_operand.vmem [shape: f32[1392,1], index: 2, kind: input, shape index: {}]
  %s3 = inlined_call_operand.vmem [shape: f32[1392,1], index: 3, kind: input, shape index: {}]
  %s4 = inlined_call_operand.vmem [shape: f32[1392,196], index: 4, kind: output, shape index: {}]
  %s5 = sld [smem:[#allocation0]]
  $region49: #{tpu_custom_call.1} parent=0
    _
  %s7 = ssub.s32 1, %s5
  %s8 = scalar_select 0, %s7, %s5
  loop: start=0, step=1, limit=8
  $region2: #{tpu_custom_call.1} parent=0 // loop_pre_header
    _
  $region3: #{tpu_custom_call.1} parent=0 // loop_header
    %s10 = sphi 0, %s14
    %p11 = scmp.ge.s32.totalorder %s10, 8
    %s20 = sphi 0, %s22
    %s23 = sphi 0, %s20
    %s24 = sphi 0, %s23
    %s40 = sphi 0, %s24
    %s44 = sphi 0, %s44
    %s46 = sphi 0, %s44
    %s47 = sphi 0, %s46
    %s61 = sphi 0, %s47
    %s67 = sphi 0, %s69
    %s70 = sphi 0, %s67
    %s71 = sphi 0, %s70
    %s87 = sphi 0, %s71
    %s93 = sphi 0, %s95
    %s96 = sphi 0, %s93
    %s97 = sphi 0, %s96
    %s113 = sphi 0, %s97
    %s119 = sphi 0, %s121
    %s122 = sphi 0, %s119
    %s123 = sphi 0, %s122
    %s139 = sphi 0, %s123
  $region4: #{tpu_custom_call.1} parent=0 // loop_header_branch
    %13 = sbr.rel (%p11) target = $region8
  $region5: #{tpu_custom_call.1} parent=0 // loop_body
    %s15 = ssub.s32 %s10, 1
    %s16 = ssub.s32 %s10, 2
    %s17 = sadd.s32 %s10, 1
    %s18 = ssub.s32 %s10, %s17
    %p19 = scmp.eq.s32.totalorder %s18, 0
    %s21 = sadd.s32 %s20, 1
    %s22 = scalar_select %p19, %s20, %s21
    %p25 = pneg %p19
    %p26 = scmp.eq.s32.totalorder %s10, 5
    %p27 = por %p25, %p26
    %p28 = scmp.ne.s32.totalorder %s20, %s23
    %p29 = scmp.eq.s32.totalorder %s10, 0
    %p30 = por %p28, %p29
    %p31 = scmp.ne.s32.totalorder %s20, %s23
    %p32 = scmp.eq.s32.totalorder %s15, 5
    %p33 = por %p31, %p32
    %p34 = scmp.ne.s32.totalorder %s23, %s24
    %p35 = scmp.eq.s32.totalorder %s15, 0
    %p36 = por %p34, %p35
    %p37 = scmp.ne.s32.totalorder %s23, %s24
    %p38 = scmp.eq.s32.totalorder %s16, 5
    %p39 = por %p37, %p38
    %p41 = scmp.ne.s32.totalorder %s24, %s40
    %p42 = scmp.eq.s32.totalorder %s16, 0
    %p43 = por %p41, %p42
    %s45 = sadd.s32 %s44, 1
    %p48 = scmp.eq.s32.totalorder %s10, 5
    %p49 = scmp.ne.s32.totalorder %s44, %s46
    %p50 = scmp.eq.s32.totalorder %s10, 0
    %p51 = por %p49, %p50
    %p52 = scmp.ne.s32.totalorder %s44, %s46
    %p53 = scmp.eq.s32.totalorder %s15, 5
    %p54 = por %p52, %p53
    %p55 = scmp.ne.s32.totalorder %s46, %s47
    %p56 = scmp.eq.s32.totalorder %s15, 0
    %p57 = por %p55, %p56
    %p58 = scmp.ne.s32.totalorder %s46, %s47
    %p59 = scmp.eq.s32.totalorder %s16, 5
    %p60 = por %p58, %p59
    %p62 = scmp.ne.s32.totalorder %s47, %s61
    %p63 = scmp.eq.s32.totalorder %s16, 0
    %p64 = por %p62, %p63
    %s65 = ssub.s32 %s10, %s17
    %p66 = scmp.eq.s32.totalorder %s65, 0
    %s68 = sadd.s32 %s67, 1
    %s69 = scalar_select %p66, %s67, %s68
    %p72 = pneg %p66
    %p73 = scmp.eq.s32.totalorder %s10, 5
    %p74 = por %p72, %p73
    %p75 = scmp.ne.s32.totalorder %s67, %s70
    %p76 = scmp.eq.s32.totalorder %s10, 0
    %p77 = por %p75, %p76
    %p78 = scmp.ne.s32.totalorder %s67, %s70
    %p79 = scmp.eq.s32.totalorder %s15, 5
    %p80 = por %p78, %p79
    %p81 = scmp.ne.s32.totalorder %s70, %s71
    %p82 = scmp.eq.s32.totalorder %s15, 0
    %p83 = por %p81, %p82
    %p84 = scmp.ne.s32.totalorder %s70, %s71
    %p85 = scmp.eq.s32.totalorder %s16, 5
    %p86 = por %p84, %p85
    %p88 = scmp.ne.s32.totalorder %s71, %s87
    %p89 = scmp.eq.s32.totalorder %s16, 0
    %p90 = por %p88, %p89
    %s91 = ssub.s32 %s10, %s17
    %p92 = scmp.eq.s32.totalorder %s91, 0
    %s94 = sadd.s32 %s93, 1
    %s95 = scalar_select %p92, %s93, %s94
    %p98 = pneg %p92
    %p99 = scmp.eq.s32.totalorder %s10, 5
    %p100 = por %p98, %p99
    %p101 = scmp.ne.s32.totalorder %s93, %s96
    %p102 = scmp.eq.s32.totalorder %s10, 0
    %p103 = por %p101, %p102
    %p104 = scmp.ne.s32.totalorder %s93, %s96
    %p105 = scmp.eq.s32.totalorder %s15, 5
    %p106 = por %p104, %p105
    %p107 = scmp.ne.s32.totalorder %s96, %s97
    %p108 = scmp.eq.s32.totalorder %s15, 0
    %p109 = por %p107, %p108
    %p110 = scmp.ne.s32.totalorder %s96, %s97
    %p111 = scmp.eq.s32.totalorder %s16, 5
    %p112 = por %p110, %p111
    %p114 = scmp.ne.s32.totalorder %s97, %s113
    %p115 = scmp.eq.s32.totalorder %s16, 0
    %p116 = por %p114, %p115
    %s117 = ssub.s32 %s10, %s17
    %p118 = scmp.eq.s32.totalorder %s117, 0
    %s120 = sadd.s32 %s119, 1
    %s121 = scalar_select %p118, %s119, %s120
    %p124 = pneg %p118
    %p125 = scmp.eq.s32.totalorder %s10, 5
    %p126 = por %p124, %p125
    %p127 = scmp.ne.s32.totalorder %s119, %s122
    %p128 = scmp.eq.s32.totalorder %s10, 0
    %p129 = por %p127, %p128
    %p130 = scmp.ne.s32.totalorder %s119, %s122
    %p131 = scmp.eq.s32.totalorder %s15, 5
    %p132 = por %p130, %p131
    %p133 = scmp.ne.s32.totalorder %s122, %s123
    %p134 = scmp.eq.s32.totalorder %s15, 0
    %p135 = por %p133, %p134
    %p136 = scmp.ne.s32.totalorder %s122, %s123
    %p137 = scmp.eq.s32.totalorder %s16, 5
    %p138 = por %p136, %p137
    %p140 = scmp.ne.s32.totalorder %s123, %s139
    %p141 = scmp.eq.s32.totalorder %s16, 0
    %p142 = por %p140, %p141
    %p143 = scmp.le.s32.totalorder 1, %s10
    %p144 = scmp.lt.s32.totalorder %s10, 7
    %p145 = pnand %p143, %p144
    %p146 = pneg %p145
    // Predicated region
    $region9: #{tpu_custom_call.1} parent=5 // pred_check
      _
    $region10: #{tpu_custom_call.1} parent=5 // pred_check_branch
      %148 = sbr.rel (%p145) target = $region12
    $region11: #{tpu_custom_call.1} parent=5 // pred_region
      %s149 = ssub.s32 %s10, 1
      // Predicated region
      $region13: #{tpu_custom_call.1} parent=11 // pred_check
        %p150 = pneg %p57
      $region14: #{tpu_custom_call.1} parent=11 // pred_check_branch
        %152 = sbr.rel (%p150) target = $region16
      $region15: #{tpu_custom_call.1} parent=11 // pred_region
        _
      $region16: #{tpu_custom_call.1} parent=11 // pred_fallthru
        _
    $region12: #{tpu_custom_call.1} parent=5 // pred_fallthru
      _
    %p153 = scmp.lt.s32.totalorder %s10, 6
    // Predicated region
    $region17: #{tpu_custom_call.1} parent=5 // pred_check
      %p154 = pneg %p153
    $region18: #{tpu_custom_call.1} parent=5 // pred_check_branch
      %156 = sbr.rel (%p154) target = $region20
    $region19: #{tpu_custom_call.1} parent=5 // pred_region
      // Predicated region
      $region21: #{tpu_custom_call.1} parent=19 // pred_check
        %p157 = pneg %p30
      $region22: #{tpu_custom_call.1} parent=19 // pred_check_branch
        %159 = sbr.rel (%p157) target = $region24
      $region23: #{tpu_custom_call.1} parent=19 // pred_region
        %s160 = smul.u32 29, %s10
        %p161 = scmp.lt.s32.totalorder %s160, 173
        %s162 = scalar_select %p161, %s160, 173
        %s163 = smul.addr %s162, 11
        %s164 = smul.addr %s163, 4
        %s165 = scalar_lea.vmem %s0, %s164
        %s166 = smul.u32 29, %s10
      $region24: #{tpu_custom_call.1} parent=19 // pred_fallthru
        _
      // Predicated region
      $region25: #{tpu_custom_call.1} parent=19 // pred_check
        %p167 = pneg %p77
      $region26: #{tpu_custom_call.1} parent=19 // pred_check_branch
        %169 = sbr.rel (%p167) target = $region28
      $region27: #{tpu_custom_call.1} parent=19 // pred_region
        %s170 = smul.u32 29, %s10
        %p171 = scmp.lt.s32.totalorder %s170, 173
        %s172 = scalar_select %p171, %s170, 173
        %s173 = smul.addr %s172, 8
        %s174 = scalar_lea.vmem %s2, %s173
        %s175 = smul.u32 29, %s10
      $region28: #{tpu_custom_call.1} parent=19 // pred_fallthru
        _
      // Predicated region
      $region29: #{tpu_custom_call.1} parent=19 // pred_check
        %p176 = pneg %p103
      $region30: #{tpu_custom_call.1} parent=19 // pred_check_branch
        %178 = sbr.rel (%p176) target = $region32
      $region31: #{tpu_custom_call.1} parent=19 // pred_region
        %s179 = smul.u32 29, %s10
        %p180 = scmp.lt.s32.totalorder %s179, 173
        %s181 = scalar_select %p180, %s179, 173
        %s182 = smul.addr %s181, 8
        %s183 = scalar_lea.vmem %s3, %s182
        %s184 = smul.u32 29, %s10
      $region32: #{tpu_custom_call.1} parent=19 // pred_fallthru
        _
    $region20: #{tpu_custom_call.1} parent=5 // pred_fallthru
      _
    %p185 = scmp.le.s32.totalorder 1, %s10
    %p186 = scmp.lt.s32.totalorder %s10, 7
    %p187 = pnand %p185, %p186
    %p188 = pneg %p187
    // Predicated region
    $region33: #{tpu_custom_call.1} parent=5 // pred_check
      _
    $region34: #{tpu_custom_call.1} parent=5 // pred_check_branch
      %190 = sbr.rel (%p187) target = $region36
    $region35: #{tpu_custom_call.1} parent=5 // pred_region
      %s191 = ssub.s32 %s10, 1
      %s192 = smul.u32 29, %s15
      %p193 = scmp.lt.s32.totalorder %s192, 173
      %s194 = scalar_select %p193, %s192, 173
      %s195 = smul.addr %s194, 11
      %s196 = smul.addr %s195, 4
      %s197 = scalar_lea.vmem %s0, %s196
      %p198 = pneg %p36
      %p199 = pneg %p33
      %p200 = pneg %p57
      %p201 = pneg %p54
      %s202 = smul.u32 29, %s15
      %p203 = scmp.lt.s32.totalorder %s202, 173
      %s204 = scalar_select %p203, %s202, 173
      %s205 = smul.addr %s204, 8
      %s206 = scalar_lea.vmem %s2, %s205
      %p207 = pneg %p83
      %p208 = pneg %p80
      %s209 = smul.u32 29, %s15
      %p210 = scmp.lt.s32.totalorder %s209, 173
      %s211 = scalar_select %p210, %s209, 173
      %s212 = smul.addr %s211, 8
      %s213 = scalar_lea.vmem %s3, %s212
      %p214 = pneg %p109
      %p215 = pneg %p106
      %p216 = pneg %p135
      %p217 = pneg %p132
      %s218 = smul.u32 29, %s15
      %p219 = scmp.lt.s32.totalorder %s218, 173
      %s220 = scalar_select %p219, %s218, 173
      %s221 = smul.addr %s220, 2
      %s222 = smul.addr %s221, 8
      %s223 = scalar_lea.vmem %s4, %s222
      %s224 = smul.u32 29, %s15
      %p225 = scmp.lt.s32.totalorder %s224, 173
      %s226 = scalar_select %p225, %s224, 173
      %s227 = smul.addr %s226, 11
      %s228 = smul.addr %s227, 4
      %s229 = scalar_lea.vmem %s0, %s228
      %s230 = smul.u32 29, %s15
      %s231 = smul.u32 29, %s15
      %p232 = scmp.lt.s32.totalorder %s231, 173
      %s233 = scalar_select %p232, %s231, 173
      %s234 = smul.addr %s233, 8
      %s235 = scalar_lea.vmem %s2, %s234
      %s236 = smul.u32 29, %s15
      %s237 = smul.u32 29, %s15
      %p238 = scmp.lt.s32.totalorder %s237, 173
      %s239 = scalar_select %p238, %s237, 173
      %s240 = smul.addr %s239, 8
      %s241 = scalar_lea.vmem %s3, %s240
      %s242 = smul.u32 29, %s15
      %s243 = smul.u32 29, %s15
      %p244 = scmp.lt.s32.totalorder %s243, 173
      %s245 = scalar_select %p244, %s243, 173
      %s246 = smul.addr %s245, 2
      %s247 = smul.addr %s246, 8
      %s248 = scalar_lea.vmem %s4, %s247
      %s249 = smul.u32 29, %s15
      %v251 = vld [vmem:[%s229] sm:$0xff]
      %v252 = vld [vmem:[%s229 + $0x8] sm:$0xff]
      %v253 = vld [vmem:[%s229 + $0x10] sm:$0xff]
      %v254 = vld [vmem:[%s229 + $0x18] sm:$0xff]
      %v255 = vld [vmem:[%s229 + $0x20] sm:$0xff]
      %v256 = vld [vmem:[%s229 + $0x28] sm:$0xf]
      %v257 = vld [vmem:[%s229 + $0x2c] sm:$0xff]
      %v258 = vld [vmem:[%s229 + $0x34] sm:$0xff]
      %v259 = vld [vmem:[%s229 + $0x3c] sm:$0xff]
      %v260 = vld [vmem:[%s229 + $0x44] sm:$0xff]
      %v261 = vld [vmem:[%s229 + $0x4c] sm:$0xff]
      %v262 = vld [vmem:[%s229 + $0x54] sm:$0xf]
      %v263 = vld [vmem:[%s229 + $0x58] sm:$0xff]
      %v264 = vld [vmem:[%s229 + $0x60] sm:$0xff]
      %v265 = vld [vmem:[%s229 + $0x68] sm:$0xff]
      %v266 = vld [vmem:[%s229 + $0x70] sm:$0xff]
      %v267 = vld [vmem:[%s229 + $0x78] sm:$0xff]
      %v268 = vld [vmem:[%s229 + $0x80] sm:$0xf]
      %v269 = vld [vmem:[%s229 + $0x84] sm:$0xff]
      %v270 = vld [vmem:[%s229 + $0x8c] sm:$0xff]
      %v271 = vld [vmem:[%s229 + $0x94] sm:$0xff]
      %v272 = vld [vmem:[%s229 + $0x9c] sm:$0xff]
      %v273 = vld [vmem:[%s229 + $0xa4] sm:$0xff]
      %v274 = vld [vmem:[%s229 + $0xac] sm:$0xf]
      %v275 = vld [vmem:[%s229 + $0xb0] sm:$0xff]
      %v276 = vld [vmem:[%s229 + $0xb8] sm:$0xff]
      %v277 = vld [vmem:[%s229 + $0xc0] sm:$0xff]
      %v278 = vld [vmem:[%s229 + $0xc8] sm:$0xff]
      %v279 = vld [vmem:[%s229 + $0xd0] sm:$0xff]
      %v280 = vld [vmem:[%s229 + $0xd8] sm:$0xf]
      %v281 = vld [vmem:[%s229 + $0xdc] sm:$0xff]
      %v282 = vld [vmem:[%s229 + $0xe4] sm:$0xff]
      %v283 = vld [vmem:[%s229 + $0xec] sm:$0xff]
      %v284 = vld [vmem:[%s229 + $0xf4] sm:$0xff]
      %v285 = vld [vmem:[%s229 + $0xfc] sm:$0xff]
      %v286 = vld [vmem:[%s229 + $0x104] sm:$0xf]
      %v287 = vld [vmem:[%s229 + $0x108] sm:$0xff]
      %v288 = vld [vmem:[%s229 + $0x110] sm:$0xff]
      %v289 = vld [vmem:[%s229 + $0x118] sm:$0xff]
      %v290 = vld [vmem:[%s229 + $0x120] sm:$0xff]
      %v291 = vld [vmem:[%s229 + $0x128] sm:$0xff]
      %v292 = vld [vmem:[%s229 + $0x130] sm:$0xf]
      %v293 = vld [vmem:[%s229 + $0x134] sm:$0xff]
      %v294 = vld [vmem:[%s229 + $0x13c] sm:$0xff]
      %v295 = vld [vmem:[%s229 + $0x144] sm:$0xff]
      %v296 = vld [vmem:[%s229 + $0x14c] sm:$0xff]
      %v297 = vld [vmem:[%s229 + $0x154] sm:$0xff]
      %v298 = vld [vmem:[%s229 + $0x15c] sm:$0xf]
      %v299 = vld [vmem:[%s229 + $0x160] sm:$0xff]
      %v300 = vld [vmem:[%s229 + $0x168] sm:$0xff]
      %v301 = vld [vmem:[%s229 + $0x170] sm:$0xff]
      %v302 = vld [vmem:[%s229 + $0x178] sm:$0xff]
      %v303 = vld [vmem:[%s229 + $0x180] sm:$0xff]
      %v304 = vld [vmem:[%s229 + $0x188] sm:$0xf]
      %v305 = vld [vmem:[%s229 + $0x18c] sm:$0xff]
      %v306 = vld [vmem:[%s229 + $0x194] sm:$0xff]
      %v307 = vld [vmem:[%s229 + $0x19c] sm:$0xff]
      %v308 = vld [vmem:[%s229 + $0x1a4] sm:$0xff]
      %v309 = vld [vmem:[%s229 + $0x1ac] sm:$0xff]
      %v310 = vld [vmem:[%s229 + $0x1b4] sm:$0xf]
      %v311 = vld [vmem:[%s229 + $0x1b8] sm:$0xff]
      %v312 = vld [vmem:[%s229 + $0x1c0] sm:$0xff]
      %v313 = vld [vmem:[%s229 + $0x1c8] sm:$0xff]
      %v314 = vld [vmem:[%s229 + $0x1d0] sm:$0xff]
      %v315 = vld [vmem:[%s229 + $0x1d8] sm:$0xff]
      %v316 = vld [vmem:[%s229 + $0x1e0] sm:$0xf]
      %v317 = vld [vmem:[%s229 + $0x1e4] sm:$0xff]
      %v318 = vld [vmem:[%s229 + $0x1ec] sm:$0xff]
      %v319 = vld [vmem:[%s229 + $0x1f4] sm:$0xff]
      %v320 = vld [vmem:[%s229 + $0x1fc] sm:$0xff]
      %v321 = vld [vmem:[%s229 + $0x204] sm:$0xff]
      %v322 = vld [vmem:[%s229 + $0x20c] sm:$0xf]
      %v323 = vld [vmem:[%s229 + $0x210] sm:$0xff]
      %v324 = vld [vmem:[%s229 + $0x218] sm:$0xff]
      %v325 = vld [vmem:[%s229 + $0x220] sm:$0xff]
      %v326 = vld [vmem:[%s229 + $0x228] sm:$0xff]
      %v327 = vld [vmem:[%s229 + $0x230] sm:$0xff]
      %v328 = vld [vmem:[%s229 + $0x238] sm:$0xf]
      %v329 = vld [vmem:[%s229 + $0x23c] sm:$0xff]
      %v330 = vld [vmem:[%s229 + $0x244] sm:$0xff]
      %v331 = vld [vmem:[%s229 + $0x24c] sm:$0xff]
      %v332 = vld [vmem:[%s229 + $0x254] sm:$0xff]
      %v333 = vld [vmem:[%s229 + $0x25c] sm:$0xff]
      %v334 = vld [vmem:[%s229 + $0x264] sm:$0xf]
      %v335 = vld [vmem:[%s229 + $0x268] sm:$0xff]
      %v336 = vld [vmem:[%s229 + $0x270] sm:$0xff]
      %v337 = vld [vmem:[%s229 + $0x278] sm:$0xff]
      %v338 = vld [vmem:[%s229 + $0x280] sm:$0xff]
      %v339 = vld [vmem:[%s229 + $0x288] sm:$0xff]
      %v340 = vld [vmem:[%s229 + $0x290] sm:$0xf]
      %v341 = vld [vmem:[%s229 + $0x294] sm:$0xff]
      %v342 = vld [vmem:[%s229 + $0x29c] sm:$0xff]
      %v343 = vld [vmem:[%s229 + $0x2a4] sm:$0xff]
      %v344 = vld [vmem:[%s229 + $0x2ac] sm:$0xff]
      %v345 = vld [vmem:[%s229 + $0x2b4] sm:$0xff]
      %v346 = vld [vmem:[%s229 + $0x2bc] sm:$0xf]
      %v347 = vld [vmem:[%s229 + $0x2c0] sm:$0xff]
      %v348 = vld [vmem:[%s229 + $0x2c8] sm:$0xff]
      %v349 = vld [vmem:[%s229 + $0x2d0] sm:$0xff]
      %v350 = vld [vmem:[%s229 + $0x2d8] sm:$0xff]
      %v351 = vld [vmem:[%s229 + $0x2e0] sm:$0xff]
      %v352 = vld [vmem:[%s229 + $0x2e8] sm:$0xf]
      %v353 = vld [vmem:[%s229 + $0x2ec] sm:$0xff]
      %v354 = vld [vmem:[%s229 + $0x2f4] sm:$0xff]
      %v355 = vld [vmem:[%s229 + $0x2fc] sm:$0xff]
      %v356 = vld [vmem:[%s229 + $0x304] sm:$0xff]
      %v357 = vld [vmem:[%s229 + $0x30c] sm:$0xff]
      %v358 = vld [vmem:[%s229 + $0x314] sm:$0xf]
      %v359 = vld [vmem:[%s229 + $0x318] sm:$0xff]
      %v360 = vld [vmem:[%s229 + $0x320] sm:$0xff]
      %v361 = vld [vmem:[%s229 + $0x328] sm:$0xff]
      %v362 = vld [vmem:[%s229 + $0x330] sm:$0xff]
      %v363 = vld [vmem:[%s229 + $0x338] sm:$0xff]
      %v364 = vld [vmem:[%s229 + $0x340] sm:$0xf]
      %v365 = vld [vmem:[%s229 + $0x344] sm:$0xff]
      %v366 = vld [vmem:[%s229 + $0x34c] sm:$0xff]
      %v367 = vld [vmem:[%s229 + $0x354] sm:$0xff]
      %v368 = vld [vmem:[%s229 + $0x35c] sm:$0xff]
      %v369 = vld [vmem:[%s229 + $0x364] sm:$0xff]
      %v370 = vld [vmem:[%s229 + $0x36c] sm:$0xf]
      %v371 = vld [vmem:[%s229 + $0x370] sm:$0xff]
      %v372 = vld [vmem:[%s229 + $0x378] sm:$0xff]
      %v373 = vld [vmem:[%s229 + $0x380] sm:$0xff]
      %v374 = vld [vmem:[%s229 + $0x388] sm:$0xff]
      %v375 = vld [vmem:[%s229 + $0x390] sm:$0xff]
      %v376 = vld [vmem:[%s229 + $0x398] sm:$0xf]
      %v377 = vld [vmem:[%s229 + $0x39c] sm:$0xff]
      %v378 = vld [vmem:[%s229 + $0x3a4] sm:$0xff]
      %v379 = vld [vmem:[%s229 + $0x3ac] sm:$0xff]
      %v380 = vld [vmem:[%s229 + $0x3b4] sm:$0xff]
      %v381 = vld [vmem:[%s229 + $0x3bc] sm:$0xff]
      %v382 = vld [vmem:[%s229 + $0x3c4] sm:$0xf]
      %v383 = vld [vmem:[%s229 + $0x3c8] sm:$0xff]
      %v384 = vld [vmem:[%s229 + $0x3d0] sm:$0xff]
      %v385 = vld [vmem:[%s229 + $0x3d8] sm:$0xff]
      %v386 = vld [vmem:[%s229 + $0x3e0] sm:$0xff]
      %v387 = vld [vmem:[%s229 + $0x3e8] sm:$0xff]
      %v388 = vld [vmem:[%s229 + $0x3f0] sm:$0xf]
      %v389 = vld [vmem:[%s229 + $0x3f4] sm:$0xff]
      %v390 = vld [vmem:[%s229 + $0x3fc] sm:$0xff]
      %v391 = vld [vmem:[%s229 + $0x404] sm:$0xff]
      %v392 = vld [vmem:[%s229 + $0x40c] sm:$0xff]
      %v393 = vld [vmem:[%s229 + $0x414] sm:$0xff]
      %v394 = vld [vmem:[%s229 + $0x41c] sm:$0xf]
      %v395 = vld [vmem:[%s229 + $0x420] sm:$0xff]
      %v396 = vld [vmem:[%s229 + $0x428] sm:$0xff]
      %v397 = vld [vmem:[%s229 + $0x430] sm:$0xff]
      %v398 = vld [vmem:[%s229 + $0x438] sm:$0xff]
      %v399 = vld [vmem:[%s229 + $0x440] sm:$0xff]
      %v400 = vld [vmem:[%s229 + $0x448] sm:$0xf]
      %v401 = vld [vmem:[%s229 + $0x44c] sm:$0xff]
      %v402 = vld [vmem:[%s229 + $0x454] sm:$0xff]
      %v403 = vld [vmem:[%s229 + $0x45c] sm:$0xff]
      %v404 = vld [vmem:[%s229 + $0x464] sm:$0xff]
      %v405 = vld [vmem:[%s229 + $0x46c] sm:$0xff]
      %v406 = vld [vmem:[%s229 + $0x474] sm:$0xf]
      %v407 = vld [vmem:[%s229 + $0x478] sm:$0xff]
      %v408 = vld [vmem:[%s229 + $0x480] sm:$0xff]
      %v409 = vld [vmem:[%s229 + $0x488] sm:$0xff]
      %v410 = vld [vmem:[%s229 + $0x490] sm:$0xff]
      %v411 = vld [vmem:[%s229 + $0x498] sm:$0xff]
      %v412 = vld [vmem:[%s229 + $0x4a0] sm:$0xf]
      %v413 = vld [vmem:[%s229 + $0x4a4] sm:$0xff]
      %v414 = vld [vmem:[%s229 + $0x4ac] sm:$0xff]
      %v415 = vld [vmem:[%s229 + $0x4b4] sm:$0xff]
      %v416 = vld [vmem:[%s229 + $0x4bc] sm:$0xff]
      %v417 = vld [vmem:[%s229 + $0x4c4] sm:$0xff]
      %v418 = vld [vmem:[%s229 + $0x4cc] sm:$0xf]
      %v419 = vld [vmem:[%s229 + $0x4d0] sm:$0xff]
      %v420 = vld [vmem:[%s229 + $0x4d8] sm:$0xff]
      %v421 = vld [vmem:[%s229 + $0x4e0] sm:$0xff]
      %v422 = vld [vmem:[%s229 + $0x4e8] sm:$0xff]
      %v423 = vld [vmem:[%s229 + $0x4f0] sm:$0xff]
      %v424 = vld [vmem:[%s229 + $0x4f8] sm:$0xf]
      %v425 = vld [vmem:[%s1] sm:$0xff]
      %v426 = vld [vmem:[%s1 + $0x8] sm:$0xff]
      %v427 = vld [vmem:[%s1 + $0x10] sm:$0xff]
      %v428 = vld [vmem:[%s1 + $0x18] sm:$0xff]
      %v429 = vld [vmem:[%s1 + $0x20] sm:$0xff]
      %v430 = vld [vmem:[%s1 + $0x28] sm:$0xff]
      %v431 = vld [vmem:[%s1 + $0x30] sm:$0xff]
      %v432 = vld [vmem:[%s1 + $0x38] sm:$0xff]
      %v433 = vld [vmem:[%s1 + $0x40] sm:$0xff]
      %v434 = vld [vmem:[%s1 + $0x48] sm:$0xff]
      %v435 = vld [vmem:[%s1 + $0x50] sm:$0xff]
      %v436 = vld [vmem:[%s1 + $0x58] sm:$0xff]
      %v437 = vld [vmem:[%s1 + $0x60] sm:$0xff]
      %v438 = vld [vmem:[%s1 + $0x68] sm:$0xff]
      %v439 = vld [vmem:[%s1 + $0x70] sm:$0xff]
      %v440 = vld [vmem:[%s1 + $0x78] sm:$0xff]
      %v441 = vld [vmem:[%s1 + $0x80] sm:$0xff]
      %v442 = vld [vmem:[%s1 + $0x88] sm:$0xff]
      %v443 = vld [vmem:[%s1 + $0x90] sm:$0xff]
      %v444 = vld [vmem:[%s1 + $0x98] sm:$0xff]
      %v445 = vld [vmem:[%s1 + $0xa0] sm:$0xff]
      %v446 = vld [vmem:[%s1 + $0xa8] sm:$0xff]
      %v447 = vld [vmem:[%s1 + $0xb0] sm:$0xff]
      %v448 = vld [vmem:[%s1 + $0xb8] sm:$0xff]
      %v449 = vld [vmem:[%s1 + $0xc0] sm:$0xff]
      %v450 = vld [vmem:[%s1 + $0xc8] sm:$0xff]
      %v451 = vld [vmem:[%s1 + $0xd0] sm:$0xff]
      %v452 = vld [vmem:[%s1 + $0xd8] sm:$0xff]
      %v453 = vld [vmem:[%s1 + $0xe0] sm:$0xff]
      %v454 = vld [vmem:[%s1 + $0xe8] sm:$0xff]
      %v455 = vld [vmem:[%s1 + $0xf0] sm:$0xff]
      %v456 = vld [vmem:[%s1 + $0xf8] sm:$0xff]
      %v457 = vld [vmem:[%s1 + $0x100] sm:$0xff]
      %v458 = vld [vmem:[%s1 + $0x108] sm:$0xff]
      %v459 = vld [vmem:[%s1 + $0x110] sm:$0xff]
      %v460 = vld [vmem:[%s1 + $0x118] sm:$0xff]
      %v461 = vld [vmem:[%s1 + $0x120] sm:$0xff]
      %v462 = vld [vmem:[%s1 + $0x128] sm:$0xff]
      %v463 = vld [vmem:[%s1 + $0x130] sm:$0xff]
      %v464 = vld [vmem:[%s1 + $0x138] sm:$0xff]
      %v465 = vld [vmem:[%s1 + $0x140] sm:$0xff]
      %v466 = vld [vmem:[%s1 + $0x148] sm:$0xff]
      %v467 = vld [vmem:[%s1 + $0x150] sm:$0xff]
      %v468 = vld [vmem:[%s1 + $0x158] sm:$0xff]
      %v469 = vld [vmem:[%s1 + $0x160] sm:$0xff]
      %v470 = vld [vmem:[%s1 + $0x168] sm:$0xff]
      %v471 = vld [vmem:[%s1 + $0x170] sm:$0xff]
      %v472 = vld [vmem:[%s1 + $0x178] sm:$0xff]
      %v473 = vld [vmem:[%s1 + $0x180] sm:$0xff]
      %v474 = vld [vmem:[%s1 + $0x188] sm:$0xff]
      %v475 = vld [vmem:[%s1 + $0x190] sm:$0xff]
      %v476 = vld [vmem:[%s1 + $0x198] sm:$0xff]
      %v477 = vld [vmem:[%s1 + $0x1a0] sm:$0xff]
      %v478 = vld [vmem:[%s1 + $0x1a8] sm:$0xff]
      %v479 = vld [vmem:[%s1 + $0x1b0] sm:$0xff]
      %v480 = vld [vmem:[%s1 + $0x1b8] sm:$0xff]
      %v481 = vld [vmem:[%s1 + $0x1c0] sm:$0xff]
      %v482 = vld [vmem:[%s1 + $0x1c8] sm:$0xff]
      %v483 = vld [vmem:[%s1 + $0x1d0] sm:$0xff]
      %v484 = vld [vmem:[%s1 + $0x1d8] sm:$0xff]
      %v485 = vld [vmem:[%s1 + $0x1e0] sm:$0xff]
      %v486 = vld [vmem:[%s1 + $0x1e8] sm:$0xff]
      %v487 = vld [vmem:[%s1 + $0x1f0] sm:$0xff]
      %v488 = vld [vmem:[%s1 + $0x1f8] sm:$0xff]
      %v489 = vld [vmem:[%s1 + $0x200] sm:$0xff]
      %v490 = vld [vmem:[%s1 + $0x208] sm:$0xff]
      %v491 = vld [vmem:[%s1 + $0x210] sm:$0xff]
      %v492 = vld [vmem:[%s1 + $0x218] sm:$0xff]
      %v493 = vld [vmem:[%s1 + $0x220] sm:$0xff]
      %v494 = vld [vmem:[%s1 + $0x228] sm:$0xff]
      %v495 = vld [vmem:[%s1 + $0x230] sm:$0xff]
      %v496 = vld [vmem:[%s1 + $0x238] sm:$0xff]
      %v497 = vld [vmem:[%s1 + $0x240] sm:$0xff]
      %v498 = vld [vmem:[%s1 + $0x248] sm:$0xff]
      %v499 = vld [vmem:[%s1 + $0x250] sm:$0xff]
      %v500 = vld [vmem:[%s1 + $0x258] sm:$0xff]
      %v501 = vld [vmem:[%s1 + $0x260] sm:$0xff]
      %v502 = vld [vmem:[%s1 + $0x268] sm:$0xff]
      %v503 = vld [vmem:[%s1 + $0x270] sm:$0xff]
      %v504 = vld [vmem:[%s1 + $0x278] sm:$0xff]
      %v505 = vld [vmem:[%s1 + $0x280] sm:$0xff]
      %v506 = vld [vmem:[%s1 + $0x288] sm:$0xff]
      %v507 = vld [vmem:[%s1 + $0x290] sm:$0xff]
      %v508 = vld [vmem:[%s1 + $0x298] sm:$0xff]
      %v509 = vld [vmem:[%s1 + $0x2a0] sm:$0xff]
      %v510 = vld [vmem:[%s1 + $0x2a8] sm:$0xff]
      %v511 = vld [vmem:[%s1 + $0x2b0] sm:$0xff]
      %v512 = vld [vmem:[%s1 + $0x2b8] sm:$0xff]
      %v513 = vld [vmem:[%s1 + $0x2c0] sm:$0xff]
      %v514 = vld [vmem:[%s1 + $0x2c8] sm:$0xff]
      %v515 = vld [vmem:[%s1 + $0x2d0] sm:$0xff]
      %v516 = vld [vmem:[%s1 + $0x2d8] sm:$0xff]
      %v517 = vld [vmem:[%s1 + $0x2e0] sm:$0xff]
      %v518 = vld [vmem:[%s1 + $0x2e8] sm:$0xff]
      %v519 = vld [vmem:[%s1 + $0x2f0] sm:$0xff]
      %v520 = vld [vmem:[%s1 + $0x2f8] sm:$0xff]
      %v521 = vld [vmem:[%s1 + $0x300] sm:$0xff]
      %v522 = vld [vmem:[%s1 + $0x308] sm:$0xff]
      %v523 = vld [vmem:[%s1 + $0x310] sm:$0xff]
      %v524 = vld [vmem:[%s1 + $0x318] sm:$0xff]
      %v525 = vld [vmem:[%s1 + $0x320] sm:$0xff]
      %v526 = vld [vmem:[%s1 + $0x328] sm:$0xff]
      %v527 = vld [vmem:[%s1 + $0x330] sm:$0xff]
      %v528 = vld [vmem:[%s1 + $0x338] sm:$0xff]
      %v529 = vld [vmem:[%s1 + $0x340] sm:$0xff]
      %v530 = vld [vmem:[%s1 + $0x348] sm:$0xff]
      %v531 = vld [vmem:[%s1 + $0x350] sm:$0xff]
      %v532 = vld [vmem:[%s1 + $0x358] sm:$0xff]
      %v533 = vld [vmem:[%s1 + $0x360] sm:$0xff]
      %v534 = vld [vmem:[%s1 + $0x368] sm:$0xff]
      %v535 = vld [vmem:[%s1 + $0x370] sm:$0xff]
      %v536 = vld [vmem:[%s1 + $0x378] sm:$0xff]
      %v537 = vld [vmem:[%s1 + $0x380] sm:$0xff]
      %v538 = vld [vmem:[%s1 + $0x388] sm:$0xff]
      %v539 = vld [vmem:[%s1 + $0x390] sm:$0xff]
      %v540 = vld [vmem:[%s1 + $0x398] sm:$0xff]
      %v541 = vld [vmem:[%s1 + $0x3a0] sm:$0xff]
      %v542 = vld [vmem:[%s1 + $0x3a8] sm:$0xff]
      %v543 = vld [vmem:[%s1 + $0x3b0] sm:$0xff]
      %v544 = vld [vmem:[%s1 + $0x3b8] sm:$0xff]
      %v545 = vld [vmem:[%s1 + $0x3c0] sm:$0xff]
      %v546 = vld [vmem:[%s1 + $0x3c8] sm:$0xff]
      %v547 = vld [vmem:[%s1 + $0x3d0] sm:$0xff]
      %v548 = vld [vmem:[%s1 + $0x3d8] sm:$0xff]
      %v549 = vld [vmem:[%s1 + $0x3e0] sm:$0xff]
      %v550 = vld [vmem:[%s1 + $0x3e8] sm:$0xff]
      %v551 = vld [vmem:[%s1 + $0x3f0] sm:$0xff]
      %v552 = vld [vmem:[%s1 + $0x3f8] sm:$0xff]
      %v553 = vld [vmem:[%s1 + $0x400] sm:$0xff]
      %v554 = vld [vmem:[%s1 + $0x408] sm:$0xff]
      %v555 = vld [vmem:[%s1 + $0x410] sm:$0xff]
      %v556 = vld [vmem:[%s1 + $0x418] sm:$0xff]
      %v557 = vld [vmem:[%s1 + $0x420] sm:$0xff]
      %v558 = vld [vmem:[%s1 + $0x428] sm:$0xff]
      %v559 = vld [vmem:[%s1 + $0x430] sm:$0xff]
      %v560 = vld [vmem:[%s1 + $0x438] sm:$0xff]
      %v561 = vld [vmem:[%s1 + $0x440] sm:$0xff]
      %v562 = vld [vmem:[%s1 + $0x448] sm:$0xff]
      %v563 = vld [vmem:[%s1 + $0x450] sm:$0xff]
      %v564 = vld [vmem:[%s1 + $0x458] sm:$0xff]
      %v565 = vld [vmem:[%s1 + $0x460] sm:$0xff]
      %v566 = vld [vmem:[%s1 + $0x468] sm:$0xff]
      %v567 = vld [vmem:[%s1 + $0x470] sm:$0xff]
      %v568 = vld [vmem:[%s1 + $0x478] sm:$0xff]
      %v569 = vld [vmem:[%s1 + $0x480] sm:$0xff]
      %v570 = vld [vmem:[%s1 + $0x488] sm:$0xff]
      %v571 = vld [vmem:[%s1 + $0x490] sm:$0xff]
      %v572 = vld [vmem:[%s1 + $0x498] sm:$0xff]
      %v573 = vld [vmem:[%s1 + $0x4a0] sm:$0xff]
      %v574 = vld [vmem:[%s1 + $0x4a8] sm:$0xff]
      %v575 = vld [vmem:[%s1 + $0x4b0] sm:$0xff]
      %v576 = vld [vmem:[%s1 + $0x4b8] sm:$0xff]
      %v577 = vld [vmem:[%s1 + $0x4c0] sm:$0xff]
      %v578 = vld [vmem:[%s1 + $0x4c8] sm:$0xff]
      %v579 = vld [vmem:[%s1 + $0x4d0] sm:$0xff]
      %v580 = vld [vmem:[%s1 + $0x4d8] sm:$0xff]
      %v581 = vld [vmem:[%s1 + $0x4e0] sm:$0xff]
      %v582 = vld [vmem:[%s1 + $0x4e8] sm:$0xff]
      %v583 = vld [vmem:[%s1 + $0x4f0] sm:$0xff]
      %v584 = vld [vmem:[%s1 + $0x4f8] sm:$0xff]
      %v585 = vld [vmem:[%s1 + $0x500] sm:$0xff]
      %v586 = vld [vmem:[%s1 + $0x508] sm:$0xff]
      %v587 = vld [vmem:[%s1 + $0x510] sm:$0xff]
      %v588 = vld [vmem:[%s1 + $0x518] sm:$0xff]
      %v589 = vld [vmem:[%s1 + $0x520] sm:$0xff]
      %v590 = vld [vmem:[%s1 + $0x528] sm:$0xff]
      %v591 = vld [vmem:[%s1 + $0x530] sm:$0xff]
      %v592 = vld [vmem:[%s1 + $0x538] sm:$0xff]
      %v593 = vld [vmem:[%s1 + $0x540] sm:$0xff]
      %v594 = vld [vmem:[%s1 + $0x548] sm:$0xff]
      %v595 = vld [vmem:[%s1 + $0x550] sm:$0xff]
      %v596 = vld [vmem:[%s1 + $0x558] sm:$0xff]
      %v597 = vld [vmem:[%s1 + $0x560] sm:$0xff]
      %v598 = vld [vmem:[%s1 + $0x568] sm:$0xff]
      %v599 = vld [vmem:[%s1 + $0x570] sm:$0xff]
      %v600 = vld [vmem:[%s1 + $0x578] sm:$0xff]
      %v601 = vld [vmem:[%s1 + $0x580] sm:$0xff]
      %v602 = vld [vmem:[%s1 + $0x588] sm:$0xff]
      %v603 = vld [vmem:[%s1 + $0x590] sm:$0xff]
      %v604 = vld [vmem:[%s1 + $0x598] sm:$0xff]
      %v605 = vld [vmem:[%s1 + $0x5a0] sm:$0xff]
      %v606 = vld [vmem:[%s1 + $0x5a8] sm:$0xff]
      %v607 = vld [vmem:[%s1 + $0x5b0] sm:$0xff]
      %v608 = vld [vmem:[%s1 + $0x5b8] sm:$0xff]
      %v609 = vld [vmem:[%s1 + $0x5c0] sm:$0xff]
      %v610 = vld [vmem:[%s1 + $0x5c8] sm:$0xff]
      %v611 = vld [vmem:[%s1 + $0x5d0] sm:$0xff]
      %v612 = vld [vmem:[%s1 + $0x5d8] sm:$0xff]
      %v613 = vld [vmem:[%s1 + $0x5e0] sm:$0xff]
      %v614 = vld [vmem:[%s1 + $0x5e8] sm:$0xff]
      %v615 = vld [vmem:[%s1 + $0x5f0] sm:$0xff]
      %v616 = vld [vmem:[%s1 + $0x5f8] sm:$0xff]
      %v617 = vld [vmem:[%s1 + $0x600] sm:$0xff]
      %v618 = vld [vmem:[%s1 + $0x608] sm:$0xff]
      %v619 = vld [vmem:[%s1 + $0x610] sm:$0xff]
      %v620 = vld [vmem:[%s1 + $0x618] sm:$0xff]
      %v621 = vld [vmem:[%s1 + $0x620] sm:$0xff]
      %v622 = vld [vmem:[%s1 + $0x628] sm:$0xff]
      %v623 = vld [vmem:[%s1 + $0x630] sm:$0xff]
      %v624 = vld [vmem:[%s1 + $0x638] sm:$0xff]
      %v625 = vld [vmem:[%s1 + $0x640] sm:$0xff]
      %v626 = vld [vmem:[%s1 + $0x648] sm:$0xff]
      %v627 = vld [vmem:[%s1 + $0x650] sm:$0xff]
      %v628 = vld [vmem:[%s1 + $0x658] sm:$0xff]
      %v629 = vld [vmem:[%s1 + $0x660] sm:$0xff]
      %v630 = vld [vmem:[%s1 + $0x668] sm:$0xff]
      %v631 = vld [vmem:[%s1 + $0x670] sm:$0xff]
      %v632 = vld [vmem:[%s1 + $0x678] sm:$0xff]
      %v633 = vld [vmem:[%s1 + $0x680] sm:$0xff]
      %v634 = vld [vmem:[%s1 + $0x688] sm:$0xff]
      %v635 = vld [vmem:[%s1 + $0x690] sm:$0xff]
      %v636 = vld [vmem:[%s1 + $0x698] sm:$0xff]
      %v637 = vld [vmem:[%s1 + $0x6a0] sm:$0xff]
      %v638 = vld [vmem:[%s1 + $0x6a8] sm:$0xff]
      %v639 = vld [vmem:[%s1 + $0x6b0] sm:$0xff]
      %v640 = vld [vmem:[%s1 + $0x6b8] sm:$0xff]
      %v641 = vld [vmem:[%s1 + $0x6c0] sm:$0xff]
      %v642 = vld [vmem:[%s1 + $0x6c8] sm:$0xff]
      %v643 = vld [vmem:[%s1 + $0x6d0] sm:$0xff]
      %v644 = vld [vmem:[%s1 + $0x6d8] sm:$0xff]
      %v645 = vld [vmem:[%s1 + $0x6e0] sm:$0xff]
      %v646 = vld [vmem:[%s1 + $0x6e8] sm:$0xff]
      %v647 = vld [vmem:[%s1 + $0x6f0] sm:$0xff]
      %v648 = vld [vmem:[%s1 + $0x6f8] sm:$0xff]
      %v649 = vld [vmem:[%s1 + $0x700] sm:$0xff]
      %v650 = vld [vmem:[%s1 + $0x708] sm:$0xff]
      %v651 = vld [vmem:[%s1 + $0x710] sm:$0xff]
      %v652 = vld [vmem:[%s1 + $0x718] sm:$0xff]
      %v653 = vld [vmem:[%s1 + $0x720] sm:$0xff]
      %v654 = vld [vmem:[%s1 + $0x728] sm:$0xff]
      %v655 = vld [vmem:[%s1 + $0x730] sm:$0xff]
      %v656 = vld [vmem:[%s1 + $0x738] sm:$0xff]
      %v657 = vld [vmem:[%s1 + $0x740] sm:$0xff]
      %v658 = vld [vmem:[%s1 + $0x748] sm:$0xff]
      %v659 = vld [vmem:[%s1 + $0x750] sm:$0xff]
      %v660 = vld [vmem:[%s1 + $0x758] sm:$0xff]
      %v661 = vld [vmem:[%s1 + $0x760] sm:$0xff]
      %v662 = vld [vmem:[%s1 + $0x768] sm:$0xff]
      %v663 = vld [vmem:[%s1 + $0x770] sm:$0xff]
      %v664 = vld [vmem:[%s1 + $0x778] sm:$0xff]
      %v665 = vld [vmem:[%s1 + $0x780] sm:$0xff]
      %v666 = vld [vmem:[%s1 + $0x788] sm:$0xff]
      %v667 = vld [vmem:[%s1 + $0x790] sm:$0xff]
      %v668 = vld [vmem:[%s1 + $0x798] sm:$0xff]
      %v669 = vld [vmem:[%s1 + $0x7a0] sm:$0xff]
      %v670 = vld [vmem:[%s1 + $0x7a8] sm:$0xff]
      %v671 = vld [vmem:[%s1 + $0x7b0] sm:$0xff]
      %v672 = vld [vmem:[%s1 + $0x7b8] sm:$0xff]
      %v673 = vld [vmem:[%s1 + $0x7c0] sm:$0xff]
      %v674 = vld [vmem:[%s1 + $0x7c8] sm:$0xff]
      %v675 = vld [vmem:[%s1 + $0x7d0] sm:$0xff]
      %v676 = vld [vmem:[%s1 + $0x7d8] sm:$0xff]
      %v677 = vld [vmem:[%s1 + $0x7e0] sm:$0xff]
      %v678 = vld [vmem:[%s1 + $0x7e8] sm:$0xff]
      %v679 = vld [vmem:[%s1 + $0x7f0] sm:$0xff]
      %v680 = vld [vmem:[%s1 + $0x7f8] sm:$0xff]
      %v681 = vld [vmem:[%s1 + $0x800] sm:$0xff]
      %v682 = vld [vmem:[%s1 + $0x808] sm:$0xff]
      %v683 = vld [vmem:[%s1 + $0x810] sm:$0xff]
      %v684 = vld [vmem:[%s1 + $0x818] sm:$0xff]
      %v685 = vld [vmem:[%s1 + $0x820] sm:$0xff]
      %v686 = vld [vmem:[%s1 + $0x828] sm:$0xff]
      %v687 = vld [vmem:[%s1 + $0x830] sm:$0xff]
      %v688 = vld [vmem:[%s1 + $0x838] sm:$0xff]
      %v689 = vld [vmem:[%s1 + $0x840] sm:$0xff]
      %v690 = vld [vmem:[%s1 + $0x848] sm:$0xff]
      %v691 = vld [vmem:[%s1 + $0x850] sm:$0xff]
      %v692 = vld [vmem:[%s1 + $0x858] sm:$0xff]
      %v693 = vld [vmem:[%s1 + $0x860] sm:$0xff]
      %v694 = vld [vmem:[%s1 + $0x868] sm:$0xff]
      %v695 = vld [vmem:[%s1 + $0x870] sm:$0xff]
      %v696 = vld [vmem:[%s1 + $0x878] sm:$0xff]
      %v697 = vld [vmem:[%s1 + $0x880] sm:$0xff]
      %v698 = vld [vmem:[%s1 + $0x888] sm:$0xff]
      %v699 = vld [vmem:[%s1 + $0x890] sm:$0xff]
      %v700 = vld [vmem:[%s1 + $0x898] sm:$0xff]
      %v701 = vld [vmem:[%s1 + $0x8a0] sm:$0xff]
      %v702 = vld [vmem:[%s1 + $0x8a8] sm:$0xff]
      %v703 = vld [vmem:[%s1 + $0x8b0] sm:$0xff]
      %v704 = vld [vmem:[%s1 + $0x8b8] sm:$0xff]
      %v705 = vld [vmem:[%s1 + $0x8c0] sm:$0xff]
      %v706 = vld [vmem:[%s1 + $0x8c8] sm:$0xff]
      %v707 = vld [vmem:[%s1 + $0x8d0] sm:$0xff]
      %v708 = vld [vmem:[%s1 + $0x8d8] sm:$0xff]
      %v709 = vld [vmem:[%s1 + $0x8e0] sm:$0xff]
      %v710 = vld [vmem:[%s1 + $0x8e8] sm:$0xff]
      %v711 = vld [vmem:[%s1 + $0x8f0] sm:$0xff]
      %v712 = vld [vmem:[%s1 + $0x8f8] sm:$0xff]
      %v713 = vld [vmem:[%s1 + $0x900] sm:$0xff]
      %v714 = vld [vmem:[%s1 + $0x908] sm:$0xff]
      %v715 = vld [vmem:[%s1 + $0x910] sm:$0xff]
      %v716 = vld [vmem:[%s1 + $0x918] sm:$0xff]
      %v717 = vld [vmem:[%s1 + $0x920] sm:$0xff]
      %v718 = vld [vmem:[%s1 + $0x928] sm:$0xff]
      %v719 = vld [vmem:[%s1 + $0x930] sm:$0xff]
      %v720 = vld [vmem:[%s1 + $0x938] sm:$0xff]
      %v721 = vld [vmem:[%s1 + $0x940] sm:$0xff]
      %v722 = vld [vmem:[%s1 + $0x948] sm:$0xff]
      %v723 = vld [vmem:[%s1 + $0x950] sm:$0xff]
      %v724 = vld [vmem:[%s1 + $0x958] sm:$0xff]
      %v725 = vld [vmem:[%s1 + $0x960] sm:$0xff]
      %v726 = vld [vmem:[%s1 + $0x968] sm:$0xff]
      %v727 = vld [vmem:[%s1 + $0x970] sm:$0xff]
      %v728 = vld [vmem:[%s1 + $0x978] sm:$0xff]
      %v729 = vld [vmem:[%s1 + $0x980] sm:$0xff]
      %v730 = vld [vmem:[%s1 + $0x988] sm:$0xff]
      %v731 = vld [vmem:[%s1 + $0x990] sm:$0xff]
      %v732 = vld [vmem:[%s1 + $0x998] sm:$0xff]
      %v733 = vld [vmem:[%s1 + $0x9a0] sm:$0xff]
      %v734 = vld [vmem:[%s1 + $0x9a8] sm:$0xff]
      %v735 = vld [vmem:[%s1 + $0x9b0] sm:$0xff]
      %v736 = vld [vmem:[%s1 + $0x9b8] sm:$0xff]
      %v737 = vld [vmem:[%s1 + $0x9c0] sm:$0xff]
      %v738 = vld [vmem:[%s1 + $0x9c8] sm:$0xff]
      %v739 = vld [vmem:[%s1 + $0x9d0] sm:$0xff]
      %v740 = vld [vmem:[%s1 + $0x9d8] sm:$0xff]
      %v741 = vld [vmem:[%s1 + $0x9e0] sm:$0xff]
      %v742 = vld [vmem:[%s1 + $0x9e8] sm:$0xff]
      %v743 = vld [vmem:[%s1 + $0x9f0] sm:$0xff]
      %v744 = vld [vmem:[%s1 + $0x9f8] sm:$0xff]
      %v745 = vld [vmem:[%s1 + $0xa00] sm:$0xff]
      %v746 = vld [vmem:[%s1 + $0xa08] sm:$0xff]
      %v747 = vld [vmem:[%s1 + $0xa10] sm:$0xff]
      %v748 = vld [vmem:[%s1 + $0xa18] sm:$0xff]
      %v749 = vld [vmem:[%s1 + $0xa20] sm:$0xff]
      %v750 = vld [vmem:[%s1 + $0xa28] sm:$0xff]
      %v751 = vld [vmem:[%s1 + $0xa30] sm:$0xff]
      %v752 = vld [vmem:[%s1 + $0xa38] sm:$0xff]
      %v753 = vld [vmem:[%s1 + $0xa40] sm:$0xff]
      %v754 = vld [vmem:[%s1 + $0xa48] sm:$0xff]
      %v755 = vld [vmem:[%s1 + $0xa50] sm:$0xff]
      %v756 = vld [vmem:[%s1 + $0xa58] sm:$0xff]
      %v757 = vld [vmem:[%s1 + $0xa60] sm:$0xff]
      %v758 = vld [vmem:[%s1 + $0xa68] sm:$0xff]
      %v759 = vld [vmem:[%s1 + $0xa70] sm:$0xff]
      %v760 = vld [vmem:[%s1 + $0xa78] sm:$0xff]
      %v761 = vld [vmem:[%s1 + $0xa80] sm:$0xff]
      %v762 = vld [vmem:[%s1 + $0xa88] sm:$0xff]
      %v763 = vld [vmem:[%s1 + $0xa90] sm:$0xff]
      %v764 = vld [vmem:[%s1 + $0xa98] sm:$0xff]
      %v765 = vld [vmem:[%s1 + $0xaa0] sm:$0xff]
      %v766 = vld [vmem:[%s1 + $0xaa8] sm:$0xff]
      %v767 = vld [vmem:[%s1 + $0xab0] sm:$0xff]
      %v768 = vld [vmem:[%s1 + $0xab8] sm:$0xff]
      %v769 = vld [vmem:[%s1 + $0xac0] sm:$0xff]
      %v770 = vld [vmem:[%s1 + $0xac8] sm:$0xff]
      %v771 = vld [vmem:[%s1 + $0xad0] sm:$0xff]
      %v772 = vld [vmem:[%s1 + $0xad8] sm:$0xff]
      %v773 = vpack.c.bf16 %v427, %v425
      %v774 = vpack.c.bf16 %v428, %v426
      %v775 = vpack.c.bf16 %v431, %v429
      %v776 = vpack.c.bf16 %v432, %v430
      %v777 = vpack.c.bf16 %v435, %v433
      %v778 = vpack.c.bf16 %v436, %v434
      %v779 = vpack.c.bf16 %v439, %v437
      %v780 = vpack.c.bf16 %v440, %v438
      %v781 = vpack.c.bf16 %v443, %v441
      %v782 = vpack.c.bf16 %v444, %v442
      %v783 = vpack.c.bf16 %v447, %v445
      %v784 = vpack.c.bf16 %v448, %v446
      %v785 = vpack.c.bf16 %v451, %v449
      %v786 = vpack.c.bf16 %v452, %v450
      %v787 = vpack.c.bf16 %v455, %v453
      %v788 = vpack.c.bf16 %v456, %v454
      %v789 = vpack.c.bf16 %v459, %v457
      %v790 = vpack.c.bf16 %v460, %v458
      %v791 = vpack.c.bf16 %v463, %v461
      %v792 = vpack.c.bf16 %v464, %v462
      %v793 = vpack.c.bf16 %v467, %v465
      %v794 = vpack.c.bf16 %v468, %v466
      %v795 = vpack.c.bf16 %v471, %v469
      %v796 = vpack.c.bf16 %v472, %v470
      %v797 = vpack.c.bf16 %v475, %v473
      %v798 = vpack.c.bf16 %v476, %v474
      %v799 = vpack.c.bf16 %v479, %v477
      %v800 = vpack.c.bf16 %v480, %v478
      %v801 = vpack.c.bf16 %v483, %v481
      %v802 = vpack.c.bf16 %v484, %v482
      %v803 = vpack.c.bf16 %v487, %v485
      %v804 = vpack.c.bf16 %v488, %v486
      %v805 = vpack.c.bf16 %v491, %v489
      %v806 = vpack.c.bf16 %v492, %v490
      %v807 = vpack.c.bf16 %v495, %v493
      %v808 = vpack.c.bf16 %v496, %v494
      %v809 = vpack.c.bf16 %v499, %v497
      %v810 = vpack.c.bf16 %v500, %v498
      %v811 = vpack.c.bf16 %v503, %v501
      %v812 = vpack.c.bf16 %v504, %v502
      %v813 = vpack.c.bf16 %v507, %v505
      %v814 = vpack.c.bf16 %v508, %v506
      %v815 = vpack.c.bf16 %v511, %v509
      %v816 = vpack.c.bf16 %v512, %v510
      %v817 = vpack.c.bf16 %v515, %v513
      %v818 = vpack.c.bf16 %v516, %v514
      %v819 = vpack.c.bf16 %v519, %v517
      %v820 = vpack.c.bf16 %v520, %v518
      %v821 = vpack.c.bf16 %v523, %v521
      %v822 = vpack.c.bf16 %v524, %v522
      %v823 = vpack.c.bf16 %v527, %v525
      %v824 = vpack.c.bf16 %v528, %v526
      %v825 = vpack.c.bf16 %v531, %v529
      %v826 = vpack.c.bf16 %v532, %v530
      %v827 = vpack.c.bf16 %v535, %v533
      %v828 = vpack.c.bf16 %v536, %v534
      %v829 = vpack.c.bf16 %v539, %v537
      %v830 = vpack.c.bf16 %v540, %v538
      %v831 = vpack.c.bf16 %v543, %v541
      %v832 = vpack.c.bf16 %v544, %v542
      %v833 = vpack.c.bf16 %v547, %v545
      %v834 = vpack.c.bf16 %v548, %v546
      %v835 = vpack.c.bf16 %v551, %v549
      %v836 = vpack.c.bf16 %v552, %v550
      %v837 = vpack.c.bf16 %v555, %v553
      %v838 = vpack.c.bf16 %v556, %v554
      %v839 = vpack.c.bf16 %v559, %v557
      %v840 = vpack.c.bf16 %v560, %v558
      %v841 = vpack.c.bf16 %v563, %v561
      %v842 = vpack.c.bf16 %v564, %v562
      %v843 = vpack.c.bf16 %v567, %v565
      %v844 = vpack.c.bf16 %v568, %v566
      %v845 = vpack.c.bf16 %v571, %v569
      %v846 = vpack.c.bf16 %v572, %v570
      %v847 = vpack.c.bf16 %v575, %v573
      %v848 = vpack.c.bf16 %v576, %v574
      %v849 = vpack.c.bf16 %v579, %v577
      %v850 = vpack.c.bf16 %v580, %v578
      %v851 = vpack.c.bf16 %v583, %v581
      %v852 = vpack.c.bf16 %v584, %v582
      %v853 = vpack.c.bf16 %v587, %v585
      %v854 = vpack.c.bf16 %v588, %v586
      %v855 = vpack.c.bf16 %v591, %v589
      %v856 = vpack.c.bf16 %v592, %v590
      %v857 = vpack.c.bf16 %v595, %v593
      %v858 = vpack.c.bf16 %v596, %v594
      %v859 = vpack.c.bf16 %v599, %v597
      %v860 = vpack.c.bf16 %v600, %v598
      %v861 = vpack.c.bf16 %v603, %v601
      %v862 = vpack.c.bf16 %v604, %v602
      %v863 = vpack.c.bf16 %v607, %v605
      %v864 = vpack.c.bf16 %v608, %v606
      %v865 = vpack.c.bf16 %v611, %v609
      %v866 = vpack.c.bf16 %v612, %v610
      %v867 = vpack.c.bf16 %v615, %v613
      %v868 = vpack.c.bf16 %v616, %v614
      %v869 = vpack.c.bf16 %v619, %v617
      %v870 = vpack.c.bf16 %v620, %v618
      %v871 = vpack.c.bf16 %v623, %v621
      %v872 = vpack.c.bf16 %v624, %v622
      %v873 = vpack.c.bf16 %v627, %v625
      %v874 = vpack.c.bf16 %v628, %v626
      %v875 = vpack.c.bf16 %v631, %v629
      %v876 = vpack.c.bf16 %v632, %v630
      %v877 = vpack.c.bf16 %v635, %v633
      %v878 = vpack.c.bf16 %v636, %v634
      %v879 = vpack.c.bf16 %v639, %v637
      %v880 = vpack.c.bf16 %v640, %v638
      %v881 = vpack.c.bf16 %v643, %v641
      %v882 = vpack.c.bf16 %v644, %v642
      %v883 = vpack.c.bf16 %v647, %v645
      %v884 = vpack.c.bf16 %v648, %v646
      %v885 = vpack.c.bf16 %v651, %v649
      %v886 = vpack.c.bf16 %v652, %v650
      %v887 = vpack.c.bf16 %v655, %v653
      %v888 = vpack.c.bf16 %v656, %v654
      %v889 = vpack.c.bf16 %v659, %v657
      %v890 = vpack.c.bf16 %v660, %v658
      %v891 = vpack.c.bf16 %v663, %v661
      %v892 = vpack.c.bf16 %v664, %v662
      %v893 = vpack.c.bf16 %v667, %v665
      %v894 = vpack.c.bf16 %v668, %v666
      %v895 = vpack.c.bf16 %v671, %v669
      %v896 = vpack.c.bf16 %v672, %v670
      %v897 = vpack.c.bf16 %v675, %v673
      %v898 = vpack.c.bf16 %v676, %v674
      %v899 = vpack.c.bf16 %v679, %v677
      %v900 = vpack.c.bf16 %v680, %v678
      %v901 = vpack.c.bf16 %v683, %v681
      %v902 = vpack.c.bf16 %v684, %v682
      %v903 = vpack.c.bf16 %v687, %v685
      %v904 = vpack.c.bf16 %v688, %v686
      %v905 = vpack.c.bf16 %v691, %v689
      %v906 = vpack.c.bf16 %v692, %v690
      %v907 = vpack.c.bf16 %v695, %v693
      %v908 = vpack.c.bf16 %v696, %v694
      %v909 = vpack.c.bf16 %v699, %v697
      %v910 = vpack.c.bf16 %v700, %v698
      %v911 = vpack.c.bf16 %v703, %v701
      %v912 = vpack.c.bf16 %v704, %v702
      %v913 = vpack.c.bf16 %v707, %v705
      %v914 = vpack.c.bf16 %v708, %v706
      %v915 = vpack.c.bf16 %v711, %v709
      %v916 = vpack.c.bf16 %v712, %v710
      %v917 = vpack.c.bf16 %v715, %v713
      %v918 = vpack.c.bf16 %v716, %v714
      %v919 = vpack.c.bf16 %v719, %v717
      %v920 = vpack.c.bf16 %v720, %v718
      %v921 = vpack.c.bf16 %v723, %v721
      %v922 = vpack.c.bf16 %v724, %v722
      %v923 = vpack.c.bf16 %v727, %v725
      %v924 = vpack.c.bf16 %v728, %v726
      %v925 = vpack.c.bf16 %v731, %v729
      %v926 = vpack.c.bf16 %v732, %v730
      %v927 = vpack.c.bf16 %v735, %v733
      %v928 = vpack.c.bf16 %v736, %v734
      %v929 = vpack.c.bf16 %v739, %v737
      %v930 = vpack.c.bf16 %v740, %v738
      %v931 = vpack.c.bf16 %v743, %v741
      %v932 = vpack.c.bf16 %v744, %v742
      %v933 = vpack.c.bf16 %v747, %v745
      %v934 = vpack.c.bf16 %v748, %v746
      %v935 = vpack.c.bf16 %v751, %v749
      %v936 = vpack.c.bf16 %v752, %v750
      %v937 = vpack.c.bf16 %v755, %v753
      %v938 = vpack.c.bf16 %v756, %v754
      %v939 = vpack.c.bf16 %v759, %v757
      %v940 = vpack.c.bf16 %v760, %v758
      %v941 = vpack.c.bf16 %v763, %v761
      %v942 = vpack.c.bf16 %v764, %v762
      %v943 = vpack.c.bf16 %v767, %v765
      %v944 = vpack.c.bf16 %v768, %v766
      %v945 = vpack.c.bf16 %v771, %v769
      %v946 = vpack.c.bf16 %v772, %v770
      %v1121 = vunpack.c.l.b16 %v251
      %v1122 = vunpack.c.h.b16 %v251
      %v1123 = vunpack.c.l.b16 %v252
      %v1124 = vunpack.c.h.b16 %v252
      %v1125 = vunpack.c.l.b16 %v253
      %v1126 = vunpack.c.h.b16 %v253
      %v1127 = vunpack.c.l.b16 %v254
      %v1128 = vunpack.c.h.b16 %v254
      %v1129 = vunpack.c.l.b16 %v255
      %v1130 = vunpack.c.h.b16 %v255
      %v1131 = vunpack.c.l.b16 %v256
      %v1132 = vunpack.c.l.b16 %v257
      %v1133 = vunpack.c.h.b16 %v257
      %v1134 = vunpack.c.l.b16 %v258
      %v1135 = vunpack.c.h.b16 %v258
      %v1136 = vunpack.c.l.b16 %v259
      %v1137 = vunpack.c.h.b16 %v259
      %v1138 = vunpack.c.l.b16 %v260
      %v1139 = vunpack.c.h.b16 %v260
      %v1140 = vunpack.c.l.b16 %v261
      %v1141 = vunpack.c.h.b16 %v261
      %v1142 = vunpack.c.l.b16 %v262
      %v1143 = vunpack.c.l.b16 %v263
      %v1144 = vunpack.c.h.b16 %v263
      %v1145 = vunpack.c.l.b16 %v264
      %v1146 = vunpack.c.h.b16 %v264
      %v1147 = vunpack.c.l.b16 %v265
      %v1148 = vunpack.c.h.b16 %v265
      %v1149 = vunpack.c.l.b16 %v266
      %v1150 = vunpack.c.h.b16 %v266
      %v1151 = vunpack.c.l.b16 %v267
      %v1152 = vunpack.c.h.b16 %v267
      %v1153 = vunpack.c.l.b16 %v268
      %v1154 = vunpack.c.l.b16 %v269
      %v1155 = vunpack.c.h.b16 %v269
      %v1156 = vunpack.c.l.b16 %v270
      %v1157 = vunpack.c.h.b16 %v270
      %v1158 = vunpack.c.l.b16 %v271
      %v1159 = vunpack.c.h.b16 %v271
      %v1160 = vunpack.c.l.b16 %v272
      %v1161 = vunpack.c.h.b16 %v272
      %v1162 = vunpack.c.l.b16 %v273
      %v1163 = vunpack.c.h.b16 %v273
      %v1164 = vunpack.c.l.b16 %v274
      %v1165 = vunpack.c.l.b16 %v275
      %v1166 = vunpack.c.h.b16 %v275
      %v1167 = vunpack.c.l.b16 %v276
      %v1168 = vunpack.c.h.b16 %v276
      %v1169 = vunpack.c.l.b16 %v277
      %v1170 = vunpack.c.h.b16 %v277
      %v1171 = vunpack.c.l.b16 %v278
      %v1172 = vunpack.c.h.b16 %v278
      %v1173 = vunpack.c.l.b16 %v279
      %v1174 = vunpack.c.h.b16 %v279
      %v1175 = vunpack.c.l.b16 %v280
      %v1176 = vunpack.c.l.b16 %v281
      %v1177 = vunpack.c.h.b16 %v281
      %v1178 = vunpack.c.l.b16 %v282
      %v1179 = vunpack.c.h.b16 %v282
      %v1180 = vunpack.c.l.b16 %v283
      %v1181 = vunpack.c.h.b16 %v283
      %v1182 = vunpack.c.l.b16 %v284
      %v1183 = vunpack.c.h.b16 %v284
      %v1184 = vunpack.c.l.b16 %v285
      %v1185 = vunpack.c.h.b16 %v285
      %v1186 = vunpack.c.l.b16 %v286
      %v1187 = vunpack.c.l.b16 %v287
      %v1188 = vunpack.c.h.b16 %v287
      %v1189 = vunpack.c.l.b16 %v288
      %v1190 = vunpack.c.h.b16 %v288
      %v1191 = vunpack.c.l.b16 %v289
      %v1192 = vunpack.c.h.b16 %v289
      %v1193 = vunpack.c.l.b16 %v290
      %v1194 = vunpack.c.h.b16 %v290
      %v1195 = vunpack.c.l.b16 %v291
      %v1196 = vunpack.c.h.b16 %v291
      %v1197 = vunpack.c.l.b16 %v292
      %v1198 = vunpack.c.l.b16 %v293
      %v1199 = vunpack.c.h.b16 %v293
      %v1200 = vunpack.c.l.b16 %v294
      %v1201 = vunpack.c.h.b16 %v294
      %v1202 = vunpack.c.l.b16 %v295
      %v1203 = vunpack.c.h.b16 %v295
      %v1204 = vunpack.c.l.b16 %v296
      %v1205 = vunpack.c.h.b16 %v296
      %v1206 = vunpack.c.l.b16 %v297
      %v1207 = vunpack.c.h.b16 %v297
      %v1208 = vunpack.c.l.b16 %v298
      %v1209 = vunpack.c.l.b16 %v299
      %v1210 = vunpack.c.h.b16 %v299
      %v1211 = vunpack.c.l.b16 %v300
      %v1212 = vunpack.c.h.b16 %v300
      %v1213 = vunpack.c.l.b16 %v301
      %v1214 = vunpack.c.h.b16 %v301
      %v1215 = vunpack.c.l.b16 %v302
      %v1216 = vunpack.c.h.b16 %v302
      %v1217 = vunpack.c.l.b16 %v303
      %v1218 = vunpack.c.h.b16 %v303
      %v1219 = vunpack.c.l.b16 %v304
      %v1220 = vunpack.c.l.b16 %v305
      %v1221 = vunpack.c.h.b16 %v305
      %v1222 = vunpack.c.l.b16 %v306
      %v1223 = vunpack.c.h.b16 %v306
      %v1224 = vunpack.c.l.b16 %v307
      %v1225 = vunpack.c.h.b16 %v307
      %v1226 = vunpack.c.l.b16 %v308
      %v1227 = vunpack.c.h.b16 %v308
      %v1228 = vunpack.c.l.b16 %v309
      %v1229 = vunpack.c.h.b16 %v309
      %v1230 = vunpack.c.l.b16 %v310
      %v1231 = vunpack.c.l.b16 %v311
      %v1232 = vunpack.c.h.b16 %v311
      %v1233 = vunpack.c.l.b16 %v312
      %v1234 = vunpack.c.h.b16 %v312
      %v1235 = vunpack.c.l.b16 %v313
      %v1236 = vunpack.c.h.b16 %v313
      %v1237 = vunpack.c.l.b16 %v314
      %v1238 = vunpack.c.h.b16 %v314
      %v1239 = vunpack.c.l.b16 %v315
      %v1240 = vunpack.c.h.b16 %v315
      %v1241 = vunpack.c.l.b16 %v316
      %v1242 = vunpack.c.l.b16 %v317
      %v1243 = vunpack.c.h.b16 %v317
      %v1244 = vunpack.c.l.b16 %v318
      %v1245 = vunpack.c.h.b16 %v318
      %v1246 = vunpack.c.l.b16 %v319
      %v1247 = vunpack.c.h.b16 %v319
      %v1248 = vunpack.c.l.b16 %v320
      %v1249 = vunpack.c.h.b16 %v320
      %v1250 = vunpack.c.l.b16 %v321
      %v1251 = vunpack.c.h.b16 %v321
      %v1252 = vunpack.c.l.b16 %v322
      %v1253 = vunpack.c.l.b16 %v323
      %v1254 = vunpack.c.h.b16 %v323
      %v1255 = vunpack.c.l.b16 %v324
      %v1256 = vunpack.c.h.b16 %v324
      %v1257 = vunpack.c.l.b16 %v325
      %v1258 = vunpack.c.h.b16 %v325
      %v1259 = vunpack.c.l.b16 %v326
      %v1260 = vunpack.c.h.b16 %v326
      %v1261 = vunpack.c.l.b16 %v327
      %v1262 = vunpack.c.h.b16 %v327
      %v1263 = vunpack.c.l.b16 %v328
      %v1264 = vunpack.c.l.b16 %v329
      %v1265 = vunpack.c.h.b16 %v329
      %v1266 = vunpack.c.l.b16 %v330
      %v1267 = vunpack.c.h.b16 %v330
      %v1268 = vunpack.c.l.b16 %v331
      %v1269 = vunpack.c.h.b16 %v331
      %v1270 = vunpack.c.l.b16 %v332
      %v1271 = vunpack.c.h.b16 %v332
      %v1272 = vunpack.c.l.b16 %v333
      %v1273 = vunpack.c.h.b16 %v333
      %v1274 = vunpack.c.l.b16 %v334
      %v1275 = vunpack.c.l.b16 %v335
      %v1276 = vunpack.c.h.b16 %v335
      %v1277 = vunpack.c.l.b16 %v336
      %v1278 = vunpack.c.h.b16 %v336
      %v1279 = vunpack.c.l.b16 %v337
      %v1280 = vunpack.c.h.b16 %v337
      %v1281 = vunpack.c.l.b16 %v338
      %v1282 = vunpack.c.h.b16 %v338
      %v1283 = vunpack.c.l.b16 %v339
      %v1284 = vunpack.c.h.b16 %v339
      %v1285 = vunpack.c.l.b16 %v340
      %v1286 = vunpack.c.l.b16 %v341
      %v1287 = vunpack.c.h.b16 %v341
      %v1288 = vunpack.c.l.b16 %v342
      %v1289 = vunpack.c.h.b16 %v342
      %v1290 = vunpack.c.l.b16 %v343
      %v1291 = vunpack.c.h.b16 %v343
      %v1292 = vunpack.c.l.b16 %v344
      %v1293 = vunpack.c.h.b16 %v344
      %v1294 = vunpack.c.l.b16 %v345
      %v1295 = vunpack.c.h.b16 %v345
      %v1296 = vunpack.c.l.b16 %v346
      %v1297 = vunpack.c.l.b16 %v347
      %v1298 = vunpack.c.h.b16 %v347
      %v1299 = vunpack.c.l.b16 %v348
      %v1300 = vunpack.c.h.b16 %v348
      %v1301 = vunpack.c.l.b16 %v349
      %v1302 = vunpack.c.h.b16 %v349
      %v1303 = vunpack.c.l.b16 %v350
      %v1304 = vunpack.c.h.b16 %v350
      %v1305 = vunpack.c.l.b16 %v351
      %v1306 = vunpack.c.h.b16 %v351
      %v1307 = vunpack.c.l.b16 %v352
      %v1308 = vunpack.c.l.b16 %v353
      %v1309 = vunpack.c.h.b16 %v353
      %v1310 = vunpack.c.l.b16 %v354
      %v1311 = vunpack.c.h.b16 %v354
      %v1312 = vunpack.c.l.b16 %v355
      %v1313 = vunpack.c.h.b16 %v355
      %v1314 = vunpack.c.l.b16 %v356
      %v1315 = vunpack.c.h.b16 %v356
      %v1316 = vunpack.c.l.b16 %v357
      %v1317 = vunpack.c.h.b16 %v357
      %v1318 = vunpack.c.l.b16 %v358
      %v1319 = vunpack.c.l.b16 %v359
      %v1320 = vunpack.c.h.b16 %v359
      %v1321 = vunpack.c.l.b16 %v360
      %v1322 = vunpack.c.h.b16 %v360
      %v1323 = vunpack.c.l.b16 %v361
      %v1324 = vunpack.c.h.b16 %v361
      %v1325 = vunpack.c.l.b16 %v362
      %v1326 = vunpack.c.h.b16 %v362
      %v1327 = vunpack.c.l.b16 %v363
      %v1328 = vunpack.c.h.b16 %v363
      %v1329 = vunpack.c.l.b16 %v364
      %v1330 = vunpack.c.l.b16 %v365
      %v1331 = vunpack.c.h.b16 %v365
      %v1332 = vunpack.c.l.b16 %v366
      %v1333 = vunpack.c.h.b16 %v366
      %v1334 = vunpack.c.l.b16 %v367
      %v1335 = vunpack.c.h.b16 %v367
      %v1336 = vunpack.c.l.b16 %v368
      %v1337 = vunpack.c.h.b16 %v368
      %v1338 = vunpack.c.l.b16 %v369
      %v1339 = vunpack.c.h.b16 %v369
      %v1340 = vunpack.c.l.b16 %v370
      %v1341 = vunpack.c.l.b16 %v371
      %v1342 = vunpack.c.h.b16 %v371
      %v1343 = vunpack.c.l.b16 %v372
      %v1344 = vunpack.c.h.b16 %v372
      %v1345 = vunpack.c.l.b16 %v373
      %v1346 = vunpack.c.h.b16 %v373
      %v1347 = vunpack.c.l.b16 %v374
      %v1348 = vunpack.c.h.b16 %v374
      %v1349 = vunpack.c.l.b16 %v375
      %v1350 = vunpack.c.h.b16 %v375
      %v1351 = vunpack.c.l.b16 %v376
      %v1352 = vunpack.c.l.b16 %v377
      %v1353 = vunpack.c.h.b16 %v377
      %v1354 = vunpack.c.l.b16 %v378
      %v1355 = vunpack.c.h.b16 %v378
      %v1356 = vunpack.c.l.b16 %v379
      %v1357 = vunpack.c.h.b16 %v379
      %v1358 = vunpack.c.l.b16 %v380
      %v1359 = vunpack.c.h.b16 %v380
      %v1360 = vunpack.c.l.b16 %v381
      %v1361 = vunpack.c.h.b16 %v381
      %v1362 = vunpack.c.l.b16 %v382
      %v1363 = vunpack.c.l.b16 %v383
      %v1364 = vunpack.c.h.b16 %v383
      %v1365 = vunpack.c.l.b16 %v384
      %v1366 = vunpack.c.h.b16 %v384
      %v1367 = vunpack.c.l.b16 %v385
      %v1368 = vunpack.c.h.b16 %v385
      %v1369 = vunpack.c.l.b16 %v386
      %v1370 = vunpack.c.h.b16 %v386
      %v1371 = vunpack.c.l.b16 %v387
      %v1372 = vunpack.c.h.b16 %v387
      %v1373 = vunpack.c.l.b16 %v388
      %v1374 = vunpack.c.l.b16 %v389
      %v1375 = vunpack.c.h.b16 %v389
      %v1376 = vunpack.c.l.b16 %v390
      %v1377 = vunpack.c.h.b16 %v390
      %v1378 = vunpack.c.l.b16 %v391
      %v1379 = vunpack.c.h.b16 %v391
      %v1380 = vunpack.c.l.b16 %v392
      %v1381 = vunpack.c.h.b16 %v392
      %v1382 = vunpack.c.l.b16 %v393
      %v1383 = vunpack.c.h.b16 %v393
      %v1384 = vunpack.c.l.b16 %v394
      %v1385 = vunpack.c.l.b16 %v395
      %v1386 = vunpack.c.h.b16 %v395
      %v1387 = vunpack.c.l.b16 %v396
      %v1388 = vunpack.c.h.b16 %v396
      %v1389 = vunpack.c.l.b16 %v397
      %v1390 = vunpack.c.h.b16 %v397
      %v1391 = vunpack.c.l.b16 %v398
      %v1392 = vunpack.c.h.b16 %v398
      %v1393 = vunpack.c.l.b16 %v399
      %v1394 = vunpack.c.h.b16 %v399
      %v1395 = vunpack.c.l.b16 %v400
      %v1396 = vunpack.c.l.b16 %v401
      %v1397 = vunpack.c.h.b16 %v401
      %v1398 = vunpack.c.l.b16 %v402
      %v1399 = vunpack.c.h.b16 %v402
      %v1400 = vunpack.c.l.b16 %v403
      %v1401 = vunpack.c.h.b16 %v403
      %v1402 = vunpack.c.l.b16 %v404
      %v1403 = vunpack.c.h.b16 %v404
      %v1404 = vunpack.c.l.b16 %v405
      %v1405 = vunpack.c.h.b16 %v405
      %v1406 = vunpack.c.l.b16 %v406
      %v1407 = vunpack.c.l.b16 %v407
      %v1408 = vunpack.c.h.b16 %v407
      %v1409 = vunpack.c.l.b16 %v408
      %v1410 = vunpack.c.h.b16 %v408
      %v1411 = vunpack.c.l.b16 %v409
      %v1412 = vunpack.c.h.b16 %v409
      %v1413 = vunpack.c.l.b16 %v410
      %v1414 = vunpack.c.h.b16 %v410
      %v1415 = vunpack.c.l.b16 %v411
      %v1416 = vunpack.c.h.b16 %v411
      %v1417 = vunpack.c.l.b16 %v412
      %v1418 = vunpack.c.l.b16 %v413
      %v1419 = vunpack.c.h.b16 %v413
      %v1420 = vunpack.c.l.b16 %v414
      %v1421 = vunpack.c.h.b16 %v414
      %v1422 = vunpack.c.l.b16 %v415
      %v1423 = vunpack.c.h.b16 %v415
      %v1424 = vunpack.c.l.b16 %v416
      %v1425 = vunpack.c.h.b16 %v416
      %v1426 = vunpack.c.l.b16 %v417
      %v1427 = vunpack.c.h.b16 %v417
      %v1428 = vunpack.c.l.b16 %v418
      %v1429 = vunpack.c.l.b16 %v419
      %v1430 = vunpack.c.h.b16 %v419
      %v1431 = vunpack.c.l.b16 %v420
      %v1432 = vunpack.c.h.b16 %v420
      %v1433 = vunpack.c.l.b16 %v421
      %v1434 = vunpack.c.h.b16 %v421
      %v1435 = vunpack.c.l.b16 %v422
      %v1436 = vunpack.c.h.b16 %v422
      %v1437 = vunpack.c.l.b16 %v423
      %v1438 = vunpack.c.h.b16 %v423
      %v1439 = vunpack.c.l.b16 %v424
      %v1440 = vpack.c.b16 %v1132, %v1121
      %v1441 = vpack.c.b16 %v1133, %v1122
      %v1442 = vpack.c.b16 %v1134, %v1123
      %v1443 = vpack.c.b16 %v1135, %v1124
      %v1444 = vpack.c.b16 %v1136, %v1125
      %v1445 = vpack.c.b16 %v1137, %v1126
      %v1446 = vpack.c.b16 %v1138, %v1127
      %v1447 = vpack.c.b16 %v1139, %v1128
      %v1448 = vpack.c.b16 %v1140, %v1129
      %v1449 = vpack.c.b16 %v1141, %v1130
      %v1450 = vpack.c.b16 %v1142, %v1131
      %v1451 = vpack.c.b16 %v1154, %v1143
      %v1452 = vpack.c.b16 %v1155, %v1144
      %v1453 = vpack.c.b16 %v1156, %v1145
      %v1454 = vpack.c.b16 %v1157, %v1146
      %v1455 = vpack.c.b16 %v1158, %v1147
      %v1456 = vpack.c.b16 %v1159, %v1148
      %v1457 = vpack.c.b16 %v1160, %v1149
      %v1458 = vpack.c.b16 %v1161, %v1150
      %v1459 = vpack.c.b16 %v1162, %v1151
      %v1460 = vpack.c.b16 %v1163, %v1152
      %v1461 = vpack.c.b16 %v1164, %v1153
      %v1462 = vpack.c.b16 %v1176, %v1165
      %v1463 = vpack.c.b16 %v1177, %v1166
      %v1464 = vpack.c.b16 %v1178, %v1167
      %v1465 = vpack.c.b16 %v1179, %v1168
      %v1466 = vpack.c.b16 %v1180, %v1169
      %v1467 = vpack.c.b16 %v1181, %v1170
      %v1468 = vpack.c.b16 %v1182, %v1171
      %v1469 = vpack.c.b16 %v1183, %v1172
      %v1470 = vpack.c.b16 %v1184, %v1173
      %v1471 = vpack.c.b16 %v1185, %v1174
      %v1472 = vpack.c.b16 %v1186, %v1175
      %v1473 = vpack.c.b16 %v1198, %v1187
      %v1474 = vpack.c.b16 %v1199, %v1188
      %v1475 = vpack.c.b16 %v1200, %v1189
      %v1476 = vpack.c.b16 %v1201, %v1190
      %v1477 = vpack.c.b16 %v1202, %v1191
      %v1478 = vpack.c.b16 %v1203, %v1192
      %v1479 = vpack.c.b16 %v1204, %v1193
      %v1480 = vpack.c.b16 %v1205, %v1194
      %v1481 = vpack.c.b16 %v1206, %v1195
      %v1482 = vpack.c.b16 %v1207, %v1196
      %v1483 = vpack.c.b16 %v1208, %v1197
      %v1484 = vpack.c.b16 %v1220, %v1209
      %v1485 = vpack.c.b16 %v1221, %v1210
      %v1486 = vpack.c.b16 %v1222, %v1211
      %v1487 = vpack.c.b16 %v1223, %v1212
      %v1488 = vpack.c.b16 %v1224, %v1213
      %v1489 = vpack.c.b16 %v1225, %v1214
      %v1490 = vpack.c.b16 %v1226, %v1215
      %v1491 = vpack.c.b16 %v1227, %v1216
      %v1492 = vpack.c.b16 %v1228, %v1217
      %v1493 = vpack.c.b16 %v1229, %v1218
      %v1494 = vpack.c.b16 %v1230, %v1219
      %v1495 = vpack.c.b16 %v1242, %v1231
      %v1496 = vpack.c.b16 %v1243, %v1232
      %v1497 = vpack.c.b16 %v1244, %v1233
      %v1498 = vpack.c.b16 %v1245, %v1234
      %v1499 = vpack.c.b16 %v1246, %v1235
      %v1500 = vpack.c.b16 %v1247, %v1236
      %v1501 = vpack.c.b16 %v1248, %v1237
      %v1502 = vpack.c.b16 %v1249, %v1238
      %v1503 = vpack.c.b16 %v1250, %v1239
      %v1504 = vpack.c.b16 %v1251, %v1240
      %v1505 = vpack.c.b16 %v1252, %v1241
      %v1506 = vpack.c.b16 %v1264, %v1253
      %v1507 = vpack.c.b16 %v1265, %v1254
      %v1508 = vpack.c.b16 %v1266, %v1255
      %v1509 = vpack.c.b16 %v1267, %v1256
      %v1510 = vpack.c.b16 %v1268, %v1257
      %v1511 = vpack.c.b16 %v1269, %v1258
      %v1512 = vpack.c.b16 %v1270, %v1259
      %v1513 = vpack.c.b16 %v1271, %v1260
      %v1514 = vpack.c.b16 %v1272, %v1261
      %v1515 = vpack.c.b16 %v1273, %v1262
      %v1516 = vpack.c.b16 %v1274, %v1263
      %v1517 = vpack.c.b16 %v1286, %v1275
      %v1518 = vpack.c.b16 %v1287, %v1276
      %v1519 = vpack.c.b16 %v1288, %v1277
      %v1520 = vpack.c.b16 %v1289, %v1278
      %v1521 = vpack.c.b16 %v1290, %v1279
      %v1522 = vpack.c.b16 %v1291, %v1280
      %v1523 = vpack.c.b16 %v1292, %v1281
      %v1524 = vpack.c.b16 %v1293, %v1282
      %v1525 = vpack.c.b16 %v1294, %v1283
      %v1526 = vpack.c.b16 %v1295, %v1284
      %v1527 = vpack.c.b16 %v1296, %v1285
      %v1528 = vpack.c.b16 %v1308, %v1297
      %v1529 = vpack.c.b16 %v1309, %v1298
      %v1530 = vpack.c.b16 %v1310, %v1299
      %v1531 = vpack.c.b16 %v1311, %v1300
      %v1532 = vpack.c.b16 %v1312, %v1301
      %v1533 = vpack.c.b16 %v1313, %v1302
      %v1534 = vpack.c.b16 %v1314, %v1303
      %v1535 = vpack.c.b16 %v1315, %v1304
      %v1536 = vpack.c.b16 %v1316, %v1305
      %v1537 = vpack.c.b16 %v1317, %v1306
      %v1538 = vpack.c.b16 %v1318, %v1307
      %v1539 = vpack.c.b16 %v1330, %v1319
      %v1540 = vpack.c.b16 %v1331, %v1320
      %v1541 = vpack.c.b16 %v1332, %v1321
      %v1542 = vpack.c.b16 %v1333, %v1322
      %v1543 = vpack.c.b16 %v1334, %v1323
      %v1544 = vpack.c.b16 %v1335, %v1324
      %v1545 = vpack.c.b16 %v1336, %v1325
      %v1546 = vpack.c.b16 %v1337, %v1326
      %v1547 = vpack.c.b16 %v1338, %v1327
      %v1548 = vpack.c.b16 %v1339, %v1328
      %v1549 = vpack.c.b16 %v1340, %v1329
      %v1550 = vpack.c.b16 %v1352, %v1341
      %v1551 = vpack.c.b16 %v1353, %v1342
      %v1552 = vpack.c.b16 %v1354, %v1343
      %v1553 = vpack.c.b16 %v1355, %v1344
      %v1554 = vpack.c.b16 %v1356, %v1345
      %v1555 = vpack.c.b16 %v1357, %v1346
      %v1556 = vpack.c.b16 %v1358, %v1347
      %v1557 = vpack.c.b16 %v1359, %v1348
      %v1558 = vpack.c.b16 %v1360, %v1349
      %v1559 = vpack.c.b16 %v1361, %v1350
      %v1560 = vpack.c.b16 %v1362, %v1351
      %v1561 = vpack.c.b16 %v1374, %v1363
      %v1562 = vpack.c.b16 %v1375, %v1364
      %v1563 = vpack.c.b16 %v1376, %v1365
      %v1564 = vpack.c.b16 %v1377, %v1366
      %v1565 = vpack.c.b16 %v1378, %v1367
      %v1566 = vpack.c.b16 %v1379, %v1368
      %v1567 = vpack.c.b16 %v1380, %v1369
      %v1568 = vpack.c.b16 %v1381, %v1370
      %v1569 = vpack.c.b16 %v1382, %v1371
      %v1570 = vpack.c.b16 %v1383, %v1372
      %v1571 = vpack.c.b16 %v1384, %v1373
      %v1572 = vpack.c.b16 %v1396, %v1385
      %v1573 = vpack.c.b16 %v1397, %v1386
      %v1574 = vpack.c.b16 %v1398, %v1387
      %v1575 = vpack.c.b16 %v1399, %v1388
      %v1576 = vpack.c.b16 %v1400, %v1389
      %v1577 = vpack.c.b16 %v1401, %v1390
      %v1578 = vpack.c.b16 %v1402, %v1391
      %v1579 = vpack.c.b16 %v1403, %v1392
      %v1580 = vpack.c.b16 %v1404, %v1393
      %v1581 = vpack.c.b16 %v1405, %v1394
      %v1582 = vpack.c.b16 %v1406, %v1395
      %v1583 = vpack.c.b16 %v1418, %v1407
      %v1584 = vpack.c.b16 %v1419, %v1408
      %v1585 = vpack.c.b16 %v1420, %v1409
      %v1586 = vpack.c.b16 %v1421, %v1410
      %v1587 = vpack.c.b16 %v1422, %v1411
      %v1588 = vpack.c.b16 %v1423, %v1412
      %v1589 = vpack.c.b16 %v1424, %v1413
      %v1590 = vpack.c.b16 %v1425, %v1414
      %v1591 = vpack.c.b16 %v1426, %v1415
      %v1592 = vpack.c.b16 %v1427, %v1416
      %v1593 = vpack.c.b16 %v1428, %v1417
      %v1594 = vpack.c.b16 %v1429, %v1429
      %v1595 = vpack.c.b16 %v1430, %v1430
      %v1596 = vpack.c.b16 %v1431, %v1431
      %v1597 = vpack.c.b16 %v1432, %v1432
      %v1598 = vpack.c.b16 %v1433, %v1433
      %v1599 = vpack.c.b16 %v1434, %v1434
      %v1600 = vpack.c.b16 %v1435, %v1435
      %v1601 = vpack.c.b16 %v1436, %v1436
      %v1602 = vpack.c.b16 %v1437, %v1437
      %v1603 = vpack.c.b16 %v1438, %v1438
      %v1604 = vpack.c.b16 %v1439, %v1439
      %vm1755 = vcmask 916480
      %v1757 = vsel %vm1755, %v1450, 0
      %v1760 = vsel %vm1755, %v1461, 0
      %v1763 = vsel %vm1755, %v1472, 0
      %v1766 = vsel %vm1755, %v1483, 0
      %v1769 = vsel %vm1755, %v1494, 0
      %v1772 = vsel %vm1755, %v1505, 0
      %v1775 = vsel %vm1755, %v1516, 0
      %v1778 = vsel %vm1755, %v1527, 0
      %v1781 = vsel %vm1755, %v1538, 0
      %v1784 = vsel %vm1755, %v1549, 0
      %v1787 = vsel %vm1755, %v1560, 0
      %v1790 = vsel %vm1755, %v1571, 0
      %v1793 = vsel %vm1755, %v1582, 0
      %v1796 = vsel %vm1755, %v1593, 0
      %v1799 = vsel %vm1755, %v1604, 0
      %1801 = vmatprep.subr.bf16.mxu0 %v774
      %1802 = vmatpush1.bf16.msra.mxu0 %v773
      %1803 = vmatprep.subr.bf16.mxu0 %v776
      %1804 = vmatpush1.bf16.msra.mxu0 %v775
      %1805 = vmatprep.subr.bf16.mxu0 %v778
      %1806 = vmatpush1.bf16.msra.mxu0 %v777
      %1807 = vmatprep.subr.bf16.mxu0 %v780
      %1808 = vmatpush1.bf16.msra.mxu0 %v779
      %1809 = vmatprep.subr.bf16.mxu0 %v782
      %1810 = vmatpush1.bf16.msra.mxu0 %v781
      %1811 = vmatprep.subr.bf16.mxu0 %v784
      %1812 = vmatpush1.bf16.msra.mxu0 %v783
      %1813 = vmatprep.subr.bf16.mxu0 %v786
      %1814 = vmatpush1.bf16.msra.mxu0 %v785
      %1815 = vmatprep.subr.bf16.mxu0 %v788
      %1816 = vmatpush1.bf16.msra.mxu0 %v787
      %1817 = vmatprep.subr.bf16.mxu0 %v790
      %1818 = vmatpush1.bf16.msra.mxu0 %v789
      %1819 = vmatprep.subr.bf16.mxu0 %v792
      %1820 = vmatpush1.bf16.msra.mxu0 %v791
      %1821 = vmatprep.subr.bf16.mxu0 %v794
      %1822 = vmatpush1.bf16.msra.mxu0 %v793
      %1823 = vmatprep.subr.bf16.mxu0 %v796
      %1824 = vmatpush1.bf16.msra.mxu0 %v795
      %1825 = vmatprep.subr.bf16.mxu0 %v798
      %1826 = vmatpush1.bf16.msra.mxu0 %v797
      %1827 = vmatprep.subr.bf16.mxu0 %v800
      %1828 = vmatpush1.bf16.msra.mxu0 %v799
      %1829 = vmatprep.subr.bf16.mxu0 %v802
      %1830 = vmatpush1.bf16.msra.mxu0 %v801
      %1831 = vmatprep.subr.bf16.mxu0 %v804
      %1832 = vmatpush1.bf16.msra.mxu0 %v803
      %1833 = vmatprep.mubr.bf16.mxu0 %v1441
      %1834 = vmatmul.mubr.bf16.gmra.mrb[0].mxu0 %v1440
      %v1835 = vpop.f32.mrb[0].mxu0
      %v1836 = vadd.f32 0.0, %v1835
      %v1837 = vpop.f32.mrb[0].mxu0
      %v1838 = vadd.f32 0.0, %v1837
      %v1839 = vpop.f32.mrb[0].mxu0
      %v1840 = vadd.f32 0.0, %v1839
      %v1841 = vpop.f32.mrb[0].mxu0
      %v1842 = vadd.f32 0.0, %v1841
      %1843 = vmatprep.mubr.bf16.mxu0 %v1452
      %1844 = vmatmul.mubr.bf16.gmra.mrb[0].mxu0 %v1451
      %v1845 = vpop.f32.mrb[0].mxu0
      %v1846 = vadd.f32 0.0, %v1845
      %v1847 = vpop.f32.mrb[0].mxu0
      %v1848 = vadd.f32 0.0, %v1847
      %v1849 = vpop.f32.mrb[0].mxu0
      %v1850 = vadd.f32 0.0, %v1849
      %v1851 = vpop.f32.mrb[0].mxu0
      %v1852 = vadd.f32 0.0, %v1851
      %1853 = vmatprep.mubr.bf16.mxu0 %v1463
      %1854 = vmatmul.mubr.bf16.gmra.mrb[0].mxu0 %v1462
      %v1855 = vpop.f32.mrb[0].mxu0
      %v1856 = vadd.f32 0.0, %v1855
      %v1857 = vpop.f32.mrb[0].mxu0
      %v1858 = vadd.f32 0.0, %v1857
      %v1859 = vpop.f32.mrb[0].mxu0
      %v1860 = vadd.f32 0.0, %v1859
      %v1861 = vpop.f32.mrb[0].mxu0
      %v1862 = vadd.f32 0.0, %v1861
      %1863 = vmatprep.mubr.bf16.mxu0 %v1474
      %1864 = vmatmul.mubr.bf16.gmra.mrb[0].mxu0 %v1473
      %v1865 = vpop.f32.mrb[0].mxu0
      %v1866 = vadd.f32 0.0, %v1865
      %v1867 = vpop.f32.mrb[0].mxu0
      %v1868 = vadd.f32 0.0, %v1867
      %v1869 = vpop.f32.mrb[0].mxu0
      %v1870 = vadd.f32 0.0, %v1869
      %v1871 = vpop.f32.mrb[0].mxu0
      %v1872 = vadd.f32 0.0, %v1871
      %1873 = vmatprep.mubr.bf16.mxu0 %v1485
      %1874 = vmatmul.mubr.bf16.gmra.mrb[0].mxu0 %v1484
      %v1875 = vpop.f32.mrb[0].mxu0
      %v1876 = vadd.f32 0.0, %v1875
      %v1877 = vpop.f32.mrb[0].mxu0
      %v1878 = vadd.f32 0.0, %v1877
      %v1879 = vpop.f32.mrb[0].mxu0
      %v1880 = vadd.f32 0.0, %v1879
      %v1881 = vpop.f32.mrb[0].mxu0
      %v1882 = vadd.f32 0.0, %v1881
      %1883 = vmatprep.mubr.bf16.mxu0 %v1496
      %1884 = vmatmul.mubr.bf16.gmra.mrb[0].mxu0 %v1495
      %v1885 = vpop.f32.mrb[0].mxu0
      %v1886 = vadd.f32 0.0, %v1885
      %v1887 = vpop.f32.mrb[0].mxu0
      %v1888 = vadd.f32 0.0, %v1887
      %v1889 = vpop.f32.mrb[0].mxu0
      %v1890 = vadd.f32 0.0, %v1889
      %v1891 = vpop.f32.mrb[0].mxu0
      %v1892 = vadd.f32 0.0, %v1891
      %1893 = vmatprep.mubr.bf16.mxu0 %v1507
      %1894 = vmatmul.mubr.bf16.gmra.mrb[0].mxu0 %v1506
      %v1895 = vpop.f32.mrb[0].mxu0
      %v1896 = vadd.f32 0.0, %v1895
      %v1897 = vpop.f32.mrb[0].mxu0
      %v1898 = vadd.f32 0.0, %v1897
      %v1899 = vpop.f32.mrb[0].mxu0
      %v1900 = vadd.f32 0.0, %v1899
      %v1901 = vpop.f32.mrb[0].mxu0
      %v1902 = vadd.f32 0.0, %v1901
      %1903 = vmatprep.mubr.bf16.mxu0 %v1518
      %1904 = vmatmul.mubr.bf16.gmra.mrb[0].mxu0 %v1517
      %v1905 = vpop.f32.mrb[0].mxu0
      %v1906 = vadd.f32 0.0, %v1905
      %v1907 = vpop.f32.mrb[0].mxu0
      %v1908 = vadd.f32 0.0, %v1907
      %v1909 = vpop.f32.mrb[0].mxu0
      %v1910 = vadd.f32 0.0, %v1909
      %v1911 = vpop.f32.mrb[0].mxu0
      %v1912 = vadd.f32 0.0, %v1911
      %1913 = vmatprep.mubr.bf16.mxu0 %v1529
      %1914 = vmatmul.mubr.bf16.gmra.mrb[0].mxu0 %v1528
      %v1915 = vpop.f32.mrb[0].mxu0
      %v1916 = vadd.f32 0.0, %v1915
      %v1917 = vpop.f32.mrb[0].mxu0
      %v1918 = vadd.f32 0.0, %v1917
      %v1919 = vpop.f32.mrb[0].mxu0
      %v1920 = vadd.f32 0.0, %v1919
      %v1921 = vpop.f32.mrb[0].mxu0
      %v1922 = vadd.f32 0.0, %v1921
      %1923 = vmatprep.mubr.bf16.mxu0 %v1540
      %1924 = vmatmul.mubr.bf16.gmra.mrb[0].mxu0 %v1539
      %v1925 = vpop.f32.mrb[0].mxu0
      %v1926 = vadd.f32 0.0, %v1925
      %v1927 = vpop.f32.mrb[0].mxu0
      %v1928 = vadd.f32 0.0, %v1927
      %v1929 = vpop.f32.mrb[0].mxu0
      %v1930 = vadd.f32 0.0, %v1929
      %v1931 = vpop.f32.mrb[0].mxu0
      %v1932 = vadd.f32 0.0, %v1931
      %1933 = vmatprep.mubr.bf16.mxu0 %v1551
      %1934 = vmatmul.mubr.bf16.gmra.mrb[0].mxu0 %v1550
      %v1935 = vpop.f32.mrb[0].mxu0
      %v1936 = vadd.f32 0.0, %v1935
      %v1937 = vpop.f32.mrb[0].mxu0
      %v1938 = vadd.f32 0.0, %v1937
      %v1939 = vpop.f32.mrb[0].mxu0
      %v1940 = vadd.f32 0.0, %v1939
      %v1941 = vpop.f32.mrb[0].mxu0
      %v1942 = vadd.f32 0.0, %v1941
      %1943 = vmatprep.mubr.bf16.mxu0 %v1562
      %1944 = vmatmul.mubr.bf16.gmra.mrb[0].mxu0 %v1561
      %v1945 = vpop.f32.mrb[0].mxu0
      %v1946 = vadd.f32 0.0, %v1945
      %v1947 = vpop.f32.mrb[0].mxu0
      %v1948 = vadd.f32 0.0, %v1947
      %v1949 = vpop.f32.mrb[0].mxu0
      %v1950 = vadd.f32 0.0, %v1949
      %v1951 = vpop.f32.mrb[0].mxu0
      %v1952 = vadd.f32 0.0, %v1951
      %1953 = vmatprep.mubr.bf16.mxu0 %v1573
      %1954 = vmatmul.mubr.bf16.gmra.mrb[0].mxu0 %v1572
      %v1955 = vpop.f32.mrb[0].mxu0
      %v1956 = vadd.f32 0.0, %v1955
      %v1957 = vpop.f32.mrb[0].mxu0
      %v1958 = vadd.f32 0.0, %v1957
      %v1959 = vpop.f32.mrb[0].mxu0
      %v1960 = vadd.f32 0.0, %v1959
      %v1961 = vpop.f32.mrb[0].mxu0
      %v1962 = vadd.f32 0.0, %v1961
      %1963 = vmatprep.mubr.bf16.mxu0 %v1584
      %1964 = vmatmul.mubr.bf16.gmra.mrb[0].mxu0 %v1583
      %v1965 = vpop.f32.mrb[0].mxu0
      %v1966 = vadd.f32 0.0, %v1965
      %v1967 = vpop.f32.mrb[0].mxu0
      %v1968 = vadd.f32 0.0, %v1967
      %v1969 = vpop.f32.mrb[0].mxu0
      %v1970 = vadd.f32 0.0, %v1969
      %v1971 = vpop.f32.mrb[0].mxu0
      %v1972 = vadd.f32 0.0, %v1971
      %1973 = vmatprep.mubr.bf16.mxu0 %v1595
      %1974 = vmatmul.mubr.bf16.gmra.mrb[0].mxu0 %v1594
      %v1975 = vpop.f32.mrb[0].mxu0
      %v1976 = vadd.f32 0.0, %v1975
      %v1977 = vpop.f32.mrb[0].mxu0
      %v1978 = vadd.f32 0.0, %v1977
      %v1979 = vpop.f32.mrb[0].mxu0
      %v1980 = vpop.f32.mrb[0].mxu0
      %1981 = vdwg.mxu0
      %1982 = vmatprep.subr.bf16.mxu0 %v806
      %1983 = vmatpush1.bf16.msra.mxu0 %v805
      %1984 = vmatprep.subr.bf16.mxu0 %v808
      %1985 = vmatpush1.bf16.msra.mxu0 %v807
      %1986 = vmatprep.subr.bf16.mxu0 %v810
      %1987 = vmatpush1.bf16.msra.mxu0 %v809
      %1988 = vmatprep.subr.bf16.mxu0 %v812
      %1989 = vmatpush1.bf16.msra.mxu0 %v811
      %1990 = vmatprep.subr.bf16.mxu0 %v814
      %1991 = vmatpush1.bf16.msra.mxu0 %v813
      %1992 = vmatprep.subr.bf16.mxu0 %v816
      %1993 = vmatpush1.bf16.msra.mxu0 %v815
      %1994 = vmatprep.subr.bf16.mxu0 %v818
      %1995 = vmatpush1.bf16.msra.mxu0 %v817
      %1996 = vmatprep.subr.bf16.mxu0 %v820
      %1997 = vmatpush1.bf16.msra.mxu0 %v819
      %1998 = vmatprep.subr.bf16.mxu0 %v822
      %1999 = vmatpush1.bf16.msra.mxu0 %v821
      %2000 = vmatprep.subr.bf16.mxu0 %v824
      %2001 = vmatpush1.bf16.msra.mxu0 %v823
      %2002 = vmatprep.subr.bf16.mxu0 %v826
      %2003 = vmatpush1.bf16.msra.mxu0 %v825
      %2004 = vmatprep.subr.bf16.mxu0 %v828
      %2005 = vmatpush1.bf16.msra.mxu0 %v827
      %2006 = vmatprep.subr.bf16.mxu0 %v830
      %2007 = vmatpush1.bf16.msra.mxu0 %v829
      %2008 = vmatprep.subr.bf16.mxu0 %v832
      %2009 = vmatpush1.bf16.msra.mxu0 %v831
      %2010 = vmatprep.subr.bf16.mxu0 %v834
      %2011 = vmatpush1.bf16.msra.mxu0 %v833
      %2012 = vmatprep.subr.bf16.mxu0 %v836
      %2013 = vmatpush1.bf16.msra.mxu0 %v835
      %2014 = vmatprep.mubr.bf16.mxu0 %v1443
      %2015 = vmatmul.mubr.bf16.gmra.mrb[0].mxu0 %v1442
      %v2016 = vpop.f32.mrb[0].mxu0
      %v2017 = vadd.f32 %v1836, %v2016
      %v2018 = vpop.f32.mrb[0].mxu0
      %v2019 = vadd.f32 %v1838, %v2018
      %v2020 = vpop.f32.mrb[0].mxu0
      %v2021 = vadd.f32 %v1840, %v2020
      %v2022 = vpop.f32.mrb[0].mxu0
      %v2023 = vadd.f32 %v1842, %v2022
      %2024 = vmatprep.mubr.bf16.mxu0 %v1454
      %2025 = vmatmul.mubr.bf16.gmra.mrb[0].mxu0 %v1453
      %v2026 = vpop.f32.mrb[0].mxu0
      %v2027 = vadd.f32 %v1846, %v2026
      %v2028 = vpop.f32.mrb[0].mxu0
      %v2029 = vadd.f32 %v1848, %v2028
      %v2030 = vpop.f32.mrb[0].mxu0
      %v2031 = vadd.f32 %v1850, %v2030
      %v2032 = vpop.f32.mrb[0].mxu0
      %v2033 = vadd.f32 %v1852, %v2032
      %2034 = vmatprep.mubr.bf16.mxu0 %v1465
      %2035 = vmatmul.mubr.bf16.gmra.mrb[0].mxu0 %v1464
      %v2036 = vpop.f32.mrb[0].mxu0
      %v2037 = vadd.f32 %v1856, %v2036
      %v2038 = vpop.f32.mrb[0].mxu0
      %v2039 = vadd.f32 %v1858, %v2038
      %v2040 = vpop.f32.mrb[0].mxu0
      %v2041 = vadd.f32 %v1860, %v2040
      %v2042 = vpop.f32.mrb[0].mxu0
      %v2043 = vadd.f32 %v1862, %v2042
      %2044 = vmatprep.mubr.bf16.mxu0 %v1476
      %2045 = vmatmul.mubr.bf16.gmra.mrb[0].mxu0 %v1475
      %v2046 = vpop.f32.mrb[0].mxu0
      %v2047 = vadd.f32 %v1866, %v2046
      %v2048 = vpop.f32.mrb[0].mxu0
      %v2049 = vadd.f32 %v1868, %v2048
      %v2050 = vpop.f32.mrb[0].mxu0
      %v2051 = vadd.f32 %v1870, %v2050
      %v2052 = vpop.f32.mrb[0].mxu0
      %v2053 = vadd.f32 %v1872, %v2052
      %2054 = vmatprep.mubr.bf16.mxu0 %v1487
      %2055 = vmatmul.mubr.bf16.gmra.mrb[0].mxu0 %v1486
      %v2056 = vpop.f32.mrb[0].mxu0
      %v2057 = vadd.f32 %v1876, %v2056
      %v2058 = vpop.f32.mrb[0].mxu0
      %v2059 = vadd.f32 %v1878, %v2058
      %v2060 = vpop.f32.mrb[0].mxu0
      %v2061 = vadd.f32 %v1880, %v2060
      %v2062 = vpop.f32.mrb[0].mxu0
      %v2063 = vadd.f32 %v1882, %v2062
      %2064 = vmatprep.mubr.bf16.mxu0 %v1498
      %2065 = vmatmul.mubr.bf16.gmra.mrb[0].mxu0 %v1497
      %v2066 = vpop.f32.mrb[0].mxu0
      %v2067 = vadd.f32 %v1886, %v2066
      %v2068 = vpop.f32.mrb[0].mxu0
      %v2069 = vadd.f32 %v1888, %v2068
      %v2070 = vpop.f32.mrb[0].mxu0
      %v2071 = vadd.f32 %v1890, %v2070
      %v2072 = vpop.f32.mrb[0].mxu0
      %v2073 = vadd.f32 %v1892, %v2072
      %2074 = vmatprep.mubr.bf16.mxu0 %v1509
      %2075 = vmatmul.mubr.bf16.gmra.mrb[0].mxu0 %v1508
      %v2076 = vpop.f32.mrb[0].mxu0
      %v2077 = vadd.f32 %v1896, %v2076
      %v2078 = vpop.f32.mrb[0].mxu0
      %v2079 = vadd.f32 %v1898, %v2078
      %v2080 = vpop.f32.mrb[0].mxu0
      %v2081 = vadd.f32 %v1900, %v2080
      %v2082 = vpop.f32.mrb[0].mxu0
      %v2083 = vadd.f32 %v1902, %v2082
      %2084 = vmatprep.mubr.bf16.mxu0 %v1520
      %2085 = vmatmul.mubr.bf16.gmra.mrb[0].mxu0 %v1519
      %v2086 = vpop.f32.mrb[0].mxu0
      %v2087 = vadd.f32 %v1906, %v2086
      %v2088 = vpop.f32.mrb[0].mxu0
      %v2089 = vadd.f32 %v1908, %v2088
      %v2090 = vpop.f32.mrb[0].mxu0
      %v2091 = vadd.f32 %v1910, %v2090
      %v2092 = vpop.f32.mrb[0].mxu0
      %v2093 = vadd.f32 %v1912, %v2092
      %2094 = vmatprep.mubr.bf16.mxu0 %v1531
      %2095 = vmatmul.mubr.bf16.gmra.mrb[0].mxu0 %v1530
      %v2096 = vpop.f32.mrb[0].mxu0
      %v2097 = vadd.f32 %v1916, %v2096
      %v2098 = vpop.f32.mrb[0].mxu0
      %v2099 = vadd.f32 %v1918, %v2098
      %v2100 = vpop.f32.mrb[0].mxu0
      %v2101 = vadd.f32 %v1920, %v2100
      %v2102 = vpop.f32.mrb[0].mxu0
      %v2103 = vadd.f32 %v1922, %v2102
      %2104 = vmatprep.mubr.bf16.mxu0 %v1542
      %2105 = vmatmul.mubr.bf16.gmra.mrb[0].mxu0 %v1541
      %v2106 = vpop.f32.mrb[0].mxu0
      %v2107 = vadd.f32 %v1926, %v2106
      %v2108 = vpop.f32.mrb[0].mxu0
      %v2109 = vadd.f32 %v1928, %v2108
      %v2110 = vpop.f32.mrb[0].mxu0
      %v2111 = vadd.f32 %v1930, %v2110
      %v2112 = vpop.f32.mrb[0].mxu0
      %v2113 = vadd.f32 %v1932, %v2112
      %2114 = vmatprep.mubr.bf16.mxu0 %v1553
      %2115 = vmatmul.mubr.bf16.gmra.mrb[0].mxu0 %v1552
      %v2116 = vpop.f32.mrb[0].mxu0
      %v2117 = vadd.f32 %v1936, %v2116
      %v2118 = vpop.f32.mrb[0].mxu0
      %v2119 = vadd.f32 %v1938, %v2118
      %v2120 = vpop.f32.mrb[0].mxu0
      %v2121 = vadd.f32 %v1940, %v2120
      %v2122 = vpop.f32.mrb[0].mxu0
      %v2123 = vadd.f32 %v1942, %v2122
      %2124 = vmatprep.mubr.bf16.mxu0 %v1564
      %2125 = vmatmul.mubr.bf16.gmra.mrb[0].mxu0 %v1563
      %v2126 = vpop.f32.mrb[0].mxu0
      %v2127 = vadd.f32 %v1946, %v2126
      %v2128 = vpop.f32.mrb[0].mxu0
      %v2129 = vadd.f32 %v1948, %v2128
      %v2130 = vpop.f32.mrb[0].mxu0
      %v2131 = vadd.f32 %v1950, %v2130
      %v2132 = vpop.f32.mrb[0].mxu0
      %v2133 = vadd.f32 %v1952, %v2132
      %2134 = vmatprep.mubr.bf16.mxu0 %v1575
      %2135 = vmatmul.mubr.bf16.gmra.mrb[0].mxu0 %v1574
      %v2136 = vpop.f32.mrb[0].mxu0
      %v2137 = vadd.f32 %v1956, %v2136
      %v2138 = vpop.f32.mrb[0].mxu0
      %v2139 = vadd.f32 %v1958, %v2138
      %v2140 = vpop.f32.mrb[0].mxu0
      %v2141 = vadd.f32 %v1960, %v2140
      %v2142 = vpop.f32.mrb[0].mxu0
      %v2143 = vadd.f32 %v1962, %v2142
      %2144 = vmatprep.mubr.bf16.mxu0 %v1586
      %2145 = vmatmul.mubr.bf16.gmra.mrb[0].mxu0 %v1585
      %v2146 = vpop.f32.mrb[0].mxu0
      %v2147 = vadd.f32 %v1966, %v2146
      %v2148 = vpop.f32.mrb[0].mxu0
      %v2149 = vadd.f32 %v1968, %v2148
      %v2150 = vpop.f32.mrb[0].mxu0
      %v2151 = vadd.f32 %v1970, %v2150
      %v2152 = vpop.f32.mrb[0].mxu0
      %v2153 = vadd.f32 %v1972, %v2152
      %2154 = vmatprep.mubr.bf16.mxu0 %v1597
      %2155 = vmatmul.mubr.bf16.gmra.mrb[0].mxu0 %v1596
      %v2156 = vpop.f32.mrb[0].mxu0
      %v2157 = vadd.f32 %v1976, %v2156
      %v2158 = vpop.f32.mrb[0].mxu0
      %v2159 = vadd.f32 %v1978, %v2158
      %v2160 = vpop.f32.mrb[0].mxu0
      %v2161 = vpop.f32.mrb[0].mxu0
      %2162 = vdwg.mxu0
      %2163 = vmatprep.subr.bf16.mxu0 %v838
      %2164 = vmatpush1.bf16.msra.mxu0 %v837
      %2165 = vmatprep.subr.bf16.mxu0 %v840
      %2166 = vmatpush1.bf16.msra.mxu0 %v839
      %2167 = vmatprep.subr.bf16.mxu0 %v842
      %2168 = vmatpush1.bf16.msra.mxu0 %v841
      %2169 = vmatprep.subr.bf16.mxu0 %v844
      %2170 = vmatpush1.bf16.msra.mxu0 %v843
      %2171 = vmatprep.subr.bf16.mxu0 %v846
      %2172 = vmatpush1.bf16.msra.mxu0 %v845
      %2173 = vmatprep.subr.bf16.mxu0 %v848
      %2174 = vmatpush1.bf16.msra.mxu0 %v847
      %2175 = vmatprep.subr.bf16.mxu0 %v850
      %2176 = vmatpush1.bf16.msra.mxu0 %v849
      %2177 = vmatprep.subr.bf16.mxu0 %v852
      %2178 = vmatpush1.bf16.msra.mxu0 %v851
      %2179 = vmatprep.subr.bf16.mxu0 %v854
      %2180 = vmatpush1.bf16.msra.mxu0 %v853
      %2181 = vmatprep.subr.bf16.mxu0 %v856
      %2182 = vmatpush1.bf16.msra.mxu0 %v855
      %2183 = vmatprep.subr.bf16.mxu0 %v858
      %2184 = vmatpush1.bf16.msra.mxu0 %v857
      %2185 = vmatprep.subr.bf16.mxu0 %v860
      %2186 = vmatpush1.bf16.msra.mxu0 %v859
      %2187 = vmatprep.subr.bf16.mxu0 %v862
      %2188 = vmatpush1.bf16.msra.mxu0 %v861
      %2189 = vmatprep.subr.bf16.mxu0 %v864
      %2190 = vmatpush1.bf16.msra.mxu0 %v863
      %2191 = vmatprep.subr.bf16.mxu0 %v866
      %2192 = vmatpush1.bf16.msra.mxu0 %v865
      %2193 = vmatprep.subr.bf16.mxu0 %v868
      %2194 = vmatpush1.bf16.msra.mxu0 %v867
      %2195 = vmatprep.mubr.bf16.mxu0 %v1445
      %2196 = vmatmul.mubr.bf16.gmra.mrb[0].mxu0 %v1444
      %v2197 = vpop.f32.mrb[0].mxu0
      %v2198 = vadd.f32 %v2017, %v2197
      %v2199 = vpop.f32.mrb[0].mxu0
      %v2200 = vadd.f32 %v2019, %v2199
      %v2201 = vpop.f32.mrb[0].mxu0
      %v2202 = vadd.f32 %v2021, %v2201
      %v2203 = vpop.f32.mrb[0].mxu0
      %v2204 = vadd.f32 %v2023, %v2203
      %2205 = vmatprep.mubr.bf16.mxu0 %v1456
      %2206 = vmatmul.mubr.bf16.gmra.mrb[0].mxu0 %v1455
      %v2207 = vpop.f32.mrb[0].mxu0
      %v2208 = vadd.f32 %v2027, %v2207
      %v2209 = vpop.f32.mrb[0].mxu0
      %v2210 = vadd.f32 %v2029, %v2209
      %v2211 = vpop.f32.mrb[0].mxu0
      %v2212 = vadd.f32 %v2031, %v2211
      %v2213 = vpop.f32.mrb[0].mxu0
      %v2214 = vadd.f32 %v2033, %v2213
      %2215 = vmatprep.mubr.bf16.mxu0 %v1467
      %2216 = vmatmul.mubr.bf16.gmra.mrb[0].mxu0 %v1466
      %v2217 = vpop.f32.mrb[0].mxu0
      %v2218 = vadd.f32 %v2037, %v2217
      %v2219 = vpop.f32.mrb[0].mxu0
      %v2220 = vadd.f32 %v2039, %v2219
      %v2221 = vpop.f32.mrb[0].mxu0
      %v2222 = vadd.f32 %v2041, %v2221
      %v2223 = vpop.f32.mrb[0].mxu0
      %v2224 = vadd.f32 %v2043, %v2223
      %2225 = vmatprep.mubr.bf16.mxu0 %v1478
      %2226 = vmatmul.mubr.bf16.gmra.mrb[0].mxu0 %v1477
      %v2227 = vpop.f32.mrb[0].mxu0
      %v2228 = vadd.f32 %v2047, %v2227
      %v2229 = vpop.f32.mrb[0].mxu0
      %v2230 = vadd.f32 %v2049, %v2229
      %v2231 = vpop.f32.mrb[0].mxu0
      %v2232 = vadd.f32 %v2051, %v2231
      %v2233 = vpop.f32.mrb[0].mxu0
      %v2234 = vadd.f32 %v2053, %v2233
      %2235 = vmatprep.mubr.bf16.mxu0 %v1489
      %2236 = vmatmul.mubr.bf16.gmra.mrb[0].mxu0 %v1488
      %v2237 = vpop.f32.mrb[0].mxu0
      %v2238 = vadd.f32 %v2057, %v2237
      %v2239 = vpop.f32.mrb[0].mxu0
      %v2240 = vadd.f32 %v2059, %v2239
      %v2241 = vpop.f32.mrb[0].mxu0
      %v2242 = vadd.f32 %v2061, %v2241
      %v2243 = vpop.f32.mrb[0].mxu0
      %v2244 = vadd.f32 %v2063, %v2243
      %2245 = vmatprep.mubr.bf16.mxu0 %v1500
      %2246 = vmatmul.mubr.bf16.gmra.mrb[0].mxu0 %v1499
      %v2247 = vpop.f32.mrb[0].mxu0
      %v2248 = vadd.f32 %v2067, %v2247
      %v2249 = vpop.f32.mrb[0].mxu0
      %v2250 = vadd.f32 %v2069, %v2249
      %v2251 = vpop.f32.mrb[0].mxu0
      %v2252 = vadd.f32 %v2071, %v2251
      %v2253 = vpop.f32.mrb[0].mxu0
      %v2254 = vadd.f32 %v2073, %v2253
      %2255 = vmatprep.mubr.bf16.mxu0 %v1511
      %2256 = vmatmul.mubr.bf16.gmra.mrb[0].mxu0 %v1510
      %v2257 = vpop.f32.mrb[0].mxu0
      %v2258 = vadd.f32 %v2077, %v2257
      %v2259 = vpop.f32.mrb[0].mxu0
      %v2260 = vadd.f32 %v2079, %v2259
      %v2261 = vpop.f32.mrb[0].mxu0
      %v2262 = vadd.f32 %v2081, %v2261
      %v2263 = vpop.f32.mrb[0].mxu0
      %v2264 = vadd.f32 %v2083, %v2263
      %2265 = vmatprep.mubr.bf16.mxu0 %v1522
      %2266 = vmatmul.mubr.bf16.gmra.mrb[0].mxu0 %v1521
      %v2267 = vpop.f32.mrb[0].mxu0
      %v2268 = vadd.f32 %v2087, %v2267
      %v2269 = vpop.f32.mrb[0].mxu0
      %v2270 = vadd.f32 %v2089, %v2269
      %v2271 = vpop.f32.mrb[0].mxu0
      %v2272 = vadd.f32 %v2091, %v2271
      %v2273 = vpop.f32.mrb[0].mxu0
      %v2274 = vadd.f32 %v2093, %v2273
      %2275 = vmatprep.mubr.bf16.mxu0 %v1533
      %2276 = vmatmul.mubr.bf16.gmra.mrb[0].mxu0 %v1532
      %v2277 = vpop.f32.mrb[0].mxu0
      %v2278 = vadd.f32 %v2097, %v2277
      %v2279 = vpop.f32.mrb[0].mxu0
      %v2280 = vadd.f32 %v2099, %v2279
      %v2281 = vpop.f32.mrb[0].mxu0
      %v2282 = vadd.f32 %v2101, %v2281
      %v2283 = vpop.f32.mrb[0].mxu0
      %v2284 = vadd.f32 %v2103, %v2283
      %2285 = vmatprep.mubr.bf16.mxu0 %v1544
      %2286 = vmatmul.mubr.bf16.gmra.mrb[0].mxu0 %v1543
      %v2287 = vpop.f32.mrb[0].mxu0
      %v2288 = vadd.f32 %v2107, %v2287
      %v2289 = vpop.f32.mrb[0].mxu0
      %v2290 = vadd.f32 %v2109, %v2289
      %v2291 = vpop.f32.mrb[0].mxu0
      %v2292 = vadd.f32 %v2111, %v2291
      %v2293 = vpop.f32.mrb[0].mxu0
      %v2294 = vadd.f32 %v2113, %v2293
      %2295 = vmatprep.mubr.bf16.mxu0 %v1555
      %2296 = vmatmul.mubr.bf16.gmra.mrb[0].mxu0 %v1554
      %v2297 = vpop.f32.mrb[0].mxu0
      %v2298 = vadd.f32 %v2117, %v2297
      %v2299 = vpop.f32.mrb[0].mxu0
      %v2300 = vadd.f32 %v2119, %v2299
      %v2301 = vpop.f32.mrb[0].mxu0
      %v2302 = vadd.f32 %v2121, %v2301
      %v2303 = vpop.f32.mrb[0].mxu0
      %v2304 = vadd.f32 %v2123, %v2303
      %2305 = vmatprep.mubr.bf16.mxu0 %v1566
      %2306 = vmatmul.mubr.bf16.gmra.mrb[0].mxu0 %v1565
      %v2307 = vpop.f32.mrb[0].mxu0
      %v2308 = vadd.f32 %v2127, %v2307
      %v2309 = vpop.f32.mrb[0].mxu0
      %v2310 = vadd.f32 %v2129, %v2309
      %v2311 = vpop.f32.mrb[0].mxu0
      %v2312 = vadd.f32 %v2131, %v2311
      %v2313 = vpop.f32.mrb[0].mxu0
      %v2314 = vadd.f32 %v2133, %v2313
      %2315 = vmatprep.mubr.bf16.mxu0 %v1577
      %2316 = vmatmul.mubr.bf16.gmra.mrb[0].mxu0 %v1576
      %v2317 = vpop.f32.mrb[0].mxu0
      %v2318 = vadd.f32 %v2137, %v2317
      %v2319 = vpop.f32.mrb[0].mxu0
      %v2320 = vadd.f32 %v2139, %v2319
      %v2321 = vpop.f32.mrb[0].mxu0
      %v2322 = vadd.f32 %v2141, %v2321
      %v2323 = vpop.f32.mrb[0].mxu0
      %v2324 = vadd.f32 %v2143, %v2323
      %2325 = vmatprep.mubr.bf16.mxu0 %v1588
      %2326 = vmatmul.mubr.bf16.gmra.mrb[0].mxu0 %v1587
      %v2327 = vpop.f32.mrb[0].mxu0
      %v2328 = vadd.f32 %v2147, %v2327
      %v2329 = vpop.f32.mrb[0].mxu0
      %v2330 = vadd.f32 %v2149, %v2329
      %v2331 = vpop.f32.mrb[0].mxu0
      %v2332 = vadd.f32 %v2151, %v2331
      %v2333 = vpop.f32.mrb[0].mxu0
      %v2334 = vadd.f32 %v2153, %v2333
      %2335 = vmatprep.mubr.bf16.mxu0 %v1599
      %2336 = vmatmul.mubr.bf16.gmra.mrb[0].mxu0 %v1598
      %v2337 = vpop.f32.mrb[0].mxu0
      %v2338 = vadd.f32 %v2157, %v2337
      %v2339 = vpop.f32.mrb[0].mxu0
      %v2340 = vadd.f32 %v2159, %v2339
      %v2341 = vpop.f32.mrb[0].mxu0
      %v2342 = vpop.f32.mrb[0].mxu0
      %2343 = vdwg.mxu0
      %2344 = vmatprep.subr.bf16.mxu0 %v870
      %2345 = vmatpush1.bf16.msra.mxu0 %v869
      %2346 = vmatprep.subr.bf16.mxu0 %v872
      %2347 = vmatpush1.bf16.msra.mxu0 %v871
      %2348 = vmatprep.subr.bf16.mxu0 %v874
      %2349 = vmatpush1.bf16.msra.mxu0 %v873
      %2350 = vmatprep.subr.bf16.mxu0 %v876
      %2351 = vmatpush1.bf16.msra.mxu0 %v875
      %2352 = vmatprep.subr.bf16.mxu0 %v878
      %2353 = vmatpush1.bf16.msra.mxu0 %v877
      %2354 = vmatprep.subr.bf16.mxu0 %v880
      %2355 = vmatpush1.bf16.msra.mxu0 %v879
      %2356 = vmatprep.subr.bf16.mxu0 %v882
      %2357 = vmatpush1.bf16.msra.mxu0 %v881
      %2358 = vmatprep.subr.bf16.mxu0 %v884
      %2359 = vmatpush1.bf16.msra.mxu0 %v883
      %2360 = vmatprep.subr.bf16.mxu0 %v886
      %2361 = vmatpush1.bf16.msra.mxu0 %v885
      %2362 = vmatprep.subr.bf16.mxu0 %v888
      %2363 = vmatpush1.bf16.msra.mxu0 %v887
      %2364 = vmatprep.subr.bf16.mxu0 %v890
      %2365 = vmatpush1.bf16.msra.mxu0 %v889
      %2366 = vmatprep.subr.bf16.mxu0 %v892
      %2367 = vmatpush1.bf16.msra.mxu0 %v891
      %2368 = vmatprep.subr.bf16.mxu0 %v894
      %2369 = vmatpush1.bf16.msra.mxu0 %v893
      %2370 = vmatprep.subr.bf16.mxu0 %v896
      %2371 = vmatpush1.bf16.msra.mxu0 %v895
      %2372 = vmatprep.subr.bf16.mxu0 %v898
      %2373 = vmatpush1.bf16.msra.mxu0 %v897
      %2374 = vmatprep.subr.bf16.mxu0 %v900
      %2375 = vmatpush1.bf16.msra.mxu0 %v899
      %2376 = vmatprep.mubr.bf16.mxu0 %v1447
      %2377 = vmatmul.mubr.bf16.gmra.mrb[0].mxu0 %v1446
      %v2378 = vpop.f32.mrb[0].mxu0
      %v2379 = vadd.f32 %v2198, %v2378
      %v2380 = vpop.f32.mrb[0].mxu0
      %v2381 = vadd.f32 %v2200, %v2380
      %v2382 = vpop.f32.mrb[0].mxu0
      %v2383 = vadd.f32 %v2202, %v2382
      %v2384 = vpop.f32.mrb[0].mxu0
      %v2385 = vadd.f32 %v2204, %v2384
      %2386 = vmatprep.mubr.bf16.mxu0 %v1458
      %2387 = vmatmul.mubr.bf16.gmra.mrb[0].mxu0 %v1457
      %v2388 = vpop.f32.mrb[0].mxu0
      %v2389 = vadd.f32 %v2208, %v2388
      %v2390 = vpop.f32.mrb[0].mxu0
      %v2391 = vadd.f32 %v2210, %v2390
      %v2392 = vpop.f32.mrb[0].mxu0
      %v2393 = vadd.f32 %v2212, %v2392
      %v2394 = vpop.f32.mrb[0].mxu0
      %v2395 = vadd.f32 %v2214, %v2394
      %2396 = vmatprep.mubr.bf16.mxu0 %v1469
      %2397 = vmatmul.mubr.bf16.gmra.mrb[0].mxu0 %v1468
      %v2398 = vpop.f32.mrb[0].mxu0
      %v2399 = vadd.f32 %v2218, %v2398
      %v2400 = vpop.f32.mrb[0].mxu0
      %v2401 = vadd.f32 %v2220, %v2400
      %v2402 = vpop.f32.mrb[0].mxu0
      %v2403 = vadd.f32 %v2222, %v2402
      %v2404 = vpop.f32.mrb[0].mxu0
      %v2405 = vadd.f32 %v2224, %v2404
      %2406 = vmatprep.mubr.bf16.mxu0 %v1480
      %2407 = vmatmul.mubr.bf16.gmra.mrb[0].mxu0 %v1479
      %v2408 = vpop.f32.mrb[0].mxu0
      %v2409 = vadd.f32 %v2228, %v2408
      %v2410 = vpop.f32.mrb[0].mxu0
      %v2411 = vadd.f32 %v2230, %v2410
      %v2412 = vpop.f32.mrb[0].mxu0
      %v2413 = vadd.f32 %v2232, %v2412
      %v2414 = vpop.f32.mrb[0].mxu0
      %v2415 = vadd.f32 %v2234, %v2414
      %2416 = vmatprep.mubr.bf16.mxu0 %v1491
      %2417 = vmatmul.mubr.bf16.gmra.mrb[0].mxu0 %v1490
      %v2418 = vpop.f32.mrb[0].mxu0
      %v2419 = vadd.f32 %v2238, %v2418
      %v2420 = vpop.f32.mrb[0].mxu0
      %v2421 = vadd.f32 %v2240, %v2420
      %v2422 = vpop.f32.mrb[0].mxu0
      %v2423 = vadd.f32 %v2242, %v2422
      %v2424 = vpop.f32.mrb[0].mxu0
      %v2425 = vadd.f32 %v2244, %v2424
      %2426 = vmatprep.mubr.bf16.mxu0 %v1502
      %2427 = vmatmul.mubr.bf16.gmra.mrb[0].mxu0 %v1501
      %v2428 = vpop.f32.mrb[0].mxu0
      %v2429 = vadd.f32 %v2248, %v2428
      %v2430 = vpop.f32.mrb[0].mxu0
      %v2431 = vadd.f32 %v2250, %v2430
      %v2432 = vpop.f32.mrb[0].mxu0
      %v2433 = vadd.f32 %v2252, %v2432
      %v2434 = vpop.f32.mrb[0].mxu0
      %v2435 = vadd.f32 %v2254, %v2434
      %2436 = vmatprep.mubr.bf16.mxu0 %v1513
      %2437 = vmatmul.mubr.bf16.gmra.mrb[0].mxu0 %v1512
      %v2438 = vpop.f32.mrb[0].mxu0
      %v2439 = vadd.f32 %v2258, %v2438
      %v2440 = vpop.f32.mrb[0].mxu0
      %v2441 = vadd.f32 %v2260, %v2440
      %v2442 = vpop.f32.mrb[0].mxu0
      %v2443 = vadd.f32 %v2262, %v2442
      %v2444 = vpop.f32.mrb[0].mxu0
      %v2445 = vadd.f32 %v2264, %v2444
      %2446 = vmatprep.mubr.bf16.mxu0 %v1524
      %2447 = vmatmul.mubr.bf16.gmra.mrb[0].mxu0 %v1523
      %v2448 = vpop.f32.mrb[0].mxu0
      %v2449 = vadd.f32 %v2268, %v2448
      %v2450 = vpop.f32.mrb[0].mxu0
      %v2451 = vadd.f32 %v2270, %v2450
      %v2452 = vpop.f32.mrb[0].mxu0
      %v2453 = vadd.f32 %v2272, %v2452
      %v2454 = vpop.f32.mrb[0].mxu0
      %v2455 = vadd.f32 %v2274, %v2454
      %2456 = vmatprep.mubr.bf16.mxu0 %v1535
      %2457 = vmatmul.mubr.bf16.gmra.mrb[0].mxu0 %v1534
      %v2458 = vpop.f32.mrb[0].mxu0
      %v2459 = vadd.f32 %v2278, %v2458
      %v2460 = vpop.f32.mrb[0].mxu0
      %v2461 = vadd.f32 %v2280, %v2460
      %v2462 = vpop.f32.mrb[0].mxu0
      %v2463 = vadd.f32 %v2282, %v2462
      %v2464 = vpop.f32.mrb[0].mxu0
      %v2465 = vadd.f32 %v2284, %v2464
      %2466 = vmatprep.mubr.bf16.mxu0 %v1546
      %2467 = vmatmul.mubr.bf16.gmra.mrb[0].mxu0 %v1545
      %v2468 = vpop.f32.mrb[0].mxu0
      %v2469 = vadd.f32 %v2288, %v2468
      %v2470 = vpop.f32.mrb[0].mxu0
      %v2471 = vadd.f32 %v2290, %v2470
      %v2472 = vpop.f32.mrb[0].mxu0
      %v2473 = vadd.f32 %v2292, %v2472
      %v2474 = vpop.f32.mrb[0].mxu0
      %v2475 = vadd.f32 %v2294, %v2474
      %2476 = vmatprep.mubr.bf16.mxu0 %v1557
      %2477 = vmatmul.mubr.bf16.gmra.mrb[0].mxu0 %v1556
      %v2478 = vpop.f32.mrb[0].mxu0
      %v2479 = vadd.f32 %v2298, %v2478
      %v2480 = vpop.f32.mrb[0].mxu0
      %v2481 = vadd.f32 %v2300, %v2480
      %v2482 = vpop.f32.mrb[0].mxu0
      %v2483 = vadd.f32 %v2302, %v2482
      %v2484 = vpop.f32.mrb[0].mxu0
      %v2485 = vadd.f32 %v2304, %v2484
      %2486 = vmatprep.mubr.bf16.mxu0 %v1568
      %2487 = vmatmul.mubr.bf16.gmra.mrb[0].mxu0 %v1567
      %v2488 = vpop.f32.mrb[0].mxu0
      %v2489 = vadd.f32 %v2308, %v2488
      %v2490 = vpop.f32.mrb[0].mxu0
      %v2491 = vadd.f32 %v2310, %v2490
      %v2492 = vpop.f32.mrb[0].mxu0
      %v2493 = vadd.f32 %v2312, %v2492
      %v2494 = vpop.f32.mrb[0].mxu0
      %v2495 = vadd.f32 %v2314, %v2494
      %2496 = vmatprep.mubr.bf16.mxu0 %v1579
      %2497 = vmatmul.mubr.bf16.gmra.mrb[0].mxu0 %v1578
      %v2498 = vpop.f32.mrb[0].mxu0
      %v2499 = vadd.f32 %v2318, %v2498
      %v2500 = vpop.f32.mrb[0].mxu0
      %v2501 = vadd.f32 %v2320, %v2500
      %v2502 = vpop.f32.mrb[0].mxu0
      %v2503 = vadd.f32 %v2322, %v2502
      %v2504 = vpop.f32.mrb[0].mxu0
      %v2505 = vadd.f32 %v2324, %v2504
      %2506 = vmatprep.mubr.bf16.mxu0 %v1590
      %2507 = vmatmul.mubr.bf16.gmra.mrb[0].mxu0 %v1589
      %v2508 = vpop.f32.mrb[0].mxu0
      %v2509 = vadd.f32 %v2328, %v2508
      %v2510 = vpop.f32.mrb[0].mxu0
      %v2511 = vadd.f32 %v2330, %v2510
      %v2512 = vpop.f32.mrb[0].mxu0
      %v2513 = vadd.f32 %v2332, %v2512
      %v2514 = vpop.f32.mrb[0].mxu0
      %v2515 = vadd.f32 %v2334, %v2514
      %2516 = vmatprep.mubr.bf16.mxu0 %v1601
      %2517 = vmatmul.mubr.bf16.gmra.mrb[0].mxu0 %v1600
      %v2518 = vpop.f32.mrb[0].mxu0
      %v2519 = vadd.f32 %v2338, %v2518
      %v2520 = vpop.f32.mrb[0].mxu0
      %v2521 = vadd.f32 %v2340, %v2520
      %v2522 = vpop.f32.mrb[0].mxu0
      %v2523 = vpop.f32.mrb[0].mxu0
      %2524 = vdwg.mxu0
      %2525 = vmatprep.subr.bf16.mxu0 %v902
      %2526 = vmatpush1.bf16.msra.mxu0 %v901
      %2527 = vmatprep.subr.bf16.mxu0 %v904
      %2528 = vmatpush1.bf16.msra.mxu0 %v903
      %2529 = vmatprep.subr.bf16.mxu0 %v906
      %2530 = vmatpush1.bf16.msra.mxu0 %v905
      %2531 = vmatprep.subr.bf16.mxu0 %v908
      %2532 = vmatpush1.bf16.msra.mxu0 %v907
      %2533 = vmatprep.subr.bf16.mxu0 %v910
      %2534 = vmatpush1.bf16.msra.mxu0 %v909
      %2535 = vmatprep.subr.bf16.mxu0 %v912
      %2536 = vmatpush1.bf16.msra.mxu0 %v911
      %2537 = vmatprep.subr.bf16.mxu0 %v914
      %2538 = vmatpush1.bf16.msra.mxu0 %v913
      %2539 = vmatprep.subr.bf16.mxu0 %v916
      %2540 = vmatpush1.bf16.msra.mxu0 %v915
      %2541 = vmatprep.subr.bf16.mxu0 %v918
      %2542 = vmatpush1.bf16.msra.mxu0 %v917
      %2543 = vmatprep.subr.bf16.mxu0 %v920
      %2544 = vmatpush1.bf16.msra.mxu0 %v919
      %2545 = vmatprep.subr.bf16.mxu0 %v922
      %2546 = vmatpush1.bf16.msra.mxu0 %v921
      %2547 = vmatprep.subr.bf16.mxu0 %v924
      %2548 = vmatpush1.bf16.msra.mxu0 %v923
      %2549 = vmatprep.subr.bf16.mxu0 %v926
      %2550 = vmatpush1.bf16.msra.mxu0 %v925
      %2551 = vmatprep.subr.bf16.mxu0 %v928
      %2552 = vmatpush1.bf16.msra.mxu0 %v927
      %2553 = vmatprep.subr.bf16.mxu0 %v930
      %2554 = vmatpush1.bf16.msra.mxu0 %v929
      %2555 = vmatprep.subr.bf16.mxu0 %v932
      %2556 = vmatpush1.bf16.msra.mxu0 %v931
      %2557 = vmatprep.mubr.bf16.mxu0 %v1449
      %2558 = vmatmul.mubr.bf16.gmra.mrb[0].mxu0 %v1448
      %v2559 = vpop.f32.mrb[0].mxu0
      %v2560 = vadd.f32 %v2379, %v2559
      %v2561 = vpop.f32.mrb[0].mxu0
      %v2562 = vadd.f32 %v2381, %v2561
      %v2563 = vpop.f32.mrb[0].mxu0
      %v2564 = vadd.f32 %v2383, %v2563
      %v2565 = vpop.f32.mrb[0].mxu0
      %v2566 = vadd.f32 %v2385, %v2565
      %2567 = vmatprep.mubr.bf16.mxu0 %v1460
      %2568 = vmatmul.mubr.bf16.gmra.mrb[0].mxu0 %v1459
      %v2569 = vpop.f32.mrb[0].mxu0
      %v2570 = vadd.f32 %v2389, %v2569
      %v2571 = vpop.f32.mrb[0].mxu0
      %v2572 = vadd.f32 %v2391, %v2571
      %v2573 = vpop.f32.mrb[0].mxu0
      %v2574 = vadd.f32 %v2393, %v2573
      %v2575 = vpop.f32.mrb[0].mxu0
      %v2576 = vadd.f32 %v2395, %v2575
      %2577 = vmatprep.mubr.bf16.mxu0 %v1471
      %2578 = vmatmul.mubr.bf16.gmra.mrb[0].mxu0 %v1470
      %v2579 = vpop.f32.mrb[0].mxu0
      %v2580 = vadd.f32 %v2399, %v2579
      %v2581 = vpop.f32.mrb[0].mxu0
      %v2582 = vadd.f32 %v2401, %v2581
      %v2583 = vpop.f32.mrb[0].mxu0
      %v2584 = vadd.f32 %v2403, %v2583
      %v2585 = vpop.f32.mrb[0].mxu0
      %v2586 = vadd.f32 %v2405, %v2585
      %2587 = vmatprep.mubr.bf16.mxu0 %v1482
      %2588 = vmatmul.mubr.bf16.gmra.mrb[0].mxu0 %v1481
      %v2589 = vpop.f32.mrb[0].mxu0
      %v2590 = vadd.f32 %v2409, %v2589
      %v2591 = vpop.f32.mrb[0].mxu0
      %v2592 = vadd.f32 %v2411, %v2591
      %v2593 = vpop.f32.mrb[0].mxu0
      %v2594 = vadd.f32 %v2413, %v2593
      %v2595 = vpop.f32.mrb[0].mxu0
      %v2596 = vadd.f32 %v2415, %v2595
      %2597 = vmatprep.mubr.bf16.mxu0 %v1493
      %2598 = vmatmul.mubr.bf16.gmra.mrb[0].mxu0 %v1492
      %v2599 = vpop.f32.mrb[0].mxu0
      %v2600 = vadd.f32 %v2419, %v2599
      %v2601 = vpop.f32.mrb[0].mxu0
      %v2602 = vadd.f32 %v2421, %v2601
      %v2603 = vpop.f32.mrb[0].mxu0
      %v2604 = vadd.f32 %v2423, %v2603
      %v2605 = vpop.f32.mrb[0].mxu0
      %v2606 = vadd.f32 %v2425, %v2605
      %2607 = vmatprep.mubr.bf16.mxu0 %v1504
      %2608 = vmatmul.mubr.bf16.gmra.mrb[0].mxu0 %v1503
      %v2609 = vpop.f32.mrb[0].mxu0
      %v2610 = vadd.f32 %v2429, %v2609
      %v2611 = vpop.f32.mrb[0].mxu0
      %v2612 = vadd.f32 %v2431, %v2611
      %v2613 = vpop.f32.mrb[0].mxu0
      %v2614 = vadd.f32 %v2433, %v2613
      %v2615 = vpop.f32.mrb[0].mxu0
      %v2616 = vadd.f32 %v2435, %v2615
      %2617 = vmatprep.mubr.bf16.mxu0 %v1515
      %2618 = vmatmul.mubr.bf16.gmra.mrb[0].mxu0 %v1514
      %v2619 = vpop.f32.mrb[0].mxu0
      %v2620 = vadd.f32 %v2439, %v2619
      %v2621 = vpop.f32.mrb[0].mxu0
      %v2622 = vadd.f32 %v2441, %v2621
      %v2623 = vpop.f32.mrb[0].mxu0
      %v2624 = vadd.f32 %v2443, %v2623
      %v2625 = vpop.f32.mrb[0].mxu0
      %v2626 = vadd.f32 %v2445, %v2625
      %2627 = vmatprep.mubr.bf16.mxu0 %v1526
      %2628 = vmatmul.mubr.bf16.gmra.mrb[0].mxu0 %v1525
      %v2629 = vpop.f32.mrb[0].mxu0
      %v2630 = vadd.f32 %v2449, %v2629
      %v2631 = vpop.f32.mrb[0].mxu0
      %v2632 = vadd.f32 %v2451, %v2631
      %v2633 = vpop.f32.mrb[0].mxu0
      %v2634 = vadd.f32 %v2453, %v2633
      %v2635 = vpop.f32.mrb[0].mxu0
      %v2636 = vadd.f32 %v2455, %v2635
      %2637 = vmatprep.mubr.bf16.mxu0 %v1537
      %2638 = vmatmul.mubr.bf16.gmra.mrb[0].mxu0 %v1536
      %v2639 = vpop.f32.mrb[0].mxu0
      %v2640 = vadd.f32 %v2459, %v2639
      %v2641 = vpop.f32.mrb[0].mxu0
      %v2642 = vadd.f32 %v2461, %v2641
      %v2643 = vpop.f32.mrb[0].mxu0
      %v2644 = vadd.f32 %v2463, %v2643
      %v2645 = vpop.f32.mrb[0].mxu0
      %v2646 = vadd.f32 %v2465, %v2645
      %2647 = vmatprep.mubr.bf16.mxu0 %v1548
      %2648 = vmatmul.mubr.bf16.gmra.mrb[0].mxu0 %v1547
      %v2649 = vpop.f32.mrb[0].mxu0
      %v2650 = vadd.f32 %v2469, %v2649
      %v2651 = vpop.f32.mrb[0].mxu0
      %v2652 = vadd.f32 %v2471, %v2651
      %v2653 = vpop.f32.mrb[0].mxu0
      %v2654 = vadd.f32 %v2473, %v2653
      %v2655 = vpop.f32.mrb[0].mxu0
      %v2656 = vadd.f32 %v2475, %v2655
      %2657 = vmatprep.mubr.bf16.mxu0 %v1559
      %2658 = vmatmul.mubr.bf16.gmra.mrb[0].mxu0 %v1558
      %v2659 = vpop.f32.mrb[0].mxu0
      %v2660 = vadd.f32 %v2479, %v2659
      %v2661 = vpop.f32.mrb[0].mxu0
      %v2662 = vadd.f32 %v2481, %v2661
      %v2663 = vpop.f32.mrb[0].mxu0
      %v2664 = vadd.f32 %v2483, %v2663
      %v2665 = vpop.f32.mrb[0].mxu0
      %v2666 = vadd.f32 %v2485, %v2665
      %2667 = vmatprep.mubr.bf16.mxu0 %v1570
      %2668 = vmatmul.mubr.bf16.gmra.mrb[0].mxu0 %v1569
      %v2669 = vpop.f32.mrb[0].mxu0
      %v2670 = vadd.f32 %v2489, %v2669
      %v2671 = vpop.f32.mrb[0].mxu0
      %v2672 = vadd.f32 %v2491, %v2671
      %v2673 = vpop.f32.mrb[0].mxu0
      %v2674 = vadd.f32 %v2493, %v2673
      %v2675 = vpop.f32.mrb[0].mxu0
      %v2676 = vadd.f32 %v2495, %v2675
      %2677 = vmatprep.mubr.bf16.mxu0 %v1581
      %2678 = vmatmul.mubr.bf16.gmra.mrb[0].mxu0 %v1580
      %v2679 = vpop.f32.mrb[0].mxu0
      %v2680 = vadd.f32 %v2499, %v2679
      %v2681 = vpop.f32.mrb[0].mxu0
      %v2682 = vadd.f32 %v2501, %v2681
      %v2683 = vpop.f32.mrb[0].mxu0
      %v2684 = vadd.f32 %v2503, %v2683
      %v2685 = vpop.f32.mrb[0].mxu0
      %v2686 = vadd.f32 %v2505, %v2685
      %2687 = vmatprep.mubr.bf16.mxu0 %v1592
      %2688 = vmatmul.mubr.bf16.gmra.mrb[0].mxu0 %v1591
      %v2689 = vpop.f32.mrb[0].mxu0
      %v2690 = vadd.f32 %v2509, %v2689
      %v2691 = vpop.f32.mrb[0].mxu0
      %v2692 = vadd.f32 %v2511, %v2691
      %v2693 = vpop.f32.mrb[0].mxu0
      %v2694 = vadd.f32 %v2513, %v2693
      %v2695 = vpop.f32.mrb[0].mxu0
      %v2696 = vadd.f32 %v2515, %v2695
      %2697 = vmatprep.mubr.bf16.mxu0 %v1603
      %2698 = vmatmul.mubr.bf16.gmra.mrb[0].mxu0 %v1602
      %v2699 = vpop.f32.mrb[0].mxu0
      %v2700 = vadd.f32 %v2519, %v2699
      %v2701 = vpop.f32.mrb[0].mxu0
      %v2702 = vadd.f32 %v2521, %v2701
      %v2703 = vpop.f32.mrb[0].mxu0
      %v2704 = vpop.f32.mrb[0].mxu0
      %2705 = vdwg.mxu0
      %2706 = vmatprep.subr.bf16.mxu0 %v934
      %2707 = vmatpush1.bf16.msra.mxu0 %v933
      %2708 = vmatprep.subr.bf16.mxu0 %v936
      %2709 = vmatpush1.bf16.msra.mxu0 %v935
      %2710 = vmatprep.subr.bf16.mxu0 %v938
      %2711 = vmatpush1.bf16.msra.mxu0 %v937
      %2712 = vmatprep.subr.bf16.mxu0 %v940
      %2713 = vmatpush1.bf16.msra.mxu0 %v939
      %2714 = vmatprep.subr.bf16.mxu0 %v942
      %2715 = vmatpush1.bf16.msra.mxu0 %v941
      %2716 = vmatprep.subr.bf16.mxu0 %v944
      %2717 = vmatpush1.bf16.msra.mxu0 %v943
      %2718 = vmatprep.subr.bf16.mxu0 %v946
      %2719 = vmatpush1.bf16.msra.mxu0 %v945
      %2720 = vmatprep.subr.bf16.mxu0 0
      %2721 = vmatpush1.bf16.msra.mxu0 0
      %2722 = vmatprep.subr.bf16.mxu0 0
      %2723 = vmatpush1.bf16.msra.mxu0 0
      %2724 = vmatprep.subr.bf16.mxu0 0
      %2725 = vmatpush1.bf16.msra.mxu0 0
      %2726 = vmatprep.subr.bf16.mxu0 0
      %2727 = vmatpush1.bf16.msra.mxu0 0
      %2728 = vmatprep.subr.bf16.mxu0 0
      %2729 = vmatpush1.bf16.msra.mxu0 0
      %2730 = vmatprep.subr.bf16.mxu0 0
      %2731 = vmatpush1.bf16.msra.mxu0 0
      %2732 = vmatprep.subr.bf16.mxu0 0
      %2733 = vmatpush1.bf16.msra.mxu0 0
      %2734 = vmatprep.subr.bf16.mxu0 0
      %2735 = vmatpush1.bf16.msra.mxu0 0
      %2736 = vmatprep.subr.bf16.mxu0 0
      %2737 = vmatpush1.bf16.msra.mxu0 0
      %2738 = vmatprep.mubr.bf16.mxu0 0
      %2739 = vmatmul.mubr.bf16.gmra.mrb[0].mxu0 %v1757
      %v2740 = vpop.f32.mrb[0].mxu0
      %v2741 = vadd.f32 %v2560, %v2740
      %v2742 = vpop.f32.mrb[0].mxu0
      %v2743 = vadd.f32 %v2562, %v2742
      %v2744 = vpop.f32.mrb[0].mxu0
      %v2745 = vadd.f32 %v2564, %v2744
      %v2746 = vpop.f32.mrb[0].mxu0
      %v2747 = vadd.f32 %v2566, %v2746
      %2748 = vmatprep.mubr.bf16.mxu0 0
      %2749 = vmatmul.mubr.bf16.gmra.mrb[0].mxu0 %v1760
      %v2750 = vpop.f32.mrb[0].mxu0
      %v2751 = vadd.f32 %v2570, %v2750
      %v2752 = vpop.f32.mrb[0].mxu0
      %v2753 = vadd.f32 %v2572, %v2752
      %v2754 = vpop.f32.mrb[0].mxu0
      %v2755 = vadd.f32 %v2574, %v2754
      %v2756 = vpop.f32.mrb[0].mxu0
      %v2757 = vadd.f32 %v2576, %v2756
      %2758 = vmatprep.mubr.bf16.mxu0 0
      %2759 = vmatmul.mubr.bf16.gmra.mrb[0].mxu0 %v1763
      %v2760 = vpop.f32.mrb[0].mxu0
      %v2761 = vadd.f32 %v2580, %v2760
      %v2762 = vpop.f32.mrb[0].mxu0
      %v2763 = vadd.f32 %v2582, %v2762
      %v2764 = vpop.f32.mrb[0].mxu0
      %v2765 = vadd.f32 %v2584, %v2764
      %v2766 = vpop.f32.mrb[0].mxu0
      %v2767 = vadd.f32 %v2586, %v2766
      %2768 = vmatprep.mubr.bf16.mxu0 0
      %2769 = vmatmul.mubr.bf16.gmra.mrb[0].mxu0 %v1766
      %v2770 = vpop.f32.mrb[0].mxu0
      %v2771 = vadd.f32 %v2590, %v2770
      %v2772 = vpop.f32.mrb[0].mxu0
      %v2773 = vadd.f32 %v2592, %v2772
      %v2774 = vpop.f32.mrb[0].mxu0
      %v2775 = vadd.f32 %v2594, %v2774
      %v2776 = vpop.f32.mrb[0].mxu0
      %v2777 = vadd.f32 %v2596, %v2776
      %2778 = vmatprep.mubr.bf16.mxu0 0
      %2779 = vmatmul.mubr.bf16.gmra.mrb[0].mxu0 %v1769
      %v2780 = vpop.f32.mrb[0].mxu0
      %v2781 = vadd.f32 %v2600, %v2780
      %v2782 = vpop.f32.mrb[0].mxu0
      %v2783 = vadd.f32 %v2602, %v2782
      %v2784 = vpop.f32.mrb[0].mxu0
      %v2785 = vadd.f32 %v2604, %v2784
      %v2786 = vpop.f32.mrb[0].mxu0
      %v2787 = vadd.f32 %v2606, %v2786
      %2788 = vmatprep.mubr.bf16.mxu0 0
      %2789 = vmatmul.mubr.bf16.gmra.mrb[0].mxu0 %v1772
      %v2790 = vpop.f32.mrb[0].mxu0
      %v2791 = vadd.f32 %v2610, %v2790
      %v2792 = vpop.f32.mrb[0].mxu0
      %v2793 = vadd.f32 %v2612, %v2792
      %v2794 = vpop.f32.mrb[0].mxu0
      %v2795 = vadd.f32 %v2614, %v2794
      %v2796 = vpop.f32.mrb[0].mxu0
      %v2797 = vadd.f32 %v2616, %v2796
      %2798 = vmatprep.mubr.bf16.mxu0 0
      %2799 = vmatmul.mubr.bf16.gmra.mrb[0].mxu0 %v1775
      %v2800 = vpop.f32.mrb[0].mxu0
      %v2801 = vadd.f32 %v2620, %v2800
      %v2802 = vpop.f32.mrb[0].mxu0
      %v2803 = vadd.f32 %v2622, %v2802
      %v2804 = vpop.f32.mrb[0].mxu0
      %v2805 = vadd.f32 %v2624, %v2804
      %v2806 = vpop.f32.mrb[0].mxu0
      %v2807 = vadd.f32 %v2626, %v2806
      %2808 = vmatprep.mubr.bf16.mxu0 0
      %2809 = vmatmul.mubr.bf16.gmra.mrb[0].mxu0 %v1778
      %v2810 = vpop.f32.mrb[0].mxu0
      %v2811 = vadd.f32 %v2630, %v2810
      %v2812 = vpop.f32.mrb[0].mxu0
      %v2813 = vadd.f32 %v2632, %v2812
      %v2814 = vpop.f32.mrb[0].mxu0
      %v2815 = vadd.f32 %v2634, %v2814
      %v2816 = vpop.f32.mrb[0].mxu0
      %v2817 = vadd.f32 %v2636, %v2816
      %2818 = vmatprep.mubr.bf16.mxu0 0
      %2819 = vmatmul.mubr.bf16.gmra.mrb[0].mxu0 %v1781
      %v2820 = vpop.f32.mrb[0].mxu0
      %v2821 = vadd.f32 %v2640, %v2820
      %v2822 = vpop.f32.mrb[0].mxu0
      %v2823 = vadd.f32 %v2642, %v2822
      %v2824 = vpop.f32.mrb[0].mxu0
      %v2825 = vadd.f32 %v2644, %v2824
      %v2826 = vpop.f32.mrb[0].mxu0
      %v2827 = vadd.f32 %v2646, %v2826
      %2828 = vmatprep.mubr.bf16.mxu0 0
      %2829 = vmatmul.mubr.bf16.gmra.mrb[0].mxu0 %v1784
      %v2830 = vpop.f32.mrb[0].mxu0
      %v2831 = vadd.f32 %v2650, %v2830
      %v2832 = vpop.f32.mrb[0].mxu0
      %v2833 = vadd.f32 %v2652, %v2832
      %v2834 = vpop.f32.mrb[0].mxu0
      %v2835 = vadd.f32 %v2654, %v2834
      %v2836 = vpop.f32.mrb[0].mxu0
      %v2837 = vadd.f32 %v2656, %v2836
      %2838 = vmatprep.mubr.bf16.mxu0 0
      %2839 = vmatmul.mubr.bf16.gmra.mrb[0].mxu0 %v1787
      %v2840 = vpop.f32.mrb[0].mxu0
      %v2841 = vadd.f32 %v2660, %v2840
      %v2842 = vpop.f32.mrb[0].mxu0
      %v2843 = vadd.f32 %v2662, %v2842
      %v2844 = vpop.f32.mrb[0].mxu0
      %v2845 = vadd.f32 %v2664, %v2844
      %v2846 = vpop.f32.mrb[0].mxu0
      %v2847 = vadd.f32 %v2666, %v2846
      %2848 = vmatprep.mubr.bf16.mxu0 0
      %2849 = vmatmul.mubr.bf16.gmra.mrb[0].mxu0 %v1790
      %v2850 = vpop.f32.mrb[0].mxu0
      %v2851 = vadd.f32 %v2670, %v2850
      %v2852 = vpop.f32.mrb[0].mxu0
      %v2853 = vadd.f32 %v2672, %v2852
      %v2854 = vpop.f32.mrb[0].mxu0
      %v2855 = vadd.f32 %v2674, %v2854
      %v2856 = vpop.f32.mrb[0].mxu0
      %v2857 = vadd.f32 %v2676, %v2856
      %2858 = vmatprep.mubr.bf16.mxu0 0
      %2859 = vmatmul.mubr.bf16.gmra.mrb[0].mxu0 %v1793
      %v2860 = vpop.f32.mrb[0].mxu0
      %v2861 = vadd.f32 %v2680, %v2860
      %v2862 = vpop.f32.mrb[0].mxu0
      %v2863 = vadd.f32 %v2682, %v2862
      %v2864 = vpop.f32.mrb[0].mxu0
      %v2865 = vadd.f32 %v2684, %v2864
      %v2866 = vpop.f32.mrb[0].mxu0
      %v2867 = vadd.f32 %v2686, %v2866
      %2868 = vmatprep.mubr.bf16.mxu0 0
      %2869 = vmatmul.mubr.bf16.gmra.mrb[0].mxu0 %v1796
      %v2870 = vpop.f32.mrb[0].mxu0
      %v2871 = vadd.f32 %v2690, %v2870
      %v2872 = vpop.f32.mrb[0].mxu0
      %v2873 = vadd.f32 %v2692, %v2872
      %v2874 = vpop.f32.mrb[0].mxu0
      %v2875 = vadd.f32 %v2694, %v2874
      %v2876 = vpop.f32.mrb[0].mxu0
      %v2877 = vadd.f32 %v2696, %v2876
      %2878 = vmatprep.mubr.bf16.mxu0 0
      %2879 = vmatmul.mubr.bf16.gmra.mrb[0].mxu0 %v1799
      %v2880 = vpop.f32.mrb[0].mxu0
      %v2881 = vadd.f32 %v2700, %v2880
      %v2882 = vpop.f32.mrb[0].mxu0
      %v2883 = vadd.f32 %v2702, %v2882
      %v2884 = vpop.f32.mrb[0].mxu0
      %v2885 = vpop.f32.mrb[0].mxu0
      %2886 = vdwg.mxu0
      %vm2887 = vcmask 556032
      %v2888 = vsel %vm2887, %v2743, 0.0
      %v2889 = vadd.f32 %v2741, %v2888
      %2890 = vadd.xlane.f32.xlu0 %v2889
      %v2891 = vpop.xlane.xlu0 %2890
      %v2892 = vsel %vm2887, %v2747, 0.0
      %v2893 = vadd.f32 %v2745, %v2892
      %2894 = vadd.xlane.f32.xlu0 %v2893
      %v2895 = vpop.xlane.xlu0 %2894
      %v2896 = vsel %vm2887, %v2753, 0.0
      %v2897 = vadd.f32 %v2751, %v2896
      %2898 = vadd.xlane.f32.xlu0 %v2897
      %v2899 = vpop.xlane.xlu0 %2898
      %v2900 = vsel %vm2887, %v2757, 0.0
      %v2901 = vadd.f32 %v2755, %v2900
      %2902 = vadd.xlane.f32.xlu0 %v2901
      %v2903 = vpop.xlane.xlu0 %2902
      %v2904 = vsel %vm2887, %v2763, 0.0
      %v2905 = vadd.f32 %v2761, %v2904
      %2906 = vadd.xlane.f32.xlu0 %v2905
      %v2907 = vpop.xlane.xlu0 %2906
      %v2908 = vsel %vm2887, %v2767, 0.0
      %v2909 = vadd.f32 %v2765, %v2908
      %2910 = vadd.xlane.f32.xlu0 %v2909
      %v2911 = vpop.xlane.xlu0 %2910
      %v2912 = vsel %vm2887, %v2773, 0.0
      %v2913 = vadd.f32 %v2771, %v2912
      %2914 = vadd.xlane.f32.xlu0 %v2913
      %v2915 = vpop.xlane.xlu0 %2914
      %v2916 = vsel %vm2887, %v2777, 0.0
      %v2917 = vadd.f32 %v2775, %v2916
      %2918 = vadd.xlane.f32.xlu0 %v2917
      %v2919 = vpop.xlane.xlu0 %2918
      %v2920 = vsel %vm2887, %v2783, 0.0
      %v2921 = vadd.f32 %v2781, %v2920
      %2922 = vadd.xlane.f32.xlu0 %v2921
      %v2923 = vpop.xlane.xlu0 %2922
      %v2924 = vsel %vm2887, %v2787, 0.0
      %v2925 = vadd.f32 %v2785, %v2924
      %2926 = vadd.xlane.f32.xlu0 %v2925
      %v2927 = vpop.xlane.xlu0 %2926
      %v2928 = vsel %vm2887, %v2793, 0.0
      %v2929 = vadd.f32 %v2791, %v2928
      %2930 = vadd.xlane.f32.xlu0 %v2929
      %v2931 = vpop.xlane.xlu0 %2930
      %v2932 = vsel %vm2887, %v2797, 0.0
      %v2933 = vadd.f32 %v2795, %v2932
      %2934 = vadd.xlane.f32.xlu0 %v2933
      %v2935 = vpop.xlane.xlu0 %2934
      %v2936 = vsel %vm2887, %v2803, 0.0
      %v2937 = vadd.f32 %v2801, %v2936
      %2938 = vadd.xlane.f32.xlu0 %v2937
      %v2939 = vpop.xlane.xlu0 %2938
      %v2940 = vsel %vm2887, %v2807, 0.0
      %v2941 = vadd.f32 %v2805, %v2940
      %2942 = vadd.xlane.f32.xlu0 %v2941
      %v2943 = vpop.xlane.xlu0 %2942
      %v2944 = vsel %vm2887, %v2813, 0.0
      %v2945 = vadd.f32 %v2811, %v2944
      %2946 = vadd.xlane.f32.xlu0 %v2945
      %v2947 = vpop.xlane.xlu0 %2946
      %v2948 = vsel %vm2887, %v2817, 0.0
      %v2949 = vadd.f32 %v2815, %v2948
      %2950 = vadd.xlane.f32.xlu0 %v2949
      %v2951 = vpop.xlane.xlu0 %2950
      %v2952 = vsel %vm2887, %v2823, 0.0
      %v2953 = vadd.f32 %v2821, %v2952
      %2954 = vadd.xlane.f32.xlu0 %v2953
      %v2955 = vpop.xlane.xlu0 %2954
      %v2956 = vsel %vm2887, %v2827, 0.0
      %v2957 = vadd.f32 %v2825, %v2956
      %2958 = vadd.xlane.f32.xlu0 %v2957
      %v2959 = vpop.xlane.xlu0 %2958
      %v2960 = vsel %vm2887, %v2833, 0.0
      %v2961 = vadd.f32 %v2831, %v2960
      %2962 = vadd.xlane.f32.xlu0 %v2961
      %v2963 = vpop.xlane.xlu0 %2962
      %v2964 = vsel %vm2887, %v2837, 0.0
      %v2965 = vadd.f32 %v2835, %v2964
      %2966 = vadd.xlane.f32.xlu0 %v2965
      %v2967 = vpop.xlane.xlu0 %2966
      %v2968 = vsel %vm2887, %v2843, 0.0
      %v2969 = vadd.f32 %v2841, %v2968
      %2970 = vadd.xlane.f32.xlu0 %v2969
      %v2971 = vpop.xlane.xlu0 %2970
      %v2972 = vsel %vm2887, %v2847, 0.0
      %v2973 = vadd.f32 %v2845, %v2972
      %2974 = vadd.xlane.f32.xlu0 %v2973
      %v2975 = vpop.xlane.xlu0 %2974
      %v2976 = vsel %vm2887, %v2853, 0.0
      %v2977 = vadd.f32 %v2851, %v2976
      %2978 = vadd.xlane.f32.xlu0 %v2977
      %v2979 = vpop.xlane.xlu0 %2978
      %v2980 = vsel %vm2887, %v2857, 0.0
      %v2981 = vadd.f32 %v2855, %v2980
      %2982 = vadd.xlane.f32.xlu0 %v2981
      %v2983 = vpop.xlane.xlu0 %2982
      %v2984 = vsel %vm2887, %v2863, 0.0
      %v2985 = vadd.f32 %v2861, %v2984
      %2986 = vadd.xlane.f32.xlu0 %v2985
      %v2987 = vpop.xlane.xlu0 %2986
      %v2988 = vsel %vm2887, %v2867, 0.0
      %v2989 = vadd.f32 %v2865, %v2988
      %2990 = vadd.xlane.f32.xlu0 %v2989
      %v2991 = vpop.xlane.xlu0 %2990
      %v2992 = vsel %vm2887, %v2873, 0.0
      %v2993 = vadd.f32 %v2871, %v2992
      %2994 = vadd.xlane.f32.xlu0 %v2993
      %v2995 = vpop.xlane.xlu0 %2994
      %v2996 = vsel %vm2887, %v2877, 0.0
      %v2997 = vadd.f32 %v2875, %v2996
      %2998 = vadd.xlane.f32.xlu0 %v2997
      %v2999 = vpop.xlane.xlu0 %2998
      %v3000 = vsel %vm2887, %v2883, 0.0
      %v3001 = vadd.f32 %v2881, %v3000
      %3002 = vadd.xlane.f32.xlu0 %v3001
      %v3003 = vpop.xlane.xlu0 %3002
      %v3004 = vmul.f32 %v2891, 0.0051020407
      %v3005 = vmul.f32 %v2895, 0.0051020407
      %v3006 = vmul.f32 %v2899, 0.0051020407
      %v3007 = vmul.f32 %v2903, 0.0051020407
      %v3008 = vmul.f32 %v2907, 0.0051020407
      %v3009 = vmul.f32 %v2911, 0.0051020407
      %v3010 = vmul.f32 %v2915, 0.0051020407
      %v3011 = vmul.f32 %v2919, 0.0051020407
      %v3012 = vmul.f32 %v2923, 0.0051020407
      %v3013 = vmul.f32 %v2927, 0.0051020407
      %v3014 = vmul.f32 %v2931, 0.0051020407
      %v3015 = vmul.f32 %v2935, 0.0051020407
      %v3016 = vmul.f32 %v2939, 0.0051020407
      %v3017 = vmul.f32 %v2943, 0.0051020407
      %v3018 = vmul.f32 %v2947, 0.0051020407
      %v3019 = vmul.f32 %v2951, 0.0051020407
      %v3020 = vmul.f32 %v2955, 0.0051020407
      %v3021 = vmul.f32 %v2959, 0.0051020407
      %v3022 = vmul.f32 %v2963, 0.0051020407
      %v3023 = vmul.f32 %v2967, 0.0051020407
      %v3024 = vmul.f32 %v2971, 0.0051020407
      %v3025 = vmul.f32 %v2975, 0.0051020407
      %v3026 = vmul.f32 %v2979, 0.0051020407
      %v3027 = vmul.f32 %v2983, 0.0051020407
      %v3028 = vmul.f32 %v2987, 0.0051020407
      %v3029 = vmul.f32 %v2991, 0.0051020407
      %v3030 = vmul.f32 %v2995, 0.0051020407
      %v3031 = vmul.f32 %v2999, 0.0051020407
      %v3032 = vmul.f32 %v3003, 0.0051020407
      %v3033 = vsub.f32 %v2741, %v3004
      %v3034 = vsub.f32 %v2743, %v3004
      %v3035 = vsub.f32 %v2745, %v3005
      %v3036 = vsub.f32 %v2747, %v3005
      %v3037 = vsub.f32 %v2751, %v3006
      %v3038 = vsub.f32 %v2753, %v3006
      %v3039 = vsub.f32 %v2755, %v3007
      %v3040 = vsub.f32 %v2757, %v3007
      %v3041 = vsub.f32 %v2761, %v3008
      %v3042 = vsub.f32 %v2763, %v3008
      %v3043 = vsub.f32 %v2765, %v3009
      %v3044 = vsub.f32 %v2767, %v3009
      %v3045 = vsub.f32 %v2771, %v3010
      %v3046 = vsub.f32 %v2773, %v3010
      %v3047 = vsub.f32 %v2775, %v3011
      %v3048 = vsub.f32 %v2777, %v3011
      %v3049 = vsub.f32 %v2781, %v3012
      %v3050 = vsub.f32 %v2783, %v3012
      %v3051 = vsub.f32 %v2785, %v3013
      %v3052 = vsub.f32 %v2787, %v3013
      %v3053 = vsub.f32 %v2791, %v3014
      %v3054 = vsub.f32 %v2793, %v3014
      %v3055 = vsub.f32 %v2795, %v3015
      %v3056 = vsub.f32 %v2797, %v3015
      %v3057 = vsub.f32 %v2801, %v3016
      %v3058 = vsub.f32 %v2803, %v3016
      %v3059 = vsub.f32 %v2805, %v3017
      %v3060 = vsub.f32 %v2807, %v3017
      %v3061 = vsub.f32 %v2811, %v3018
      %v3062 = vsub.f32 %v2813, %v3018
      %v3063 = vsub.f32 %v2815, %v3019
      %v3064 = vsub.f32 %v2817, %v3019
      %v3065 = vsub.f32 %v2821, %v3020
      %v3066 = vsub.f32 %v2823, %v3020
      %v3067 = vsub.f32 %v2825, %v3021
      %v3068 = vsub.f32 %v2827, %v3021
      %v3069 = vsub.f32 %v2831, %v3022
      %v3070 = vsub.f32 %v2833, %v3022
      %v3071 = vsub.f32 %v2835, %v3023
      %v3072 = vsub.f32 %v2837, %v3023
      %v3073 = vsub.f32 %v2841, %v3024
      %v3074 = vsub.f32 %v2843, %v3024
      %v3075 = vsub.f32 %v2845, %v3025
      %v3076 = vsub.f32 %v2847, %v3025
      %v3077 = vsub.f32 %v2851, %v3026
      %v3078 = vsub.f32 %v2853, %v3026
      %v3079 = vsub.f32 %v2855, %v3027
      %v3080 = vsub.f32 %v2857, %v3027
      %v3081 = vsub.f32 %v2861, %v3028
      %v3082 = vsub.f32 %v2863, %v3028
      %v3083 = vsub.f32 %v2865, %v3029
      %v3084 = vsub.f32 %v2867, %v3029
      %v3085 = vsub.f32 %v2871, %v3030
      %v3086 = vsub.f32 %v2873, %v3030
      %v3087 = vsub.f32 %v2875, %v3031
      %v3088 = vsub.f32 %v2877, %v3031
      %v3089 = vsub.f32 %v2881, %v3032
      %v3090 = vsub.f32 %v2883, %v3032
      %v3091 = vmul.f32 %v3033, %v3033
      %v3092 = vmul.f32 %v3034, %v3034
      %v3093 = vmul.f32 %v3035, %v3035
      %v3094 = vmul.f32 %v3036, %v3036
      %v3095 = vmul.f32 %v3037, %v3037
      %v3096 = vmul.f32 %v3038, %v3038
      %v3097 = vmul.f32 %v3039, %v3039
      %v3098 = vmul.f32 %v3040, %v3040
      %v3099 = vmul.f32 %v3041, %v3041
      %v3100 = vmul.f32 %v3042, %v3042
      %v3101 = vmul.f32 %v3043, %v3043
      %v3102 = vmul.f32 %v3044, %v3044
      %v3103 = vmul.f32 %v3045, %v3045
      %v3104 = vmul.f32 %v3046, %v3046
      %v3105 = vmul.f32 %v3047, %v3047
      %v3106 = vmul.f32 %v3048, %v3048
      %v3107 = vmul.f32 %v3049, %v3049
      %v3108 = vmul.f32 %v3050, %v3050
      %v3109 = vmul.f32 %v3051, %v3051
      %v3110 = vmul.f32 %v3052, %v3052
      %v3111 = vmul.f32 %v3053, %v3053
      %v3112 = vmul.f32 %v3054, %v3054
      %v3113 = vmul.f32 %v3055, %v3055
      %v3114 = vmul.f32 %v3056, %v3056
      %v3115 = vmul.f32 %v3057, %v3057
      %v3116 = vmul.f32 %v3058, %v3058
      %v3117 = vmul.f32 %v3059, %v3059
      %v3118 = vmul.f32 %v3060, %v3060
      %v3119 = vmul.f32 %v3061, %v3061
      %v3120 = vmul.f32 %v3062, %v3062
      %v3121 = vmul.f32 %v3063, %v3063
      %v3122 = vmul.f32 %v3064, %v3064
      %v3123 = vmul.f32 %v3065, %v3065
      %v3124 = vmul.f32 %v3066, %v3066
      %v3125 = vmul.f32 %v3067, %v3067
      %v3126 = vmul.f32 %v3068, %v3068
      %v3127 = vmul.f32 %v3069, %v3069
      %v3128 = vmul.f32 %v3070, %v3070
      %v3129 = vmul.f32 %v3071, %v3071
      %v3130 = vmul.f32 %v3072, %v3072
      %v3131 = vmul.f32 %v3073, %v3073
      %v3132 = vmul.f32 %v3074, %v3074
      %v3133 = vmul.f32 %v3075, %v3075
      %v3134 = vmul.f32 %v3076, %v3076
      %v3135 = vmul.f32 %v3077, %v3077
      %v3136 = vmul.f32 %v3078, %v3078
      %v3137 = vmul.f32 %v3079, %v3079
      %v3138 = vmul.f32 %v3080, %v3080
      %v3139 = vmul.f32 %v3081, %v3081
      %v3140 = vmul.f32 %v3082, %v3082
      %v3141 = vmul.f32 %v3083, %v3083
      %v3142 = vmul.f32 %v3084, %v3084
      %v3143 = vmul.f32 %v3085, %v3085
      %v3144 = vmul.f32 %v3086, %v3086
      %v3145 = vmul.f32 %v3087, %v3087
      %v3146 = vmul.f32 %v3088, %v3088
      %v3147 = vmul.f32 %v3089, %v3089
      %v3148 = vmul.f32 %v3090, %v3090
      %v3149 = vsel %vm2887, %v3092, 0.0
      %v3150 = vadd.f32 %v3091, %v3149
      %3151 = vadd.xlane.f32.xlu0 %v3150
      %v3152 = vpop.xlane.xlu0 %3151
      %v3153 = vsel %vm2887, %v3094, 0.0
      %v3154 = vadd.f32 %v3093, %v3153
      %3155 = vadd.xlane.f32.xlu0 %v3154
      %v3156 = vpop.xlane.xlu0 %3155
      %v3157 = vsel %vm2887, %v3096, 0.0
      %v3158 = vadd.f32 %v3095, %v3157
      %3159 = vadd.xlane.f32.xlu0 %v3158
      %v3160 = vpop.xlane.xlu0 %3159
      %v3161 = vsel %vm2887, %v3098, 0.0
      %v3162 = vadd.f32 %v3097, %v3161
      %3163 = vadd.xlane.f32.xlu0 %v3162
      %v3164 = vpop.xlane.xlu0 %3163
      %v3165 = vsel %vm2887, %v3100, 0.0
      %v3166 = vadd.f32 %v3099, %v3165
      %3167 = vadd.xlane.f32.xlu0 %v3166
      %v3168 = vpop.xlane.xlu0 %3167
      %v3169 = vsel %vm2887, %v3102, 0.0
      %v3170 = vadd.f32 %v3101, %v3169
      %3171 = vadd.xlane.f32.xlu0 %v3170
      %v3172 = vpop.xlane.xlu0 %3171
      %v3173 = vsel %vm2887, %v3104, 0.0
      %v3174 = vadd.f32 %v3103, %v3173
      %3175 = vadd.xlane.f32.xlu0 %v3174
      %v3176 = vpop.xlane.xlu0 %3175
      %v3177 = vsel %vm2887, %v3106, 0.0
      %v3178 = vadd.f32 %v3105, %v3177
      %3179 = vadd.xlane.f32.xlu0 %v3178
      %v3180 = vpop.xlane.xlu0 %3179
      %v3181 = vsel %vm2887, %v3108, 0.0
      %v3182 = vadd.f32 %v3107, %v3181
      %3183 = vadd.xlane.f32.xlu0 %v3182
      %v3184 = vpop.xlane.xlu0 %3183
      %v3185 = vsel %vm2887, %v3110, 0.0
      %v3186 = vadd.f32 %v3109, %v3185
      %3187 = vadd.xlane.f32.xlu0 %v3186
      %v3188 = vpop.xlane.xlu0 %3187
      %v3189 = vsel %vm2887, %v3112, 0.0
      %v3190 = vadd.f32 %v3111, %v3189
      %3191 = vadd.xlane.f32.xlu0 %v3190
      %v3192 = vpop.xlane.xlu0 %3191
      %v3193 = vsel %vm2887, %v3114, 0.0
      %v3194 = vadd.f32 %v3113, %v3193
      %3195 = vadd.xlane.f32.xlu0 %v3194
      %v3196 = vpop.xlane.xlu0 %3195
      %v3197 = vsel %vm2887, %v3116, 0.0
      %v3198 = vadd.f32 %v3115, %v3197
      %3199 = vadd.xlane.f32.xlu0 %v3198
      %v3200 = vpop.xlane.xlu0 %3199
      %v3201 = vsel %vm2887, %v3118, 0.0
      %v3202 = vadd.f32 %v3117, %v3201
      %3203 = vadd.xlane.f32.xlu0 %v3202
      %v3204 = vpop.xlane.xlu0 %3203
      %v3205 = vsel %vm2887, %v3120, 0.0
      %v3206 = vadd.f32 %v3119, %v3205
      %3207 = vadd.xlane.f32.xlu0 %v3206
      %v3208 = vpop.xlane.xlu0 %3207
      %v3209 = vsel %vm2887, %v3122, 0.0
      %v3210 = vadd.f32 %v3121, %v3209
      %3211 = vadd.xlane.f32.xlu0 %v3210
      %v3212 = vpop.xlane.xlu0 %3211
      %v3213 = vsel %vm2887, %v3124, 0.0
      %v3214 = vadd.f32 %v3123, %v3213
      %3215 = vadd.xlane.f32.xlu0 %v3214
      %v3216 = vpop.xlane.xlu0 %3215
      %v3217 = vsel %vm2887, %v3126, 0.0
      %v3218 = vadd.f32 %v3125, %v3217
      %3219 = vadd.xlane.f32.xlu0 %v3218
      %v3220 = vpop.xlane.xlu0 %3219
      %v3221 = vsel %vm2887, %v3128, 0.0
      %v3222 = vadd.f32 %v3127, %v3221
      %3223 = vadd.xlane.f32.xlu0 %v3222
      %v3224 = vpop.xlane.xlu0 %3223
      %v3225 = vsel %vm2887, %v3130, 0.0
      %v3226 = vadd.f32 %v3129, %v3225
      %3227 = vadd.xlane.f32.xlu0 %v3226
      %v3228 = vpop.xlane.xlu0 %3227
      %v3229 = vsel %vm2887, %v3132, 0.0
      %v3230 = vadd.f32 %v3131, %v3229
      %3231 = vadd.xlane.f32.xlu0 %v3230
      %v3232 = vpop.xlane.xlu0 %3231
      %v3233 = vsel %vm2887, %v3134, 0.0
      %v3234 = vadd.f32 %v3133, %v3233
      %3235 = vadd.xlane.f32.xlu0 %v3234
      %v3236 = vpop.xlane.xlu0 %3235
      %v3237 = vsel %vm2887, %v3136, 0.0
      %v3238 = vadd.f32 %v3135, %v3237
      %3239 = vadd.xlane.f32.xlu0 %v3238
      %v3240 = vpop.xlane.xlu0 %3239
      %v3241 = vsel %vm2887, %v3138, 0.0
      %v3242 = vadd.f32 %v3137, %v3241
      %3243 = vadd.xlane.f32.xlu0 %v3242
      %v3244 = vpop.xlane.xlu0 %3243
      %v3245 = vsel %vm2887, %v3140, 0.0
      %v3246 = vadd.f32 %v3139, %v3245
      %3247 = vadd.xlane.f32.xlu0 %v3246
      %v3248 = vpop.xlane.xlu0 %3247
      %v3249 = vsel %vm2887, %v3142, 0.0
      %v3250 = vadd.f32 %v3141, %v3249
      %3251 = vadd.xlane.f32.xlu0 %v3250
      %v3252 = vpop.xlane.xlu0 %3251
      %v3253 = vsel %vm2887, %v3144, 0.0
      %v3254 = vadd.f32 %v3143, %v3253
      %3255 = vadd.xlane.f32.xlu0 %v3254
      %v3256 = vpop.xlane.xlu0 %3255
      %v3257 = vsel %vm2887, %v3146, 0.0
      %v3258 = vadd.f32 %v3145, %v3257
      %3259 = vadd.xlane.f32.xlu0 %v3258
      %v3260 = vpop.xlane.xlu0 %3259
      %v3261 = vsel %vm2887, %v3148, 0.0
      %v3262 = vadd.f32 %v3147, %v3261
      %3263 = vadd.xlane.f32.xlu0 %v3262
      %v3264 = vpop.xlane.xlu0 %3263
      %v3265 = vmul.f32 %v3152, 0.0051020407
      %v3266 = vmul.f32 %v3156, 0.0051020407
      %v3267 = vmul.f32 %v3160, 0.0051020407
      %v3268 = vmul.f32 %v3164, 0.0051020407
      %v3269 = vmul.f32 %v3168, 0.0051020407
      %v3270 = vmul.f32 %v3172, 0.0051020407
      %v3271 = vmul.f32 %v3176, 0.0051020407
      %v3272 = vmul.f32 %v3180, 0.0051020407
      %v3273 = vmul.f32 %v3184, 0.0051020407
      %v3274 = vmul.f32 %v3188, 0.0051020407
      %v3275 = vmul.f32 %v3192, 0.0051020407
      %v3276 = vmul.f32 %v3196, 0.0051020407
      %v3277 = vmul.f32 %v3200, 0.0051020407
      %v3278 = vmul.f32 %v3204, 0.0051020407
      %v3279 = vmul.f32 %v3208, 0.0051020407
      %v3280 = vmul.f32 %v3212, 0.0051020407
      %v3281 = vmul.f32 %v3216, 0.0051020407
      %v3282 = vmul.f32 %v3220, 0.0051020407
      %v3283 = vmul.f32 %v3224, 0.0051020407
      %v3284 = vmul.f32 %v3228, 0.0051020407
      %v3285 = vmul.f32 %v3232, 0.0051020407
      %v3286 = vmul.f32 %v3236, 0.0051020407
      %v3287 = vmul.f32 %v3240, 0.0051020407
      %v3288 = vmul.f32 %v3244, 0.0051020407
      %v3289 = vmul.f32 %v3248, 0.0051020407
      %v3290 = vmul.f32 %v3252, 0.0051020407
      %v3291 = vmul.f32 %v3256, 0.0051020407
      %v3292 = vmul.f32 %v3260, 0.0051020407
      %v3293 = vmul.f32 %v3264, 0.0051020407
      %v3294 = vld [vmem:[%s235] sm:$0xff]
      %v3295 = vld [vmem:[%s235 + $0x8] sm:$0xff]
      %v3296 = vld [vmem:[%s235 + $0x10] sm:$0xff]
      %v3297 = vld [vmem:[%s235 + $0x18] sm:$0xff]
      %v3298 = vld [vmem:[%s235 + $0x20] sm:$0xff]
      %v3299 = vld [vmem:[%s235 + $0x28] sm:$0xff]
      %v3300 = vld [vmem:[%s235 + $0x30] sm:$0xff]
      %v3301 = vld [vmem:[%s235 + $0x38] sm:$0xff]
      %v3302 = vld [vmem:[%s235 + $0x40] sm:$0xff]
      %v3303 = vld [vmem:[%s235 + $0x48] sm:$0xff]
      %v3304 = vld [vmem:[%s235 + $0x50] sm:$0xff]
      %v3305 = vld [vmem:[%s235 + $0x58] sm:$0xff]
      %v3306 = vld [vmem:[%s235 + $0x60] sm:$0xff]
      %v3307 = vld [vmem:[%s235 + $0x68] sm:$0xff]
      %v3308 = vld [vmem:[%s235 + $0x70] sm:$0xff]
      %v3309 = vld [vmem:[%s235 + $0x78] sm:$0xff]
      %v3310 = vld [vmem:[%s235 + $0x80] sm:$0xff]
      %v3311 = vld [vmem:[%s235 + $0x88] sm:$0xff]
      %v3312 = vld [vmem:[%s235 + $0x90] sm:$0xff]
      %v3313 = vld [vmem:[%s235 + $0x98] sm:$0xff]
      %v3314 = vld [vmem:[%s235 + $0xa0] sm:$0xff]
      %v3315 = vld [vmem:[%s235 + $0xa8] sm:$0xff]
      %v3316 = vld [vmem:[%s235 + $0xb0] sm:$0xff]
      %v3317 = vld [vmem:[%s235 + $0xb8] sm:$0xff]
      %v3318 = vld [vmem:[%s235 + $0xc0] sm:$0xff]
      %v3319 = vld [vmem:[%s235 + $0xc8] sm:$0xff]
      %v3320 = vld [vmem:[%s235 + $0xd0] sm:$0xff]
      %v3321 = vld [vmem:[%s235 + $0xd8] sm:$0xff]
      %v3322 = vld [vmem:[%s235 + $0xe0] sm:$0xff]
      %v3323 = vadd.f32 %v3265, 1e-05
      %v3324 = vadd.f32 %v3266, 1e-05
      %v3325 = vadd.f32 %v3267, 1e-05
      %v3326 = vadd.f32 %v3268, 1e-05
      %v3327 = vadd.f32 %v3269, 1e-05
      %v3328 = vadd.f32 %v3270, 1e-05
      %v3329 = vadd.f32 %v3271, 1e-05
      %v3330 = vadd.f32 %v3272, 1e-05
      %v3331 = vadd.f32 %v3273, 1e-05
      %v3332 = vadd.f32 %v3274, 1e-05
      %v3333 = vadd.f32 %v3275, 1e-05
      %v3334 = vadd.f32 %v3276, 1e-05
      %v3335 = vadd.f32 %v3277, 1e-05
      %v3336 = vadd.f32 %v3278, 1e-05
      %v3337 = vadd.f32 %v3279, 1e-05
      %v3338 = vadd.f32 %v3280, 1e-05
      %v3339 = vadd.f32 %v3281, 1e-05
      %v3340 = vadd.f32 %v3282, 1e-05
      %v3341 = vadd.f32 %v3283, 1e-05
      %v3342 = vadd.f32 %v3284, 1e-05
      %v3343 = vadd.f32 %v3285, 1e-05
      %v3344 = vadd.f32 %v3286, 1e-05
      %v3345 = vadd.f32 %v3287, 1e-05
      %v3346 = vadd.f32 %v3288, 1e-05
      %v3347 = vadd.f32 %v3289, 1e-05
      %v3348 = vadd.f32 %v3290, 1e-05
      %v3349 = vadd.f32 %v3291, 1e-05
      %v3350 = vadd.f32 %v3292, 1e-05
      %v3351 = vadd.f32 %v3293, 1e-05
      %v3352 = vrsqrt.pop %v3323
      %v3353 = vrsqrt.pop %v3324
      %v3354 = vrsqrt.pop %v3325
      %v3355 = vrsqrt.pop %v3326
      %v3356 = vrsqrt.pop %v3327
      %v3357 = vrsqrt.pop %v3328
      %v3358 = vrsqrt.pop %v3329
      %v3359 = vrsqrt.pop %v3330
      %v3360 = vrsqrt.pop %v3331
      %v3361 = vrsqrt.pop %v3332
      %v3362 = vrsqrt.pop %v3333
      %v3363 = vrsqrt.pop %v3334
      %v3364 = vrsqrt.pop %v3335
      %v3365 = vrsqrt.pop %v3336
      %v3366 = vrsqrt.pop %v3337
      %v3367 = vrsqrt.pop %v3338
      %v3368 = vrsqrt.pop %v3339
      %v3369 = vrsqrt.pop %v3340
      %v3370 = vrsqrt.pop %v3341
      %v3371 = vrsqrt.pop %v3342
      %v3372 = vrsqrt.pop %v3343
      %v3373 = vrsqrt.pop %v3344
      %v3374 = vrsqrt.pop %v3345
      %v3375 = vrsqrt.pop %v3346
      %v3376 = vrsqrt.pop %v3347
      %v3377 = vrsqrt.pop %v3348
      %v3378 = vrsqrt.pop %v3349
      %v3379 = vrsqrt.pop %v3350
      %v3380 = vrsqrt.pop %v3351
      %v3381 = vmul.f32 %v3294, %v3352
      %v3382 = vmul.f32 %v3295, %v3353
      %v3383 = vmul.f32 %v3296, %v3354
      %v3384 = vmul.f32 %v3297, %v3355
      %v3385 = vmul.f32 %v3298, %v3356
      %v3386 = vmul.f32 %v3299, %v3357
      %v3387 = vmul.f32 %v3300, %v3358
      %v3388 = vmul.f32 %v3301, %v3359
      %v3389 = vmul.f32 %v3302, %v3360
      %v3390 = vmul.f32 %v3303, %v3361
      %v3391 = vmul.f32 %v3304, %v3362
      %v3392 = vmul.f32 %v3305, %v3363
      %v3393 = vmul.f32 %v3306, %v3364
      %v3394 = vmul.f32 %v3307, %v3365
      %v3395 = vmul.f32 %v3308, %v3366
      %v3396 = vmul.f32 %v3309, %v3367
      %v3397 = vmul.f32 %v3310, %v3368
      %v3398 = vmul.f32 %v3311, %v3369
      %v3399 = vmul.f32 %v3312, %v3370
      %v3400 = vmul.f32 %v3313, %v3371
      %v3401 = vmul.f32 %v3314, %v3372
      %v3402 = vmul.f32 %v3315, %v3373
      %v3403 = vmul.f32 %v3316, %v3374
      %v3404 = vmul.f32 %v3317, %v3375
      %v3405 = vmul.f32 %v3318, %v3376
      %v3406 = vmul.f32 %v3319, %v3377
      %v3407 = vmul.f32 %v3320, %v3378
      %v3408 = vmul.f32 %v3321, %v3379
      %v3409 = vmul.f32 %v3322, %v3380
      %v3410 = vld [vmem:[%s241] sm:$0xff]
      %v3411 = vld [vmem:[%s241 + $0x8] sm:$0xff]
      %v3412 = vld [vmem:[%s241 + $0x10] sm:$0xff]
      %v3413 = vld [vmem:[%s241 + $0x18] sm:$0xff]
      %v3414 = vld [vmem:[%s241 + $0x20] sm:$0xff]
      %v3415 = vld [vmem:[%s241 + $0x28] sm:$0xff]
      %v3416 = vld [vmem:[%s241 + $0x30] sm:$0xff]
      %v3417 = vld [vmem:[%s241 + $0x38] sm:$0xff]
      %v3418 = vld [vmem:[%s241 + $0x40] sm:$0xff]
      %v3419 = vld [vmem:[%s241 + $0x48] sm:$0xff]
      %v3420 = vld [vmem:[%s241 + $0x50] sm:$0xff]
      %v3421 = vld [vmem:[%s241 + $0x58] sm:$0xff]
      %v3422 = vld [vmem:[%s241 + $0x60] sm:$0xff]
      %v3423 = vld [vmem:[%s241 + $0x68] sm:$0xff]
      %v3424 = vld [vmem:[%s241 + $0x70] sm:$0xff]
      %v3425 = vld [vmem:[%s241 + $0x78] sm:$0xff]
      %v3426 = vld [vmem:[%s241 + $0x80] sm:$0xff]
      %v3427 = vld [vmem:[%s241 + $0x88] sm:$0xff]
      %v3428 = vld [vmem:[%s241 + $0x90] sm:$0xff]
      %v3429 = vld [vmem:[%s241 + $0x98] sm:$0xff]
      %v3430 = vld [vmem:[%s241 + $0xa0] sm:$0xff]
      %v3431 = vld [vmem:[%s241 + $0xa8] sm:$0xff]
      %v3432 = vld [vmem:[%s241 + $0xb0] sm:$0xff]
      %v3433 = vld [vmem:[%s241 + $0xb8] sm:$0xff]
      %v3434 = vld [vmem:[%s241 + $0xc0] sm:$0xff]
      %v3435 = vld [vmem:[%s241 + $0xc8] sm:$0xff]
      %v3436 = vld [vmem:[%s241 + $0xd0] sm:$0xff]
      %v3437 = vld [vmem:[%s241 + $0xd8] sm:$0xff]
      %v3438 = vld [vmem:[%s241 + $0xe0] sm:$0xff]
      %v3439 = vmul.f32 %v3004, %v3381
      %v3440 = vmul.f32 %v3005, %v3382
      %v3441 = vmul.f32 %v3006, %v3383
      %v3442 = vmul.f32 %v3007, %v3384
      %v3443 = vmul.f32 %v3008, %v3385
      %v3444 = vmul.f32 %v3009, %v3386
      %v3445 = vmul.f32 %v3010, %v3387
      %v3446 = vmul.f32 %v3011, %v3388
      %v3447 = vmul.f32 %v3012, %v3389
      %v3448 = vmul.f32 %v3013, %v3390
      %v3449 = vmul.f32 %v3014, %v3391
      %v3450 = vmul.f32 %v3015, %v3392
      %v3451 = vmul.f32 %v3016, %v3393
      %v3452 = vmul.f32 %v3017, %v3394
      %v3453 = vmul.f32 %v3018, %v3395
      %v3454 = vmul.f32 %v3019, %v3396
      %v3455 = vmul.f32 %v3020, %v3397
      %v3456 = vmul.f32 %v3021, %v3398
      %v3457 = vmul.f32 %v3022, %v3399
      %v3458 = vmul.f32 %v3023, %v3400
      %v3459 = vmul.f32 %v3024, %v3401
      %v3460 = vmul.f32 %v3025, %v3402
      %v3461 = vmul.f32 %v3026, %v3403
      %v3462 = vmul.f32 %v3027, %v3404
      %v3463 = vmul.f32 %v3028, %v3405
      %v3464 = vmul.f32 %v3029, %v3406
      %v3465 = vmul.f32 %v3030, %v3407
      %v3466 = vmul.f32 %v3031, %v3408
      %v3467 = vmul.f32 %v3032, %v3409
      %v3468 = vsub.f32 %v3410, %v3439
      %v3469 = vsub.f32 %v3411, %v3440
      %v3470 = vsub.f32 %v3412, %v3441
      %v3471 = vsub.f32 %v3413, %v3442
      %v3472 = vsub.f32 %v3414, %v3443
      %v3473 = vsub.f32 %v3415, %v3444
      %v3474 = vsub.f32 %v3416, %v3445
      %v3475 = vsub.f32 %v3417, %v3446
      %v3476 = vsub.f32 %v3418, %v3447
      %v3477 = vsub.f32 %v3419, %v3448
      %v3478 = vsub.f32 %v3420, %v3449
      %v3479 = vsub.f32 %v3421, %v3450
      %v3480 = vsub.f32 %v3422, %v3451
      %v3481 = vsub.f32 %v3423, %v3452
      %v3482 = vsub.f32 %v3424, %v3453
      %v3483 = vsub.f32 %v3425, %v3454
      %v3484 = vsub.f32 %v3426, %v3455
      %v3485 = vsub.f32 %v3427, %v3456
      %v3486 = vsub.f32 %v3428, %v3457
      %v3487 = vsub.f32 %v3429, %v3458
      %v3488 = vsub.f32 %v3430, %v3459
      %v3489 = vsub.f32 %v3431, %v3460
      %v3490 = vsub.f32 %v3432, %v3461
      %v3491 = vsub.f32 %v3433, %v3462
      %v3492 = vsub.f32 %v3434, %v3463
      %v3493 = vsub.f32 %v3435, %v3464
      %v3494 = vsub.f32 %v3436, %v3465
      %v3495 = vsub.f32 %v3437, %v3466
      %v3496 = vsub.f32 %v3438, %v3467
      %3498 = vset.pattern.permute.xlu0 0
      %3499 = vperm.xlu0 %3498, %v3381
      %v3500 = vpop.permute.xlu0 %3499
      %3503 = vset.pattern.permute.xlu0 0
      %3504 = vperm.xlu0 %3503, %v3382
      %v3505 = vpop.permute.xlu0 %3504
      %3508 = vset.pattern.permute.xlu0 0
      %3509 = vperm.xlu0 %3508, %v3383
      %v3510 = vpop.permute.xlu0 %3509
      %3513 = vset.pattern.permute.xlu0 0
      %3514 = vperm.xlu0 %3513, %v3384
      %v3515 = vpop.permute.xlu0 %3514
      %3518 = vset.pattern.permute.xlu0 0
      %3519 = vperm.xlu0 %3518, %v3385
      %v3520 = vpop.permute.xlu0 %3519
      %3523 = vset.pattern.permute.xlu0 0
      %3524 = vperm.xlu0 %3523, %v3386
      %v3525 = vpop.permute.xlu0 %3524
      %3528 = vset.pattern.permute.xlu0 0
      %3529 = vperm.xlu0 %3528, %v3387
      %v3530 = vpop.permute.xlu0 %3529
      %3533 = vset.pattern.permute.xlu0 0
      %3534 = vperm.xlu0 %3533, %v3388
      %v3535 = vpop.permute.xlu0 %3534
      %3538 = vset.pattern.permute.xlu0 0
      %3539 = vperm.xlu0 %3538, %v3389
      %v3540 = vpop.permute.xlu0 %3539
      %3543 = vset.pattern.permute.xlu0 0
      %3544 = vperm.xlu0 %3543, %v3390
      %v3545 = vpop.permute.xlu0 %3544
      %3548 = vset.pattern.permute.xlu0 0
      %3549 = vperm.xlu0 %3548, %v3391
      %v3550 = vpop.permute.xlu0 %3549
      %3553 = vset.pattern.permute.xlu0 0
      %3554 = vperm.xlu0 %3553, %v3392
      %v3555 = vpop.permute.xlu0 %3554
      %3558 = vset.pattern.permute.xlu0 0
      %3559 = vperm.xlu0 %3558, %v3393
      %v3560 = vpop.permute.xlu0 %3559
      %3563 = vset.pattern.permute.xlu0 0
      %3564 = vperm.xlu0 %3563, %v3394
      %v3565 = vpop.permute.xlu0 %3564
      %3568 = vset.pattern.permute.xlu0 0
      %3569 = vperm.xlu0 %3568, %v3395
      %v3570 = vpop.permute.xlu0 %3569
      %3573 = vset.pattern.permute.xlu0 0
      %3574 = vperm.xlu0 %3573, %v3396
      %v3575 = vpop.permute.xlu0 %3574
      %3578 = vset.pattern.permute.xlu0 0
      %3579 = vperm.xlu0 %3578, %v3397
      %v3580 = vpop.permute.xlu0 %3579
      %3583 = vset.pattern.permute.xlu0 0
      %3584 = vperm.xlu0 %3583, %v3398
      %v3585 = vpop.permute.xlu0 %3584
      %3588 = vset.pattern.permute.xlu0 0
      %3589 = vperm.xlu0 %3588, %v3399
      %v3590 = vpop.permute.xlu0 %3589
      %3593 = vset.pattern.permute.xlu0 0
      %3594 = vperm.xlu0 %3593, %v3400
      %v3595 = vpop.permute.xlu0 %3594
      %3598 = vset.pattern.permute.xlu0 0
      %3599 = vperm.xlu0 %3598, %v3401
      %v3600 = vpop.permute.xlu0 %3599
      %3603 = vset.pattern.permute.xlu0 0
      %3604 = vperm.xlu0 %3603, %v3402
      %v3605 = vpop.permute.xlu0 %3604
      %3608 = vset.pattern.permute.xlu0 0
      %3609 = vperm.xlu0 %3608, %v3403
      %v3610 = vpop.permute.xlu0 %3609
      %3613 = vset.pattern.permute.xlu0 0
      %3614 = vperm.xlu0 %3613, %v3404
      %v3615 = vpop.permute.xlu0 %3614
      %3618 = vset.pattern.permute.xlu0 0
      %3619 = vperm.xlu0 %3618, %v3405
      %v3620 = vpop.permute.xlu0 %3619
      %3623 = vset.pattern.permute.xlu0 0
      %3624 = vperm.xlu0 %3623, %v3406
      %v3625 = vpop.permute.xlu0 %3624
      %3628 = vset.pattern.permute.xlu0 0
      %3629 = vperm.xlu0 %3628, %v3407
      %v3630 = vpop.permute.xlu0 %3629
      %3633 = vset.pattern.permute.xlu0 0
      %3634 = vperm.xlu0 %3633, %v3408
      %v3635 = vpop.permute.xlu0 %3634
      %3638 = vset.pattern.permute.xlu0 0
      %3639 = vperm.xlu0 %3638, %v3409
      %v3640 = vpop.permute.xlu0 %3639
      %v3642 = vmul.f32 %v2741, %v3500
      %v3643 = vmul.f32 %v2743, %v3500
      %v3644 = vmul.f32 %v2745, %v3505
      %v3645 = vmul.f32 %v2747, %v3505
      %v3646 = vmul.f32 %v2751, %v3510
      %v3647 = vmul.f32 %v2753, %v3510
      %v3648 = vmul.f32 %v2755, %v3515
      %v3649 = vmul.f32 %v2757, %v3515
      %v3650 = vmul.f32 %v2761, %v3520
      %v3651 = vmul.f32 %v2763, %v3520
      %v3652 = vmul.f32 %v2765, %v3525
      %v3653 = vmul.f32 %v2767, %v3525
      %v3654 = vmul.f32 %v2771, %v3530
      %v3655 = vmul.f32 %v2773, %v3530
      %v3656 = vmul.f32 %v2775, %v3535
      %v3657 = vmul.f32 %v2777, %v3535
      %v3658 = vmul.f32 %v2781, %v3540
      %v3659 = vmul.f32 %v2783, %v3540
      %v3660 = vmul.f32 %v2785, %v3545
      %v3661 = vmul.f32 %v2787, %v3545
      %v3662 = vmul.f32 %v2791, %v3550
      %v3663 = vmul.f32 %v2793, %v3550
      %v3664 = vmul.f32 %v2795, %v3555
      %v3665 = vmul.f32 %v2797, %v3555
      %v3666 = vmul.f32 %v2801, %v3560
      %v3667 = vmul.f32 %v2803, %v3560
      %v3668 = vmul.f32 %v2805, %v3565
      %v3669 = vmul.f32 %v2807, %v3565
      %v3670 = vmul.f32 %v2811, %v3570
      %v3671 = vmul.f32 %v2813, %v3570
      %v3672 = vmul.f32 %v2815, %v3575
      %v3673 = vmul.f32 %v2817, %v3575
      %v3674 = vmul.f32 %v2821, %v3580
      %v3675 = vmul.f32 %v2823, %v3580
      %v3676 = vmul.f32 %v2825, %v3585
      %v3677 = vmul.f32 %v2827, %v3585
      %v3678 = vmul.f32 %v2831, %v3590
      %v3679 = vmul.f32 %v2833, %v3590
      %v3680 = vmul.f32 %v2835, %v3595
      %v3681 = vmul.f32 %v2837, %v3595
      %v3682 = vmul.f32 %v2841, %v3600
      %v3683 = vmul.f32 %v2843, %v3600
      %v3684 = vmul.f32 %v2845, %v3605
      %v3685 = vmul.f32 %v2847, %v3605
      %v3686 = vmul.f32 %v2851, %v3610
      %v3687 = vmul.f32 %v2853, %v3610
      %v3688 = vmul.f32 %v2855, %v3615
      %v3689 = vmul.f32 %v2857, %v3615
      %v3690 = vmul.f32 %v2861, %v3620
      %v3691 = vmul.f32 %v2863, %v3620
      %v3692 = vmul.f32 %v2865, %v3625
      %v3693 = vmul.f32 %v2867, %v3625
      %v3694 = vmul.f32 %v2871, %v3630
      %v3695 = vmul.f32 %v2873, %v3630
      %v3696 = vmul.f32 %v2875, %v3635
      %v3697 = vmul.f32 %v2877, %v3635
      %v3698 = vmul.f32 %v2881, %v3640
      %v3699 = vmul.f32 %v2883, %v3640
      %3701 = vset.pattern.permute.xlu0 0
      %3702 = vperm.xlu0 %3701, %v3468
      %v3703 = vpop.permute.xlu0 %3702
      %3706 = vset.pattern.permute.xlu0 0
      %3707 = vperm.xlu0 %3706, %v3469
      %v3708 = vpop.permute.xlu0 %3707
      %3711 = vset.pattern.permute.xlu0 0
      %3712 = vperm.xlu0 %3711, %v3470
      %v3713 = vpop.permute.xlu0 %3712
      %3716 = vset.pattern.permute.xlu0 0
      %3717 = vperm.xlu0 %3716, %v3471
      %v3718 = vpop.permute.xlu0 %3717
      %3721 = vset.pattern.permute.xlu0 0
      %3722 = vperm.xlu0 %3721, %v3472
      %v3723 = vpop.permute.xlu0 %3722
      %3726 = vset.pattern.permute.xlu0 0
      %3727 = vperm.xlu0 %3726, %v3473
      %v3728 = vpop.permute.xlu0 %3727
      %3731 = vset.pattern.permute.xlu0 0
      %3732 = vperm.xlu0 %3731, %v3474
      %v3733 = vpop.permute.xlu0 %3732
      %3736 = vset.pattern.permute.xlu0 0
      %3737 = vperm.xlu0 %3736, %v3475
      %v3738 = vpop.permute.xlu0 %3737
      %3741 = vset.pattern.permute.xlu0 0
      %3742 = vperm.xlu0 %3741, %v3476
      %v3743 = vpop.permute.xlu0 %3742
      %3746 = vset.pattern.permute.xlu0 0
      %3747 = vperm.xlu0 %3746, %v3477
      %v3748 = vpop.permute.xlu0 %3747
      %3751 = vset.pattern.permute.xlu0 0
      %3752 = vperm.xlu0 %3751, %v3478
      %v3753 = vpop.permute.xlu0 %3752
      %3756 = vset.pattern.permute.xlu0 0
      %3757 = vperm.xlu0 %3756, %v3479
      %v3758 = vpop.permute.xlu0 %3757
      %3761 = vset.pattern.permute.xlu0 0
      %3762 = vperm.xlu0 %3761, %v3480
      %v3763 = vpop.permute.xlu0 %3762
      %3766 = vset.pattern.permute.xlu0 0
      %3767 = vperm.xlu0 %3766, %v3481
      %v3768 = vpop.permute.xlu0 %3767
      %3771 = vset.pattern.permute.xlu0 0
      %3772 = vperm.xlu0 %3771, %v3482
      %v3773 = vpop.permute.xlu0 %3772
      %3776 = vset.pattern.permute.xlu0 0
      %3777 = vperm.xlu0 %3776, %v3483
      %v3778 = vpop.permute.xlu0 %3777
      %3781 = vset.pattern.permute.xlu0 0
      %3782 = vperm.xlu0 %3781, %v3484
      %v3783 = vpop.permute.xlu0 %3782
      %3786 = vset.pattern.permute.xlu0 0
      %3787 = vperm.xlu0 %3786, %v3485
      %v3788 = vpop.permute.xlu0 %3787
      %3791 = vset.pattern.permute.xlu0 0
      %3792 = vperm.xlu0 %3791, %v3486
      %v3793 = vpop.permute.xlu0 %3792
      %3796 = vset.pattern.permute.xlu0 0
      %3797 = vperm.xlu0 %3796, %v3487
      %v3798 = vpop.permute.xlu0 %3797
      %3801 = vset.pattern.permute.xlu0 0
      %3802 = vperm.xlu0 %3801, %v3488
      %v3803 = vpop.permute.xlu0 %3802
      %3806 = vset.pattern.permute.xlu0 0
      %3807 = vperm.xlu0 %3806, %v3489
      %v3808 = vpop.permute.xlu0 %3807
      %3811 = vset.pattern.permute.xlu0 0
      %3812 = vperm.xlu0 %3811, %v3490
      %v3813 = vpop.permute.xlu0 %3812
      %3816 = vset.pattern.permute.xlu0 0
      %3817 = vperm.xlu0 %3816, %v3491
      %v3818 = vpop.permute.xlu0 %3817
      %3821 = vset.pattern.permute.xlu0 0
      %3822 = vperm.xlu0 %3821, %v3492
      %v3823 = vpop.permute.xlu0 %3822
      %3826 = vset.pattern.permute.xlu0 0
      %3827 = vperm.xlu0 %3826, %v3493
      %v3828 = vpop.permute.xlu0 %3827
      %3831 = vset.pattern.permute.xlu0 0
      %3832 = vperm.xlu0 %3831, %v3494
      %v3833 = vpop.permute.xlu0 %3832
      %3836 = vset.pattern.permute.xlu0 0
      %3837 = vperm.xlu0 %3836, %v3495
      %v3838 = vpop.permute.xlu0 %3837
      %3841 = vset.pattern.permute.xlu0 0
      %3842 = vperm.xlu0 %3841, %v3496
      %v3843 = vpop.permute.xlu0 %3842
      %v3845 = vadd.f32 %v3642, %v3703
      %v3846 = vadd.f32 %v3643, %v3703
      %v3847 = vadd.f32 %v3644, %v3708
      %v3848 = vadd.f32 %v3645, %v3708
      %v3849 = vadd.f32 %v3646, %v3713
      %v3850 = vadd.f32 %v3647, %v3713
      %v3851 = vadd.f32 %v3648, %v3718
      %v3852 = vadd.f32 %v3649, %v3718
      %v3853 = vadd.f32 %v3650, %v3723
      %v3854 = vadd.f32 %v3651, %v3723
      %v3855 = vadd.f32 %v3652, %v3728
      %v3856 = vadd.f32 %v3653, %v3728
      %v3857 = vadd.f32 %v3654, %v3733
      %v3858 = vadd.f32 %v3655, %v3733
      %v3859 = vadd.f32 %v3656, %v3738
      %v3860 = vadd.f32 %v3657, %v3738
      %v3861 = vadd.f32 %v3658, %v3743
      %v3862 = vadd.f32 %v3659, %v3743
      %v3863 = vadd.f32 %v3660, %v3748
      %v3864 = vadd.f32 %v3661, %v3748
      %v3865 = vadd.f32 %v3662, %v3753
      %v3866 = vadd.f32 %v3663, %v3753
      %v3867 = vadd.f32 %v3664, %v3758
      %v3868 = vadd.f32 %v3665, %v3758
      %v3869 = vadd.f32 %v3666, %v3763
      %v3870 = vadd.f32 %v3667, %v3763
      %v3871 = vadd.f32 %v3668, %v3768
      %v3872 = vadd.f32 %v3669, %v3768
      %v3873 = vadd.f32 %v3670, %v3773
      %v3874 = vadd.f32 %v3671, %v3773
      %v3875 = vadd.f32 %v3672, %v3778
      %v3876 = vadd.f32 %v3673, %v3778
      %v3877 = vadd.f32 %v3674, %v3783
      %v3878 = vadd.f32 %v3675, %v3783
      %v3879 = vadd.f32 %v3676, %v3788
      %v3880 = vadd.f32 %v3677, %v3788
      %v3881 = vadd.f32 %v3678, %v3793
      %v3882 = vadd.f32 %v3679, %v3793
      %v3883 = vadd.f32 %v3680, %v3798
      %v3884 = vadd.f32 %v3681, %v3798
      %v3885 = vadd.f32 %v3682, %v3803
      %v3886 = vadd.f32 %v3683, %v3803
      %v3887 = vadd.f32 %v3684, %v3808
      %v3888 = vadd.f32 %v3685, %v3808
      %v3889 = vadd.f32 %v3686, %v3813
      %v3890 = vadd.f32 %v3687, %v3813
      %v3891 = vadd.f32 %v3688, %v3818
      %v3892 = vadd.f32 %v3689, %v3818
      %v3893 = vadd.f32 %v3690, %v3823
      %v3894 = vadd.f32 %v3691, %v3823
      %v3895 = vadd.f32 %v3692, %v3828
      %v3896 = vadd.f32 %v3693, %v3828
      %v3897 = vadd.f32 %v3694, %v3833
      %v3898 = vadd.f32 %v3695, %v3833
      %v3899 = vadd.f32 %v3696, %v3838
      %v3900 = vadd.f32 %v3697, %v3838
      %v3901 = vadd.f32 %v3698, %v3843
      %v3902 = vadd.f32 %v3699, %v3843
      %3903 = vst [vmem:[%s248] sm:$0xff] %v3845
      %3904 = vst.msk [vmem:[%s248 + $0x8] sm:$0xff] %vm2887, %v3846
      %3905 = vst [vmem:[%s248 + $0x10] sm:$0xff] %v3847
      %3906 = vst.msk [vmem:[%s248 + $0x18] sm:$0xff] %vm2887, %v3848
      %3907 = vst [vmem:[%s248 + $0x20] sm:$0xff] %v3849
      %3908 = vst.msk [vmem:[%s248 + $0x28] sm:$0xff] %vm2887, %v3850
      %3909 = vst [vmem:[%s248 + $0x30] sm:$0xff] %v3851
      %3910 = vst.msk [vmem:[%s248 + $0x38] sm:$0xff] %vm2887, %v3852
      %3911 = vst [vmem:[%s248 + $0x40] sm:$0xff] %v3853
      %3912 = vst.msk [vmem:[%s248 + $0x48] sm:$0xff] %vm2887, %v3854
      %3913 = vst [vmem:[%s248 + $0x50] sm:$0xff] %v3855
      %3914 = vst.msk [vmem:[%s248 + $0x58] sm:$0xff] %vm2887, %v3856
      %3915 = vst [vmem:[%s248 + $0x60] sm:$0xff] %v3857
      %3916 = vst.msk [vmem:[%s248 + $0x68] sm:$0xff] %vm2887, %v3858
      %3917 = vst [vmem:[%s248 + $0x70] sm:$0xff] %v3859
      %3918 = vst.msk [vmem:[%s248 + $0x78] sm:$0xff] %vm2887, %v3860
      %3919 = vst [vmem:[%s248 + $0x80] sm:$0xff] %v3861
      %3920 = vst.msk [vmem:[%s248 + $0x88] sm:$0xff] %vm2887, %v3862
      %3921 = vst [vmem:[%s248 + $0x90] sm:$0xff] %v3863
      %3922 = vst.msk [vmem:[%s248 + $0x98] sm:$0xff] %vm2887, %v3864
      %3923 = vst [vmem:[%s248 + $0xa0] sm:$0xff] %v3865
      %3924 = vst.msk [vmem:[%s248 + $0xa8] sm:$0xff] %vm2887, %v3866
      %3925 = vst [vmem:[%s248 + $0xb0] sm:$0xff] %v3867
      %3926 = vst.msk [vmem:[%s248 + $0xb8] sm:$0xff] %vm2887, %v3868
      %3927 = vst [vmem:[%s248 + $0xc0] sm:$0xff] %v3869
      %3928 = vst.msk [vmem:[%s248 + $0xc8] sm:$0xff] %vm2887, %v3870
      %3929 = vst [vmem:[%s248 + $0xd0] sm:$0xff] %v3871
      %3930 = vst.msk [vmem:[%s248 + $0xd8] sm:$0xff] %vm2887, %v3872
      %3931 = vst [vmem:[%s248 + $0xe0] sm:$0xff] %v3873
      %3932 = vst.msk [vmem:[%s248 + $0xe8] sm:$0xff] %vm2887, %v3874
      %3933 = vst [vmem:[%s248 + $0xf0] sm:$0xff] %v3875
      %3934 = vst.msk [vmem:[%s248 + $0xf8] sm:$0xff] %vm2887, %v3876
      %3935 = vst [vmem:[%s248 + $0x100] sm:$0xff] %v3877
      %3936 = vst.msk [vmem:[%s248 + $0x108] sm:$0xff] %vm2887, %v3878
      %3937 = vst [vmem:[%s248 + $0x110] sm:$0xff] %v3879
      %3938 = vst.msk [vmem:[%s248 + $0x118] sm:$0xff] %vm2887, %v3880
      %3939 = vst [vmem:[%s248 + $0x120] sm:$0xff] %v3881
      %3940 = vst.msk [vmem:[%s248 + $0x128] sm:$0xff] %vm2887, %v3882
      %3941 = vst [vmem:[%s248 + $0x130] sm:$0xff] %v3883
      %3942 = vst.msk [vmem:[%s248 + $0x138] sm:$0xff] %vm2887, %v3884
      %3943 = vst [vmem:[%s248 + $0x140] sm:$0xff] %v3885
      %3944 = vst.msk [vmem:[%s248 + $0x148] sm:$0xff] %vm2887, %v3886
      %3945 = vst [vmem:[%s248 + $0x150] sm:$0xff] %v3887
      %3946 = vst.msk [vmem:[%s248 + $0x158] sm:$0xff] %vm2887, %v3888
      %3947 = vst [vmem:[%s248 + $0x160] sm:$0xff] %v3889
      %3948 = vst.msk [vmem:[%s248 + $0x168] sm:$0xff] %vm2887, %v3890
      %3949 = vst [vmem:[%s248 + $0x170] sm:$0xff] %v3891
      %3950 = vst.msk [vmem:[%s248 + $0x178] sm:$0xff] %vm2887, %v3892
      %3951 = vst [vmem:[%s248 + $0x180] sm:$0xff] %v3893
      %3952 = vst.msk [vmem:[%s248 + $0x188] sm:$0xff] %vm2887, %v3894
      %3953 = vst [vmem:[%s248 + $0x190] sm:$0xff] %v3895
      %3954 = vst.msk [vmem:[%s248 + $0x198] sm:$0xff] %vm2887, %v3896
      %3955 = vst [vmem:[%s248 + $0x1a0] sm:$0xff] %v3897
      %3956 = vst.msk [vmem:[%s248 + $0x1a8] sm:$0xff] %vm2887, %v3898
      %3957 = vst [vmem:[%s248 + $0x1b0] sm:$0xff] %v3899
      %3958 = vst.msk [vmem:[%s248 + $0x1b8] sm:$0xff] %vm2887, %v3900
      %3959 = vst [vmem:[%s248 + $0x1c0] sm:$0xff] %v3901
      %3960 = vst.msk [vmem:[%s248 + $0x1c8] sm:$0xff] %vm2887, %v3902
      %s3961 = smul.u32 29, %s15
      %p3962 = scmp.lt.s32.totalorder %s3961, 173
      %s3963 = scalar_select %p3962, %s3961, 173
      %s3964 = smul.addr %s3963, 2
      %s3965 = smul.addr %s3964, 8
      %s3966 = scalar_lea.vmem %s4, %s3965
      // Predicated region
      $region37: #{tpu_custom_call.1} parent=35 // pred_check
        %p3967 = pneg %p132
      $region38: #{tpu_custom_call.1} parent=35 // pred_check_branch
        %3969 = sbr.rel (%p3967) target = $region40
      $region39: #{tpu_custom_call.1} parent=35 // pred_region
        %s3970 = smul.u32 29, %s15
      $region40: #{tpu_custom_call.1} parent=35 // pred_fallthru
        _
    $region36: #{tpu_custom_call.1} parent=5 // pred_fallthru
      _
    %p3971 = scmp.le.s32.totalorder 2, %s10
    // Predicated region
    $region41: #{tpu_custom_call.1} parent=5 // pred_check
      %p3972 = pneg %p3971
    $region42: #{tpu_custom_call.1} parent=5 // pred_check_branch
      %3974 = sbr.rel (%p3972) target = $region44
    $region43: #{tpu_custom_call.1} parent=5 // pred_region
      %s3975 = ssub.s32 %s10, 2
      // Predicated region
      $region45: #{tpu_custom_call.1} parent=43 // pred_check
        %p3976 = pneg %p138
      $region46: #{tpu_custom_call.1} parent=43 // pred_check_branch
        %3978 = sbr.rel (%p3976) target = $region48
      $region47: #{tpu_custom_call.1} parent=43 // pred_region
        %s3979 = smul.u32 29, %s16
        %p3980 = scmp.lt.s32.totalorder %s3979, 173
        %s3981 = scalar_select %p3980, %s3979, 173
        %s3982 = smul.addr %s3981, 2
        %s3983 = smul.addr %s3982, 8
        %s3984 = scalar_lea.vmem %s4, %s3983
      $region48: #{tpu_custom_call.1} parent=43 // pred_fallthru
        _
    $region44: #{tpu_custom_call.1} parent=5 // pred_fallthru
      _
  $region6: #{tpu_custom_call.1} parent=0 // loop_footer
    %s14 = sadd.s32 1, %s10
  $region7: #{tpu_custom_call.1} parent=0 // loop_footer_branch
    %9 = sbr.rel target = $region3
  $region8: #{tpu_custom_call.1} parent=0 // loop_exit
    _

</llo_original>
